<compile_context>
chip_gen: v5e
topology: v5e:2x2
jax: 0.10.0
libtpu: 0.0.40
codegen_flags: <defaults>
</compile_context>

<pallas_src>
import functools

import jax
import jax.numpy as jnp
from jax import lax
from jax.experimental import pallas as pl
from jax.experimental.pallas import tpu as pltpu


# ---------------------------------------------------------------------------
# Fused ReverseStage kernel: one grid step == one batch element.
# State layout: x (C, HW) f32, y (1, HW) f32, HW = H*W on the lane axis.
# ---------------------------------------------------------------------------
def _reverse_stage_kernel(x_ref, y_ref, mask_ref, wconv_ref, b_ref, ws_ref, sb_ref,
                          o_ref, *, H, W, C):
    HW = H * W
    # Flat-lane offsets of the 9 conv taps, row-major (ky, kx) order.
    offs = [(ky - 1) * W + (kx - 1) for ky in range(3) for kx in range(3)]

    x = x_ref[...].astype(jnp.float32)                           # (C, HW)
    x_bf = x.astype(jnp.bfloat16)
    # 1/(1+exp(y)) == 1 - sigmoid(y), exact and overflow-safe.
    y = 1.0 / (1.0 + jnp.exp(y_ref[...].astype(jnp.float32)))    # (1, HW)
    mask = mask_ref[...]                                         # (9, HW) f32 {0,1}

    for blk in range(3):                                         # weak / medium / strong
        # ---- 3x3 conv (Cin = C+1 -> Cout = C) --------------------------------
        # cat(x, y) channels padded to C+8 so the bf16 contraction dim is 8-aligned
        # (weight lanes C+1 .. C+7 are zero, so the broadcast rows contribute 0).
        y8_bf = jnp.broadcast_to(y, (8, HW)).astype(jnp.bfloat16)
        state_bf = jnp.concatenate([x_bf, y8_bf], axis=0)        # (C+8, HW) bf16

        acc = jnp.zeros((C, HW), jnp.float32)
        for t, off in enumerate(offs):
            z = jnp.dot(wconv_ref[blk, t], state_bf,
                        preferred_element_type=jnp.float32)      # (C, HW)
            if off == 0:                                         # center tap: no shift
                acc = acc + z
            else:
                # z'[p] = z[(p + off) mod HW]; wrapped / row-crossing lanes are masked.
                z = pltpu.roll(z, (-off) % HW, axis=1)
                acc = acc + z * mask[t:t + 1, :]
        x = x + jnp.maximum(acc + b_ref[blk], 0.0)               # residual + ReLU
        x_bf = x.astype(jnp.bfloat16)

        # ---- score conv (C -> 1): one stacked matmul, then 1-row lane rolls ----
        z9 = jnp.dot(ws_ref[blk], x_bf,
                     preferred_element_type=jnp.float32)         # (9, HW)
        score = jnp.zeros((1, HW), jnp.float32)
        for t, off in enumerate(offs):
            row = z9[t:t + 1, :]
            if off == 0:
                score = score + row
            else:
                row = pltpu.roll(row, (-off) % HW, axis=1)
                score = score + row * mask[t:t + 1, :]
        y = y + score + sb_ref[blk]

    o_ref[...] = y.astype(o_ref.dtype)                           # (1, HW) lane-dense


# ---------------------------------------------------------------------------
# Wrapper: NCHW <-> (N, C, HW) layout glue around the single fused pallas_call
# ---------------------------------------------------------------------------
def reverse_stage_forward(kparams, x_nchw, y_nchw):
    N, C, H, W = x_nchw.shape
    HW = H * W
    KC = C + 8                                       # padded contraction size
    x = x_nchw.reshape(N, C, HW)
    y = y_nchw.reshape(N, 1, HW)

    kernel = functools.partial(_reverse_stage_kernel, H=H, W=W, C=C)
    out = pl.pallas_call(
        kernel,
        out_shape=jax.ShapeDtypeStruct((N, 1, HW), jnp.float32),
        grid_spec=pltpu.PrefetchScalarGridSpec(
            num_scalar_prefetch=0,
            grid=(N,),
            in_specs=[
                pl.BlockSpec((None, C, HW), lambda n: (n, 0, 0)),       # x
                pl.BlockSpec((None, 1, HW), lambda n: (n, 0, 0)),       # y
                pl.BlockSpec((9, HW), lambda n: (0, 0)),                # tap masks
                pl.BlockSpec((3, 9, C, KC), lambda n: (0, 0, 0, 0)),    # conv weights (bf16)
                pl.BlockSpec((3, C, 1), lambda n: (0, 0, 0)),           # conv bias
                pl.BlockSpec((3, 9, C), lambda n: (0, 0, 0)),           # score weights (bf16)
                pl.BlockSpec((3, 1, 1), lambda n: (0, 0, 0)),           # score bias
            ],
            out_specs=pl.BlockSpec((None, 1, HW), lambda n: (n, 0, 0)),
        ),
        compiler_params=pltpu.CompilerParams(
            dimension_semantics=("parallel",)),
    )(x, y, kparams["mask"], kparams["wconv"], kparams["bias"],
      kparams["ws"], kparams["sb"])
    return out.reshape(N, 1, H, W)                   # (N,1,H,W), matches torch output


# ---------------------------------------------------------------------------
# Synthetic parameters (torch-module structure) + static weight preprocessing
# ---------------------------------------------------------------------------
def init_params(key, channel):
    """Raw synthetic parameters mirroring the torch module (HWIO conv weights)."""
    def conv_init(k, cin, cout, scale=0.05):
        kw, kb = jax.random.split(k)
        w = scale * jax.random.normal(kw, (3, 3, cin, cout), jnp.float32)
        b = scale * jax.random.normal(kb, (cout,), jnp.float32)
        return w, b

    params = {}
    keys = jax.random.split(key, 6)
    for i, (name, sub) in enumerate([("weak", channel), ("medium", 8), ("strong", 1)]):
        group = channel // sub
        cw, cb = conv_init(keys[2 * i], channel + group, channel)
        sw, sb = conv_init(keys[2 * i + 1], channel, 1)
        params[name] = {"conv_w": cw, "conv_b": cb,
                        "score_w": sw, "score_b": sb, "group": group}
    return params


def prepare_kernel_params(raw, channel, H, W):
    """Weight split + stacking.  Runs in plain Python (NOT under jit) so `group`
    stays a static int.  Uses the identity
        conv(cat(x0, y, x1, y, ...), W) == conv(cat(x, y), [W_x_permuted ; sum W_y])
    so the channel interleave never has to be materialized.  Weights are laid out
    per-tap, transposed for (C, K) x (K, HW) matmuls, K padded to C+8, and cast to
    bf16 (MXU operands; accumulation stays f32)."""
    Cp = channel + 1
    KC = channel + 8
    HW = H * W
    wconv, bias, ws, sb = [], [], [], []
    for name in ("weak", "medium", "strong"):
        p = raw[name]
        g = int(p["group"])
        sub = channel // g
        w = p["conv_w"]                                                # (3,3,C+g,C)
        x_pos = jnp.array([j * (sub + 1) + r for j in range(g) for r in range(sub)])
        y_pos = jnp.array([j * (sub + 1) + sub for j in range(g)])
        w_x = jnp.take(w, x_pos, axis=2)                               # (3,3,C,C)
        w_y = jnp.sum(jnp.take(w, y_pos, axis=2), axis=2, keepdims=True)  # (3,3,1,C)
        w_full = jnp.concatenate([w_x, w_y], axis=2)                   # (3,3,C+1,C)
        w_full = jnp.pad(w_full, ((0, 0), (0, 0), (0, KC - Cp), (0, 0)))  # pad K to C+8
        # per-tap LHS for  out(C,HW) = W_tap^T @ state(KC,HW)
        wconv.append(jnp.transpose(w_full.reshape(9, KC, channel), (0, 2, 1)))  # (9,C,KC)
        bias.append(p["conv_b"].reshape(channel, 1))
        ws.append(p["score_w"].reshape(9, channel, 1)[..., 0])         # (9, C)
        sb.append(p["score_b"].reshape(1, 1))

    # Per-tap validity masks on the flattened p = h*W + w lane axis (zero padding).
    pos = jnp.arange(HW)
    hh, ww = pos // W, pos % W
    mask = jnp.stack([
        (((hh + oy) >= 0) & ((hh + oy) < H) & ((ww + ox) >= 0) & ((ww + ox) < W))
        for oy in (-1, 0, 1) for ox in (-1, 0, 1)
    ]).astype(jnp.float32)                                             # (9, HW)

    return {"wconv": jnp.stack(wconv).astype(jnp.bfloat16),            # (3,9,C,C+8)
            "bias": jnp.stack(bias).astype(jnp.float32),               # (3,C,1)
            "ws": jnp.stack(ws).astype(jnp.bfloat16),                  # (3,9,C)
            "sb": jnp.stack(sb).astype(jnp.float32),                   # (3,1,1)
            "mask": mask}                                              # (9,HW)


# ---------------------------------------------------------------------------
# Pure-JAX reference (original interleave + lax.conv) for the correctness check
# ---------------------------------------------------------------------------
def _interleave(x, y, group):
    C = x.shape[-1]
    sub = C // group
    parts = []
    for g in range(group):
        parts.append(x[..., g * sub:(g + 1) * sub])
        parts.append(y)
    return jnp.concatenate(parts, axis=-1)


def _conv3x3_ref(x, w, b, relu=False):
    out = lax.conv_general_dilated(
        x, w, window_strides=(1, 1), padding=((1, 1), (1, 1)),
        dimension_numbers=("NHWC", "HWIO", "NHWC"),
        precision=lax.Precision.HIGHEST)
    out = out + b
    return jnp.maximum(out, 0.0) if relu else out


def reverse_stage_ref(raw, x_nchw, y_nchw):
    x = jnp.transpose(x_nchw, (0, 2, 3, 1))
    y = jnp.transpose(y_nchw, (0, 2, 3, 1))
    y = 1.0 - jax.nn.sigmoid(y)
    for name in ("weak", "medium", "strong"):
        p = raw[name]
        x_cat = _interleave(x, y, int(p["group"]))
        x = x + _conv3x3_ref(x_cat, p["conv_w"], p["conv_b"], relu=True)
        y = y + _conv3x3_ref(x, p["score_w"], p["score_b"], relu=False)
    return jnp.transpose(y, (0, 3, 1, 2))


if __name__ == "__main__":
    N, C, H, W = 2, 32, 16, 16        # channel=32 as in the original network
    key = jax.random.PRNGKey(0)
    kx, ky, kp = jax.random.split(key, 3)
    x = jax.random.normal(kx, (N, C, H, W), jnp.float32)
    y = jax.random.normal(ky, (N, 1, H, W), jnp.float32)

    raw = init_params(kp, C)
    kparams = prepare_kernel_params(raw, C, H, W)   # static `group`, outside jit

    fwd = jax.jit(reverse_stage_forward)
    out = jax.block_until_ready(fwd(kparams, x, y))

    ref = reverse_stage_ref(raw, x, y)
    assert out.shape == (N, 1, H, W)
    max_err = float(jnp.max(jnp.abs(out - ref)))
    # bf16 MXU operands (f32 accumulation) vs f32 HIGHEST reference -> loose tolerance.
    assert jnp.allclose(out, ref, atol=5e-2, rtol=5e-2), \
        f"mismatch vs reference (max abs err {max_err})"
    print("KERNEL_OK")
</pallas_src>

<mosaic_0001>
module attributes {stable_mosaic.version = 11 : i64} {
  func.func @_reverse_stage_kernel(%arg0: i32, %arg1: memref<1x32x256xf32, #tpu.memory_space<vmem>>, %arg2: memref<1x1x256xf32, #tpu.memory_space<vmem>>, %arg3: memref<9x256xf32, #tpu.memory_space<vmem>>, %arg4: memref<3x9x32x40xbf16, #tpu.memory_space<vmem>>, %arg5: memref<3x32x1xf32, #tpu.memory_space<vmem>>, %arg6: memref<3x9x32xbf16, #tpu.memory_space<vmem>>, %arg7: memref<3x1x1xf32, #tpu.memory_space<vmem>>, %arg8: memref<1x1x256xf32, #tpu.memory_space<vmem>>) attributes {dimension_semantics = [#tpu.dimension_semantics<parallel>], iteration_bounds = array<i64: 2>, scalar_prefetch = 0 : i64, scratch_operands = 0 : i64, tpu.core_type = #tpu.core_type<tc>, window_params = [{transform_indices = @transform_0, window_bounds = array<i64: 1, 32, 256>}, {transform_indices = @transform_1, window_bounds = array<i64: 1, 1, 256>}, {pipeline_mode = #tpu.pipeline_mode<synchronous>, transform_indices = @transform_2, window_bounds = array<i64: 9, 256>}, {pipeline_mode = #tpu.pipeline_mode<synchronous>, transform_indices = @transform_3, window_bounds = array<i64: 3, 9, 32, 40>}, {pipeline_mode = #tpu.pipeline_mode<synchronous>, transform_indices = @transform_4, window_bounds = array<i64: 3, 32, 1>}, {pipeline_mode = #tpu.pipeline_mode<synchronous>, transform_indices = @transform_5, window_bounds = array<i64: 3, 9, 32>}, {pipeline_mode = #tpu.pipeline_mode<synchronous>, transform_indices = @transform_6, window_bounds = array<i64: 3, 1, 1>}, {transform_indices = @transform_7, window_bounds = array<i64: 1, 1, 256>}]} {
    %c0 = arith.constant 0 : index
    %c0_0 = arith.constant 0 : index
    %c0_1 = arith.constant 0 : index
    %0 = vector.load %arg1[%c0, %c0_0, %c0_1] : memref<1x32x256xf32, #tpu.memory_space<vmem>>, vector<1x32x256xf32>
    %1 = vector.shape_cast %0 : vector<1x32x256xf32> to vector<32x256xf32>
    %2 = arith.truncf %1 : vector<32x256xf32> to vector<32x256xbf16>
    %c0_2 = arith.constant 0 : index
    %c0_3 = arith.constant 0 : index
    %c0_4 = arith.constant 0 : index
    %3 = vector.load %arg2[%c0_2, %c0_3, %c0_4] : memref<1x1x256xf32, #tpu.memory_space<vmem>>, vector<1x1x256xf32>
    %4 = vector.shape_cast %3 : vector<1x1x256xf32> to vector<1x256xf32>
    %5 = math.exp %4 : vector<1x256xf32>
    %cst = arith.constant 1.000000e+00 : f32
    %6 = vector.broadcast %cst : f32 to vector<1x256xf32>
    %7 = arith.addf %6, %5 : vector<1x256xf32>
    %cst_5 = arith.constant 1.000000e+00 : f32
    %8 = vector.broadcast %cst_5 : f32 to vector<1x256xf32>
    %9 = arith.divf %8, %7 : vector<1x256xf32>
    %c0_6 = arith.constant 0 : index
    %c0_7 = arith.constant 0 : index
    %10 = vector.load %arg3[%c0_6, %c0_7] : memref<9x256xf32, #tpu.memory_space<vmem>>, vector<9x256xf32>
    %11 = vector.shape_cast %9 : vector<1x256xf32> to vector<1x256xf32>
    %12 = vector.broadcast %11 : vector<1x256xf32> to vector<8x256xf32>
    %13 = arith.truncf %12 : vector<8x256xf32> to vector<8x256xbf16>
    %14 = tpu.concatenate %2, %13 in 0 : vector<32x256xbf16>, vector<8x256xbf16> -> vector<40x256xbf16>
    %cst_8 = arith.constant 0.000000e+00 : f32
    %15 = vector.broadcast %cst_8 : f32 to vector<32x256xf32>
    %c0_9 = arith.constant 0 : index
    %c0_10 = arith.constant 0 : index
    %c0_11 = arith.constant 0 : index
    %c0_12 = arith.constant 0 : index
    %16 = vector.load %arg4[%c0_9, %c0_10, %c0_11, %c0_12] : memref<3x9x32x40xbf16, #tpu.memory_space<vmem>>, vector<1x1x32x40xbf16>
    %17 = vector.shape_cast %16 : vector<1x1x32x40xbf16> to vector<32x40xbf16>
    %cst_13 = arith.constant dense<0.000000e+00> : vector<32x256xf32>
    %18 = tpu.matmul %17, %14, %cst_13 {dimension_numbers = #tpu.dot_dimension_numbers<[1], [0], [0], [1], [0, 0, 1, 1], [], []>} : vector<32x40xbf16>, vector<40x256xbf16>, vector<32x256xf32> -> vector<32x256xf32>
    %c17_i32 = arith.constant 17 : i32
    %19 = tpu.dynamic_rotate %18 by %c17_i32 dim 1 : vector<32x256xf32>, i32 -> vector<32x256xf32>
    %20 = vector.extract_strided_slice %10 {offsets = [0, 0], sizes = [1, 256], strides = [1, 1]} : vector<9x256xf32> to vector<1x256xf32>
    %21 = vector.broadcast %20 : vector<1x256xf32> to vector<32x256xf32>
    %22 = arith.mulf %19, %21 : vector<32x256xf32>
    %23 = arith.addf %15, %22 : vector<32x256xf32>
    %c0_14 = arith.constant 0 : index
    %c1 = arith.constant 1 : index
    %c0_15 = arith.constant 0 : index
    %c0_16 = arith.constant 0 : index
    %24 = vector.load %arg4[%c0_14, %c1, %c0_15, %c0_16] : memref<3x9x32x40xbf16, #tpu.memory_space<vmem>>, vector<1x1x32x40xbf16>
    %25 = vector.shape_cast %24 : vector<1x1x32x40xbf16> to vector<32x40xbf16>
    %cst_17 = arith.constant dense<0.000000e+00> : vector<32x256xf32>
    %26 = tpu.matmul %25, %14, %cst_17 {dimension_numbers = #tpu.dot_dimension_numbers<[1], [0], [0], [1], [0, 0, 1, 1], [], []>} : vector<32x40xbf16>, vector<40x256xbf16>, vector<32x256xf32> -> vector<32x256xf32>
    %c16_i32 = arith.constant 16 : i32
    %27 = tpu.dynamic_rotate %26 by %c16_i32 dim 1 : vector<32x256xf32>, i32 -> vector<32x256xf32>
    %28 = vector.extract_strided_slice %10 {offsets = [1, 0], sizes = [1, 256], strides = [1, 1]} : vector<9x256xf32> to vector<1x256xf32>
    %29 = vector.broadcast %28 : vector<1x256xf32> to vector<32x256xf32>
    %30 = arith.mulf %27, %29 : vector<32x256xf32>
    %31 = arith.addf %23, %30 : vector<32x256xf32>
    %c0_18 = arith.constant 0 : index
    %c2 = arith.constant 2 : index
    %c0_19 = arith.constant 0 : index
    %c0_20 = arith.constant 0 : index
    %32 = vector.load %arg4[%c0_18, %c2, %c0_19, %c0_20] : memref<3x9x32x40xbf16, #tpu.memory_space<vmem>>, vector<1x1x32x40xbf16>
    %33 = vector.shape_cast %32 : vector<1x1x32x40xbf16> to vector<32x40xbf16>
    %cst_21 = arith.constant dense<0.000000e+00> : vector<32x256xf32>
    %34 = tpu.matmul %33, %14, %cst_21 {dimension_numbers = #tpu.dot_dimension_numbers<[1], [0], [0], [1], [0, 0, 1, 1], [], []>} : vector<32x40xbf16>, vector<40x256xbf16>, vector<32x256xf32> -> vector<32x256xf32>
    %c15_i32 = arith.constant 15 : i32
    %35 = tpu.dynamic_rotate %34 by %c15_i32 dim 1 : vector<32x256xf32>, i32 -> vector<32x256xf32>
    %36 = vector.extract_strided_slice %10 {offsets = [2, 0], sizes = [1, 256], strides = [1, 1]} : vector<9x256xf32> to vector<1x256xf32>
    %37 = vector.broadcast %36 : vector<1x256xf32> to vector<32x256xf32>
    %38 = arith.mulf %35, %37 : vector<32x256xf32>
    %39 = arith.addf %31, %38 : vector<32x256xf32>
    %c0_22 = arith.constant 0 : index
    %c3 = arith.constant 3 : index
    %c0_23 = arith.constant 0 : index
    %c0_24 = arith.constant 0 : index
    %40 = vector.load %arg4[%c0_22, %c3, %c0_23, %c0_24] : memref<3x9x32x40xbf16, #tpu.memory_space<vmem>>, vector<1x1x32x40xbf16>
    %41 = vector.shape_cast %40 : vector<1x1x32x40xbf16> to vector<32x40xbf16>
    %cst_25 = arith.constant dense<0.000000e+00> : vector<32x256xf32>
    %42 = tpu.matmul %41, %14, %cst_25 {dimension_numbers = #tpu.dot_dimension_numbers<[1], [0], [0], [1], [0, 0, 1, 1], [], []>} : vector<32x40xbf16>, vector<40x256xbf16>, vector<32x256xf32> -> vector<32x256xf32>
    %c1_i32 = arith.constant 1 : i32
    %43 = tpu.dynamic_rotate %42 by %c1_i32 dim 1 : vector<32x256xf32>, i32 -> vector<32x256xf32>
    %44 = vector.extract_strided_slice %10 {offsets = [3, 0], sizes = [1, 256], strides = [1, 1]} : vector<9x256xf32> to vector<1x256xf32>
    %45 = vector.broadcast %44 : vector<1x256xf32> to vector<32x256xf32>
    %46 = arith.mulf %43, %45 : vector<32x256xf32>
    %47 = arith.addf %39, %46 : vector<32x256xf32>
    %c0_26 = arith.constant 0 : index
    %c4 = arith.constant 4 : index
    %c0_27 = arith.constant 0 : index
    %c0_28 = arith.constant 0 : index
    %48 = vector.load %arg4[%c0_26, %c4, %c0_27, %c0_28] : memref<3x9x32x40xbf16, #tpu.memory_space<vmem>>, vector<1x1x32x40xbf16>
    %49 = vector.shape_cast %48 : vector<1x1x32x40xbf16> to vector<32x40xbf16>
    %cst_29 = arith.constant dense<0.000000e+00> : vector<32x256xf32>
    %50 = tpu.matmul %49, %14, %cst_29 {dimension_numbers = #tpu.dot_dimension_numbers<[1], [0], [0], [1], [0, 0, 1, 1], [], []>} : vector<32x40xbf16>, vector<40x256xbf16>, vector<32x256xf32> -> vector<32x256xf32>
    %51 = arith.addf %47, %50 : vector<32x256xf32>
    %c0_30 = arith.constant 0 : index
    %c5 = arith.constant 5 : index
    %c0_31 = arith.constant 0 : index
    %c0_32 = arith.constant 0 : index
    %52 = vector.load %arg4[%c0_30, %c5, %c0_31, %c0_32] : memref<3x9x32x40xbf16, #tpu.memory_space<vmem>>, vector<1x1x32x40xbf16>
    %53 = vector.shape_cast %52 : vector<1x1x32x40xbf16> to vector<32x40xbf16>
    %cst_33 = arith.constant dense<0.000000e+00> : vector<32x256xf32>
    %54 = tpu.matmul %53, %14, %cst_33 {dimension_numbers = #tpu.dot_dimension_numbers<[1], [0], [0], [1], [0, 0, 1, 1], [], []>} : vector<32x40xbf16>, vector<40x256xbf16>, vector<32x256xf32> -> vector<32x256xf32>
    %c255_i32 = arith.constant 255 : i32
    %55 = tpu.dynamic_rotate %54 by %c255_i32 dim 1 : vector<32x256xf32>, i32 -> vector<32x256xf32>
    %56 = vector.extract_strided_slice %10 {offsets = [5, 0], sizes = [1, 256], strides = [1, 1]} : vector<9x256xf32> to vector<1x256xf32>
    %57 = vector.broadcast %56 : vector<1x256xf32> to vector<32x256xf32>
    %58 = arith.mulf %55, %57 : vector<32x256xf32>
    %59 = arith.addf %51, %58 : vector<32x256xf32>
    %c0_34 = arith.constant 0 : index
    %c6 = arith.constant 6 : index
    %c0_35 = arith.constant 0 : index
    %c0_36 = arith.constant 0 : index
    %60 = vector.load %arg4[%c0_34, %c6, %c0_35, %c0_36] : memref<3x9x32x40xbf16, #tpu.memory_space<vmem>>, vector<1x1x32x40xbf16>
    %61 = vector.shape_cast %60 : vector<1x1x32x40xbf16> to vector<32x40xbf16>
    %cst_37 = arith.constant dense<0.000000e+00> : vector<32x256xf32>
    %62 = tpu.matmul %61, %14, %cst_37 {dimension_numbers = #tpu.dot_dimension_numbers<[1], [0], [0], [1], [0, 0, 1, 1], [], []>} : vector<32x40xbf16>, vector<40x256xbf16>, vector<32x256xf32> -> vector<32x256xf32>
    %c241_i32 = arith.constant 241 : i32
    %63 = tpu.dynamic_rotate %62 by %c241_i32 dim 1 : vector<32x256xf32>, i32 -> vector<32x256xf32>
    %64 = vector.extract_strided_slice %10 {offsets = [6, 0], sizes = [1, 256], strides = [1, 1]} : vector<9x256xf32> to vector<1x256xf32>
    %65 = vector.broadcast %64 : vector<1x256xf32> to vector<32x256xf32>
    %66 = arith.mulf %63, %65 : vector<32x256xf32>
    %67 = arith.addf %59, %66 : vector<32x256xf32>
    %c0_38 = arith.constant 0 : index
    %c7 = arith.constant 7 : index
    %c0_39 = arith.constant 0 : index
    %c0_40 = arith.constant 0 : index
    %68 = vector.load %arg4[%c0_38, %c7, %c0_39, %c0_40] : memref<3x9x32x40xbf16, #tpu.memory_space<vmem>>, vector<1x1x32x40xbf16>
    %69 = vector.shape_cast %68 : vector<1x1x32x40xbf16> to vector<32x40xbf16>
    %cst_41 = arith.constant dense<0.000000e+00> : vector<32x256xf32>
    %70 = tpu.matmul %69, %14, %cst_41 {dimension_numbers = #tpu.dot_dimension_numbers<[1], [0], [0], [1], [0, 0, 1, 1], [], []>} : vector<32x40xbf16>, vector<40x256xbf16>, vector<32x256xf32> -> vector<32x256xf32>
    %c240_i32 = arith.constant 240 : i32
    %71 = tpu.dynamic_rotate %70 by %c240_i32 dim 1 : vector<32x256xf32>, i32 -> vector<32x256xf32>
    %72 = vector.extract_strided_slice %10 {offsets = [7, 0], sizes = [1, 256], strides = [1, 1]} : vector<9x256xf32> to vector<1x256xf32>
    %73 = vector.broadcast %72 : vector<1x256xf32> to vector<32x256xf32>
    %74 = arith.mulf %71, %73 : vector<32x256xf32>
    %75 = arith.addf %67, %74 : vector<32x256xf32>
    %c0_42 = arith.constant 0 : index
    %c8 = arith.constant 8 : index
    %c0_43 = arith.constant 0 : index
    %c0_44 = arith.constant 0 : index
    %76 = vector.load %arg4[%c0_42, %c8, %c0_43, %c0_44] : memref<3x9x32x40xbf16, #tpu.memory_space<vmem>>, vector<1x1x32x40xbf16>
    %77 = vector.shape_cast %76 : vector<1x1x32x40xbf16> to vector<32x40xbf16>
    %cst_45 = arith.constant dense<0.000000e+00> : vector<32x256xf32>
    %78 = tpu.matmul %77, %14, %cst_45 {dimension_numbers = #tpu.dot_dimension_numbers<[1], [0], [0], [1], [0, 0, 1, 1], [], []>} : vector<32x40xbf16>, vector<40x256xbf16>, vector<32x256xf32> -> vector<32x256xf32>
    %c239_i32 = arith.constant 239 : i32
    %79 = tpu.dynamic_rotate %78 by %c239_i32 dim 1 : vector<32x256xf32>, i32 -> vector<32x256xf32>
    %80 = vector.extract_strided_slice %10 {offsets = [8, 0], sizes = [1, 256], strides = [1, 1]} : vector<9x256xf32> to vector<1x256xf32>
    %81 = vector.broadcast %80 : vector<1x256xf32> to vector<32x256xf32>
    %82 = arith.mulf %79, %81 : vector<32x256xf32>
    %83 = arith.addf %75, %82 : vector<32x256xf32>
    %c0_46 = arith.constant 0 : index
    %c0_47 = arith.constant 0 : index
    %c0_48 = arith.constant 0 : index
    %84 = vector.load %arg5[%c0_46, %c0_47, %c0_48] : memref<3x32x1xf32, #tpu.memory_space<vmem>>, vector<1x32x1xf32>
    %85 = vector.shape_cast %84 : vector<1x32x1xf32> to vector<32x1xf32>
    %86 = vector.broadcast %85 : vector<32x1xf32> to vector<32x256xf32>
    %87 = arith.addf %83, %86 : vector<32x256xf32>
    %cst_49 = arith.constant 0.000000e+00 : f32
    %88 = vector.broadcast %cst_49 : f32 to vector<32x256xf32>
    %89 = arith.maximumf %87, %88 : vector<32x256xf32>
    %90 = arith.addf %1, %89 : vector<32x256xf32>
    %91 = arith.truncf %90 : vector<32x256xf32> to vector<32x256xbf16>
    %c0_50 = arith.constant 0 : index
    %c0_51 = arith.constant 0 : index
    %c0_52 = arith.constant 0 : index
    %92 = vector.load %arg6[%c0_50, %c0_51, %c0_52] : memref<3x9x32xbf16, #tpu.memory_space<vmem>>, vector<1x9x32xbf16>
    %93 = vector.shape_cast %92 : vector<1x9x32xbf16> to vector<9x32xbf16>
    %cst_53 = arith.constant dense<0.000000e+00> : vector<9x256xf32>
    %94 = tpu.matmul %93, %91, %cst_53 {dimension_numbers = #tpu.dot_dimension_numbers<[1], [0], [0], [1], [0, 0, 1, 1], [], []>} : vector<9x32xbf16>, vector<32x256xbf16>, vector<9x256xf32> -> vector<9x256xf32>
    %cst_54 = arith.constant 0.000000e+00 : f32
    %95 = vector.broadcast %cst_54 : f32 to vector<1x256xf32>
    %96 = vector.extract_strided_slice %94 {offsets = [0, 0], sizes = [1, 256], strides = [1, 1]} : vector<9x256xf32> to vector<1x256xf32>
    %c17_i32_55 = arith.constant 17 : i32
    %97 = tpu.dynamic_rotate %96 by %c17_i32_55 dim 1 : vector<1x256xf32>, i32 -> vector<1x256xf32>
    %98 = vector.extract_strided_slice %10 {offsets = [0, 0], sizes = [1, 256], strides = [1, 1]} : vector<9x256xf32> to vector<1x256xf32>
    %99 = arith.mulf %97, %98 : vector<1x256xf32>
    %100 = arith.addf %95, %99 : vector<1x256xf32>
    %101 = vector.extract_strided_slice %94 {offsets = [1, 0], sizes = [1, 256], strides = [1, 1]} : vector<9x256xf32> to vector<1x256xf32>
    %c16_i32_56 = arith.constant 16 : i32
    %102 = tpu.dynamic_rotate %101 by %c16_i32_56 dim 1 : vector<1x256xf32>, i32 -> vector<1x256xf32>
    %103 = vector.extract_strided_slice %10 {offsets = [1, 0], sizes = [1, 256], strides = [1, 1]} : vector<9x256xf32> to vector<1x256xf32>
    %104 = arith.mulf %102, %103 : vector<1x256xf32>
    %105 = arith.addf %100, %104 : vector<1x256xf32>
    %106 = vector.extract_strided_slice %94 {offsets = [2, 0], sizes = [1, 256], strides = [1, 1]} : vector<9x256xf32> to vector<1x256xf32>
    %c15_i32_57 = arith.constant 15 : i32
    %107 = tpu.dynamic_rotate %106 by %c15_i32_57 dim 1 : vector<1x256xf32>, i32 -> vector<1x256xf32>
    %108 = vector.extract_strided_slice %10 {offsets = [2, 0], sizes = [1, 256], strides = [1, 1]} : vector<9x256xf32> to vector<1x256xf32>
    %109 = arith.mulf %107, %108 : vector<1x256xf32>
    %110 = arith.addf %105, %109 : vector<1x256xf32>
    %111 = vector.extract_strided_slice %94 {offsets = [3, 0], sizes = [1, 256], strides = [1, 1]} : vector<9x256xf32> to vector<1x256xf32>
    %c1_i32_58 = arith.constant 1 : i32
    %112 = tpu.dynamic_rotate %111 by %c1_i32_58 dim 1 : vector<1x256xf32>, i32 -> vector<1x256xf32>
    %113 = vector.extract_strided_slice %10 {offsets = [3, 0], sizes = [1, 256], strides = [1, 1]} : vector<9x256xf32> to vector<1x256xf32>
    %114 = arith.mulf %112, %113 : vector<1x256xf32>
    %115 = arith.addf %110, %114 : vector<1x256xf32>
    %116 = vector.extract_strided_slice %94 {offsets = [4, 0], sizes = [1, 256], strides = [1, 1]} : vector<9x256xf32> to vector<1x256xf32>
    %117 = arith.addf %115, %116 : vector<1x256xf32>
    %118 = vector.extract_strided_slice %94 {offsets = [5, 0], sizes = [1, 256], strides = [1, 1]} : vector<9x256xf32> to vector<1x256xf32>
    %c255_i32_59 = arith.constant 255 : i32
    %119 = tpu.dynamic_rotate %118 by %c255_i32_59 dim 1 : vector<1x256xf32>, i32 -> vector<1x256xf32>
    %120 = vector.extract_strided_slice %10 {offsets = [5, 0], sizes = [1, 256], strides = [1, 1]} : vector<9x256xf32> to vector<1x256xf32>
    %121 = arith.mulf %119, %120 : vector<1x256xf32>
    %122 = arith.addf %117, %121 : vector<1x256xf32>
    %123 = vector.extract_strided_slice %94 {offsets = [6, 0], sizes = [1, 256], strides = [1, 1]} : vector<9x256xf32> to vector<1x256xf32>
    %c241_i32_60 = arith.constant 241 : i32
    %124 = tpu.dynamic_rotate %123 by %c241_i32_60 dim 1 : vector<1x256xf32>, i32 -> vector<1x256xf32>
    %125 = vector.extract_strided_slice %10 {offsets = [6, 0], sizes = [1, 256], strides = [1, 1]} : vector<9x256xf32> to vector<1x256xf32>
    %126 = arith.mulf %124, %125 : vector<1x256xf32>
    %127 = arith.addf %122, %126 : vector<1x256xf32>
    %128 = vector.extract_strided_slice %94 {offsets = [7, 0], sizes = [1, 256], strides = [1, 1]} : vector<9x256xf32> to vector<1x256xf32>
    %c240_i32_61 = arith.constant 240 : i32
    %129 = tpu.dynamic_rotate %128 by %c240_i32_61 dim 1 : vector<1x256xf32>, i32 -> vector<1x256xf32>
    %130 = vector.extract_strided_slice %10 {offsets = [7, 0], sizes = [1, 256], strides = [1, 1]} : vector<9x256xf32> to vector<1x256xf32>
    %131 = arith.mulf %129, %130 : vector<1x256xf32>
    %132 = arith.addf %127, %131 : vector<1x256xf32>
    %133 = vector.extract_strided_slice %94 {offsets = [8, 0], sizes = [1, 256], strides = [1, 1]} : vector<9x256xf32> to vector<1x256xf32>
    %c239_i32_62 = arith.constant 239 : i32
    %134 = tpu.dynamic_rotate %133 by %c239_i32_62 dim 1 : vector<1x256xf32>, i32 -> vector<1x256xf32>
    %135 = vector.extract_strided_slice %10 {offsets = [8, 0], sizes = [1, 256], strides = [1, 1]} : vector<9x256xf32> to vector<1x256xf32>
    %136 = arith.mulf %134, %135 : vector<1x256xf32>
    %137 = arith.addf %132, %136 : vector<1x256xf32>
    %138 = arith.addf %9, %137 : vector<1x256xf32>
    %c0_63 = arith.constant 0 : index
    %c0_64 = arith.constant 0 : index
    %c0_65 = arith.constant 0 : index
    %139 = vector.load %arg7[%c0_63, %c0_64, %c0_65] : memref<3x1x1xf32, #tpu.memory_space<vmem>>, vector<1x1x1xf32>
    %140 = vector.shape_cast %139 : vector<1x1x1xf32> to vector<1x1xf32>
    %141 = vector.broadcast %140 : vector<1x1xf32> to vector<1x256xf32>
    %142 = arith.addf %138, %141 : vector<1x256xf32>
    %143 = vector.shape_cast %142 : vector<1x256xf32> to vector<1x256xf32>
    %144 = vector.broadcast %143 : vector<1x256xf32> to vector<8x256xf32>
    %145 = arith.truncf %144 : vector<8x256xf32> to vector<8x256xbf16>
    %146 = tpu.concatenate %91, %145 in 0 : vector<32x256xbf16>, vector<8x256xbf16> -> vector<40x256xbf16>
    %cst_66 = arith.constant 0.000000e+00 : f32
    %147 = vector.broadcast %cst_66 : f32 to vector<32x256xf32>
    %c1_67 = arith.constant 1 : index
    %c0_68 = arith.constant 0 : index
    %c0_69 = arith.constant 0 : index
    %c0_70 = arith.constant 0 : index
    %148 = vector.load %arg4[%c1_67, %c0_68, %c0_69, %c0_70] : memref<3x9x32x40xbf16, #tpu.memory_space<vmem>>, vector<1x1x32x40xbf16>
    %149 = vector.shape_cast %148 : vector<1x1x32x40xbf16> to vector<32x40xbf16>
    %cst_71 = arith.constant dense<0.000000e+00> : vector<32x256xf32>
    %150 = tpu.matmul %149, %146, %cst_71 {dimension_numbers = #tpu.dot_dimension_numbers<[1], [0], [0], [1], [0, 0, 1, 1], [], []>} : vector<32x40xbf16>, vector<40x256xbf16>, vector<32x256xf32> -> vector<32x256xf32>
    %c17_i32_72 = arith.constant 17 : i32
    %151 = tpu.dynamic_rotate %150 by %c17_i32_72 dim 1 : vector<32x256xf32>, i32 -> vector<32x256xf32>
    %152 = vector.extract_strided_slice %10 {offsets = [0, 0], sizes = [1, 256], strides = [1, 1]} : vector<9x256xf32> to vector<1x256xf32>
    %153 = vector.broadcast %152 : vector<1x256xf32> to vector<32x256xf32>
    %154 = arith.mulf %151, %153 : vector<32x256xf32>
    %155 = arith.addf %147, %154 : vector<32x256xf32>
    %c1_73 = arith.constant 1 : index
    %c1_74 = arith.constant 1 : index
    %c0_75 = arith.constant 0 : index
    %c0_76 = arith.constant 0 : index
    %156 = vector.load %arg4[%c1_73, %c1_74, %c0_75, %c0_76] : memref<3x9x32x40xbf16, #tpu.memory_space<vmem>>, vector<1x1x32x40xbf16>
    %157 = vector.shape_cast %156 : vector<1x1x32x40xbf16> to vector<32x40xbf16>
    %cst_77 = arith.constant dense<0.000000e+00> : vector<32x256xf32>
    %158 = tpu.matmul %157, %146, %cst_77 {dimension_numbers = #tpu.dot_dimension_numbers<[1], [0], [0], [1], [0, 0, 1, 1], [], []>} : vector<32x40xbf16>, vector<40x256xbf16>, vector<32x256xf32> -> vector<32x256xf32>
    %c16_i32_78 = arith.constant 16 : i32
    %159 = tpu.dynamic_rotate %158 by %c16_i32_78 dim 1 : vector<32x256xf32>, i32 -> vector<32x256xf32>
    %160 = vector.extract_strided_slice %10 {offsets = [1, 0], sizes = [1, 256], strides = [1, 1]} : vector<9x256xf32> to vector<1x256xf32>
    %161 = vector.broadcast %160 : vector<1x256xf32> to vector<32x256xf32>
    %162 = arith.mulf %159, %161 : vector<32x256xf32>
    %163 = arith.addf %155, %162 : vector<32x256xf32>
    %c1_79 = arith.constant 1 : index
    %c2_80 = arith.constant 2 : index
    %c0_81 = arith.constant 0 : index
    %c0_82 = arith.constant 0 : index
    %164 = vector.load %arg4[%c1_79, %c2_80, %c0_81, %c0_82] : memref<3x9x32x40xbf16, #tpu.memory_space<vmem>>, vector<1x1x32x40xbf16>
    %165 = vector.shape_cast %164 : vector<1x1x32x40xbf16> to vector<32x40xbf16>
    %cst_83 = arith.constant dense<0.000000e+00> : vector<32x256xf32>
    %166 = tpu.matmul %165, %146, %cst_83 {dimension_numbers = #tpu.dot_dimension_numbers<[1], [0], [0], [1], [0, 0, 1, 1], [], []>} : vector<32x40xbf16>, vector<40x256xbf16>, vector<32x256xf32> -> vector<32x256xf32>
    %c15_i32_84 = arith.constant 15 : i32
    %167 = tpu.dynamic_rotate %166 by %c15_i32_84 dim 1 : vector<32x256xf32>, i32 -> vector<32x256xf32>
    %168 = vector.extract_strided_slice %10 {offsets = [2, 0], sizes = [1, 256], strides = [1, 1]} : vector<9x256xf32> to vector<1x256xf32>
    %169 = vector.broadcast %168 : vector<1x256xf32> to vector<32x256xf32>
    %170 = arith.mulf %167, %169 : vector<32x256xf32>
    %171 = arith.addf %163, %170 : vector<32x256xf32>
    %c1_85 = arith.constant 1 : index
    %c3_86 = arith.constant 3 : index
    %c0_87 = arith.constant 0 : index
    %c0_88 = arith.constant 0 : index
    %172 = vector.load %arg4[%c1_85, %c3_86, %c0_87, %c0_88] : memref<3x9x32x40xbf16, #tpu.memory_space<vmem>>, vector<1x1x32x40xbf16>
    %173 = vector.shape_cast %172 : vector<1x1x32x40xbf16> to vector<32x40xbf16>
    %cst_89 = arith.constant dense<0.000000e+00> : vector<32x256xf32>
    %174 = tpu.matmul %173, %146, %cst_89 {dimension_numbers = #tpu.dot_dimension_numbers<[1], [0], [0], [1], [0, 0, 1, 1], [], []>} : vector<32x40xbf16>, vector<40x256xbf16>, vector<32x256xf32> -> vector<32x256xf32>
    %c1_i32_90 = arith.constant 1 : i32
    %175 = tpu.dynamic_rotate %174 by %c1_i32_90 dim 1 : vector<32x256xf32>, i32 -> vector<32x256xf32>
    %176 = vector.extract_strided_slice %10 {offsets = [3, 0], sizes = [1, 256], strides = [1, 1]} : vector<9x256xf32> to vector<1x256xf32>
    %177 = vector.broadcast %176 : vector<1x256xf32> to vector<32x256xf32>
    %178 = arith.mulf %175, %177 : vector<32x256xf32>
    %179 = arith.addf %171, %178 : vector<32x256xf32>
    %c1_91 = arith.constant 1 : index
    %c4_92 = arith.constant 4 : index
    %c0_93 = arith.constant 0 : index
    %c0_94 = arith.constant 0 : index
    %180 = vector.load %arg4[%c1_91, %c4_92, %c0_93, %c0_94] : memref<3x9x32x40xbf16, #tpu.memory_space<vmem>>, vector<1x1x32x40xbf16>
    %181 = vector.shape_cast %180 : vector<1x1x32x40xbf16> to vector<32x40xbf16>
    %cst_95 = arith.constant dense<0.000000e+00> : vector<32x256xf32>
    %182 = tpu.matmul %181, %146, %cst_95 {dimension_numbers = #tpu.dot_dimension_numbers<[1], [0], [0], [1], [0, 0, 1, 1], [], []>} : vector<32x40xbf16>, vector<40x256xbf16>, vector<32x256xf32> -> vector<32x256xf32>
    %183 = arith.addf %179, %182 : vector<32x256xf32>
    %c1_96 = arith.constant 1 : index
    %c5_97 = arith.constant 5 : index
    %c0_98 = arith.constant 0 : index
    %c0_99 = arith.constant 0 : index
    %184 = vector.load %arg4[%c1_96, %c5_97, %c0_98, %c0_99] : memref<3x9x32x40xbf16, #tpu.memory_space<vmem>>, vector<1x1x32x40xbf16>
    %185 = vector.shape_cast %184 : vector<1x1x32x40xbf16> to vector<32x40xbf16>
    %cst_100 = arith.constant dense<0.000000e+00> : vector<32x256xf32>
    %186 = tpu.matmul %185, %146, %cst_100 {dimension_numbers = #tpu.dot_dimension_numbers<[1], [0], [0], [1], [0, 0, 1, 1], [], []>} : vector<32x40xbf16>, vector<40x256xbf16>, vector<32x256xf32> -> vector<32x256xf32>
    %c255_i32_101 = arith.constant 255 : i32
    %187 = tpu.dynamic_rotate %186 by %c255_i32_101 dim 1 : vector<32x256xf32>, i32 -> vector<32x256xf32>
    %188 = vector.extract_strided_slice %10 {offsets = [5, 0], sizes = [1, 256], strides = [1, 1]} : vector<9x256xf32> to vector<1x256xf32>
    %189 = vector.broadcast %188 : vector<1x256xf32> to vector<32x256xf32>
    %190 = arith.mulf %187, %189 : vector<32x256xf32>
    %191 = arith.addf %183, %190 : vector<32x256xf32>
    %c1_102 = arith.constant 1 : index
    %c6_103 = arith.constant 6 : index
    %c0_104 = arith.constant 0 : index
    %c0_105 = arith.constant 0 : index
    %192 = vector.load %arg4[%c1_102, %c6_103, %c0_104, %c0_105] : memref<3x9x32x40xbf16, #tpu.memory_space<vmem>>, vector<1x1x32x40xbf16>
    %193 = vector.shape_cast %192 : vector<1x1x32x40xbf16> to vector<32x40xbf16>
    %cst_106 = arith.constant dense<0.000000e+00> : vector<32x256xf32>
    %194 = tpu.matmul %193, %146, %cst_106 {dimension_numbers = #tpu.dot_dimension_numbers<[1], [0], [0], [1], [0, 0, 1, 1], [], []>} : vector<32x40xbf16>, vector<40x256xbf16>, vector<32x256xf32> -> vector<32x256xf32>
    %c241_i32_107 = arith.constant 241 : i32
    %195 = tpu.dynamic_rotate %194 by %c241_i32_107 dim 1 : vector<32x256xf32>, i32 -> vector<32x256xf32>
    %196 = vector.extract_strided_slice %10 {offsets = [6, 0], sizes = [1, 256], strides = [1, 1]} : vector<9x256xf32> to vector<1x256xf32>
    %197 = vector.broadcast %196 : vector<1x256xf32> to vector<32x256xf32>
    %198 = arith.mulf %195, %197 : vector<32x256xf32>
    %199 = arith.addf %191, %198 : vector<32x256xf32>
    %c1_108 = arith.constant 1 : index
    %c7_109 = arith.constant 7 : index
    %c0_110 = arith.constant 0 : index
    %c0_111 = arith.constant 0 : index
    %200 = vector.load %arg4[%c1_108, %c7_109, %c0_110, %c0_111] : memref<3x9x32x40xbf16, #tpu.memory_space<vmem>>, vector<1x1x32x40xbf16>
    %201 = vector.shape_cast %200 : vector<1x1x32x40xbf16> to vector<32x40xbf16>
    %cst_112 = arith.constant dense<0.000000e+00> : vector<32x256xf32>
    %202 = tpu.matmul %201, %146, %cst_112 {dimension_numbers = #tpu.dot_dimension_numbers<[1], [0], [0], [1], [0, 0, 1, 1], [], []>} : vector<32x40xbf16>, vector<40x256xbf16>, vector<32x256xf32> -> vector<32x256xf32>
    %c240_i32_113 = arith.constant 240 : i32
    %203 = tpu.dynamic_rotate %202 by %c240_i32_113 dim 1 : vector<32x256xf32>, i32 -> vector<32x256xf32>
    %204 = vector.extract_strided_slice %10 {offsets = [7, 0], sizes = [1, 256], strides = [1, 1]} : vector<9x256xf32> to vector<1x256xf32>
    %205 = vector.broadcast %204 : vector<1x256xf32> to vector<32x256xf32>
    %206 = arith.mulf %203, %205 : vector<32x256xf32>
    %207 = arith.addf %199, %206 : vector<32x256xf32>
    %c1_114 = arith.constant 1 : index
    %c8_115 = arith.constant 8 : index
    %c0_116 = arith.constant 0 : index
    %c0_117 = arith.constant 0 : index
    %208 = vector.load %arg4[%c1_114, %c8_115, %c0_116, %c0_117] : memref<3x9x32x40xbf16, #tpu.memory_space<vmem>>, vector<1x1x32x40xbf16>
    %209 = vector.shape_cast %208 : vector<1x1x32x40xbf16> to vector<32x40xbf16>
    %cst_118 = arith.constant dense<0.000000e+00> : vector<32x256xf32>
    %210 = tpu.matmul %209, %146, %cst_118 {dimension_numbers = #tpu.dot_dimension_numbers<[1], [0], [0], [1], [0, 0, 1, 1], [], []>} : vector<32x40xbf16>, vector<40x256xbf16>, vector<32x256xf32> -> vector<32x256xf32>
    %c239_i32_119 = arith.constant 239 : i32
    %211 = tpu.dynamic_rotate %210 by %c239_i32_119 dim 1 : vector<32x256xf32>, i32 -> vector<32x256xf32>
    %212 = vector.extract_strided_slice %10 {offsets = [8, 0], sizes = [1, 256], strides = [1, 1]} : vector<9x256xf32> to vector<1x256xf32>
    %213 = vector.broadcast %212 : vector<1x256xf32> to vector<32x256xf32>
    %214 = arith.mulf %211, %213 : vector<32x256xf32>
    %215 = arith.addf %207, %214 : vector<32x256xf32>
    %c1_120 = arith.constant 1 : index
    %c0_121 = arith.constant 0 : index
    %c0_122 = arith.constant 0 : index
    %216 = vector.load %arg5[%c1_120, %c0_121, %c0_122] : memref<3x32x1xf32, #tpu.memory_space<vmem>>, vector<1x32x1xf32>
    %217 = vector.shape_cast %216 : vector<1x32x1xf32> to vector<32x1xf32>
    %218 = vector.broadcast %217 : vector<32x1xf32> to vector<32x256xf32>
    %219 = arith.addf %215, %218 : vector<32x256xf32>
    %cst_123 = arith.constant 0.000000e+00 : f32
    %220 = vector.broadcast %cst_123 : f32 to vector<32x256xf32>
    %221 = arith.maximumf %219, %220 : vector<32x256xf32>
    %222 = arith.addf %90, %221 : vector<32x256xf32>
    %223 = arith.truncf %222 : vector<32x256xf32> to vector<32x256xbf16>
    %c1_124 = arith.constant 1 : index
    %c0_125 = arith.constant 0 : index
    %c0_126 = arith.constant 0 : index
    %224 = vector.load %arg6[%c1_124, %c0_125, %c0_126] : memref<3x9x32xbf16, #tpu.memory_space<vmem>>, vector<1x9x32xbf16>
    %225 = vector.shape_cast %224 : vector<1x9x32xbf16> to vector<9x32xbf16>
    %cst_127 = arith.constant dense<0.000000e+00> : vector<9x256xf32>
    %226 = tpu.matmul %225, %223, %cst_127 {dimension_numbers = #tpu.dot_dimension_numbers<[1], [0], [0], [1], [0, 0, 1, 1], [], []>} : vector<9x32xbf16>, vector<32x256xbf16>, vector<9x256xf32> -> vector<9x256xf32>
    %cst_128 = arith.constant 0.000000e+00 : f32
    %227 = vector.broadcast %cst_128 : f32 to vector<1x256xf32>
    %228 = vector.extract_strided_slice %226 {offsets = [0, 0], sizes = [1, 256], strides = [1, 1]} : vector<9x256xf32> to vector<1x256xf32>
    %c17_i32_129 = arith.constant 17 : i32
    %229 = tpu.dynamic_rotate %228 by %c17_i32_129 dim 1 : vector<1x256xf32>, i32 -> vector<1x256xf32>
    %230 = vector.extract_strided_slice %10 {offsets = [0, 0], sizes = [1, 256], strides = [1, 1]} : vector<9x256xf32> to vector<1x256xf32>
    %231 = arith.mulf %229, %230 : vector<1x256xf32>
    %232 = arith.addf %227, %231 : vector<1x256xf32>
    %233 = vector.extract_strided_slice %226 {offsets = [1, 0], sizes = [1, 256], strides = [1, 1]} : vector<9x256xf32> to vector<1x256xf32>
    %c16_i32_130 = arith.constant 16 : i32
    %234 = tpu.dynamic_rotate %233 by %c16_i32_130 dim 1 : vector<1x256xf32>, i32 -> vector<1x256xf32>
    %235 = vector.extract_strided_slice %10 {offsets = [1, 0], sizes = [1, 256], strides = [1, 1]} : vector<9x256xf32> to vector<1x256xf32>
    %236 = arith.mulf %234, %235 : vector<1x256xf32>
    %237 = arith.addf %232, %236 : vector<1x256xf32>
    %238 = vector.extract_strided_slice %226 {offsets = [2, 0], sizes = [1, 256], strides = [1, 1]} : vector<9x256xf32> to vector<1x256xf32>
    %c15_i32_131 = arith.constant 15 : i32
    %239 = tpu.dynamic_rotate %238 by %c15_i32_131 dim 1 : vector<1x256xf32>, i32 -> vector<1x256xf32>
    %240 = vector.extract_strided_slice %10 {offsets = [2, 0], sizes = [1, 256], strides = [1, 1]} : vector<9x256xf32> to vector<1x256xf32>
    %241 = arith.mulf %239, %240 : vector<1x256xf32>
    %242 = arith.addf %237, %241 : vector<1x256xf32>
    %243 = vector.extract_strided_slice %226 {offsets = [3, 0], sizes = [1, 256], strides = [1, 1]} : vector<9x256xf32> to vector<1x256xf32>
    %c1_i32_132 = arith.constant 1 : i32
    %244 = tpu.dynamic_rotate %243 by %c1_i32_132 dim 1 : vector<1x256xf32>, i32 -> vector<1x256xf32>
    %245 = vector.extract_strided_slice %10 {offsets = [3, 0], sizes = [1, 256], strides = [1, 1]} : vector<9x256xf32> to vector<1x256xf32>
    %246 = arith.mulf %244, %245 : vector<1x256xf32>
    %247 = arith.addf %242, %246 : vector<1x256xf32>
    %248 = vector.extract_strided_slice %226 {offsets = [4, 0], sizes = [1, 256], strides = [1, 1]} : vector<9x256xf32> to vector<1x256xf32>
    %249 = arith.addf %247, %248 : vector<1x256xf32>
    %250 = vector.extract_strided_slice %226 {offsets = [5, 0], sizes = [1, 256], strides = [1, 1]} : vector<9x256xf32> to vector<1x256xf32>
    %c255_i32_133 = arith.constant 255 : i32
    %251 = tpu.dynamic_rotate %250 by %c255_i32_133 dim 1 : vector<1x256xf32>, i32 -> vector<1x256xf32>
    %252 = vector.extract_strided_slice %10 {offsets = [5, 0], sizes = [1, 256], strides = [1, 1]} : vector<9x256xf32> to vector<1x256xf32>
    %253 = arith.mulf %251, %252 : vector<1x256xf32>
    %254 = arith.addf %249, %253 : vector<1x256xf32>
    %255 = vector.extract_strided_slice %226 {offsets = [6, 0], sizes = [1, 256], strides = [1, 1]} : vector<9x256xf32> to vector<1x256xf32>
    %c241_i32_134 = arith.constant 241 : i32
    %256 = tpu.dynamic_rotate %255 by %c241_i32_134 dim 1 : vector<1x256xf32>, i32 -> vector<1x256xf32>
    %257 = vector.extract_strided_slice %10 {offsets = [6, 0], sizes = [1, 256], strides = [1, 1]} : vector<9x256xf32> to vector<1x256xf32>
    %258 = arith.mulf %256, %257 : vector<1x256xf32>
    %259 = arith.addf %254, %258 : vector<1x256xf32>
    %260 = vector.extract_strided_slice %226 {offsets = [7, 0], sizes = [1, 256], strides = [1, 1]} : vector<9x256xf32> to vector<1x256xf32>
    %c240_i32_135 = arith.constant 240 : i32
    %261 = tpu.dynamic_rotate %260 by %c240_i32_135 dim 1 : vector<1x256xf32>, i32 -> vector<1x256xf32>
    %262 = vector.extract_strided_slice %10 {offsets = [7, 0], sizes = [1, 256], strides = [1, 1]} : vector<9x256xf32> to vector<1x256xf32>
    %263 = arith.mulf %261, %262 : vector<1x256xf32>
    %264 = arith.addf %259, %263 : vector<1x256xf32>
    %265 = vector.extract_strided_slice %226 {offsets = [8, 0], sizes = [1, 256], strides = [1, 1]} : vector<9x256xf32> to vector<1x256xf32>
    %c239_i32_136 = arith.constant 239 : i32
    %266 = tpu.dynamic_rotate %265 by %c239_i32_136 dim 1 : vector<1x256xf32>, i32 -> vector<1x256xf32>
    %267 = vector.extract_strided_slice %10 {offsets = [8, 0], sizes = [1, 256], strides = [1, 1]} : vector<9x256xf32> to vector<1x256xf32>
    %268 = arith.mulf %266, %267 : vector<1x256xf32>
    %269 = arith.addf %264, %268 : vector<1x256xf32>
    %270 = arith.addf %142, %269 : vector<1x256xf32>
    %c1_137 = arith.constant 1 : index
    %c0_138 = arith.constant 0 : index
    %c0_139 = arith.constant 0 : index
    %271 = vector.load %arg7[%c1_137, %c0_138, %c0_139] : memref<3x1x1xf32, #tpu.memory_space<vmem>>, vector<1x1x1xf32>
    %272 = vector.shape_cast %271 : vector<1x1x1xf32> to vector<1x1xf32>
    %273 = vector.broadcast %272 : vector<1x1xf32> to vector<1x256xf32>
    %274 = arith.addf %270, %273 : vector<1x256xf32>
    %275 = vector.shape_cast %274 : vector<1x256xf32> to vector<1x256xf32>
    %276 = vector.broadcast %275 : vector<1x256xf32> to vector<8x256xf32>
    %277 = arith.truncf %276 : vector<8x256xf32> to vector<8x256xbf16>
    %278 = tpu.concatenate %223, %277 in 0 : vector<32x256xbf16>, vector<8x256xbf16> -> vector<40x256xbf16>
    %cst_140 = arith.constant 0.000000e+00 : f32
    %279 = vector.broadcast %cst_140 : f32 to vector<32x256xf32>
    %c2_141 = arith.constant 2 : index
    %c0_142 = arith.constant 0 : index
    %c0_143 = arith.constant 0 : index
    %c0_144 = arith.constant 0 : index
    %280 = vector.load %arg4[%c2_141, %c0_142, %c0_143, %c0_144] : memref<3x9x32x40xbf16, #tpu.memory_space<vmem>>, vector<1x1x32x40xbf16>
    %281 = vector.shape_cast %280 : vector<1x1x32x40xbf16> to vector<32x40xbf16>
    %cst_145 = arith.constant dense<0.000000e+00> : vector<32x256xf32>
    %282 = tpu.matmul %281, %278, %cst_145 {dimension_numbers = #tpu.dot_dimension_numbers<[1], [0], [0], [1], [0, 0, 1, 1], [], []>} : vector<32x40xbf16>, vector<40x256xbf16>, vector<32x256xf32> -> vector<32x256xf32>
    %c17_i32_146 = arith.constant 17 : i32
    %283 = tpu.dynamic_rotate %282 by %c17_i32_146 dim 1 : vector<32x256xf32>, i32 -> vector<32x256xf32>
    %284 = vector.extract_strided_slice %10 {offsets = [0, 0], sizes = [1, 256], strides = [1, 1]} : vector<9x256xf32> to vector<1x256xf32>
    %285 = vector.broadcast %284 : vector<1x256xf32> to vector<32x256xf32>
    %286 = arith.mulf %283, %285 : vector<32x256xf32>
    %287 = arith.addf %279, %286 : vector<32x256xf32>
    %c2_147 = arith.constant 2 : index
    %c1_148 = arith.constant 1 : index
    %c0_149 = arith.constant 0 : index
    %c0_150 = arith.constant 0 : index
    %288 = vector.load %arg4[%c2_147, %c1_148, %c0_149, %c0_150] : memref<3x9x32x40xbf16, #tpu.memory_space<vmem>>, vector<1x1x32x40xbf16>
    %289 = vector.shape_cast %288 : vector<1x1x32x40xbf16> to vector<32x40xbf16>
    %cst_151 = arith.constant dense<0.000000e+00> : vector<32x256xf32>
    %290 = tpu.matmul %289, %278, %cst_151 {dimension_numbers = #tpu.dot_dimension_numbers<[1], [0], [0], [1], [0, 0, 1, 1], [], []>} : vector<32x40xbf16>, vector<40x256xbf16>, vector<32x256xf32> -> vector<32x256xf32>
    %c16_i32_152 = arith.constant 16 : i32
    %291 = tpu.dynamic_rotate %290 by %c16_i32_152 dim 1 : vector<32x256xf32>, i32 -> vector<32x256xf32>
    %292 = vector.extract_strided_slice %10 {offsets = [1, 0], sizes = [1, 256], strides = [1, 1]} : vector<9x256xf32> to vector<1x256xf32>
    %293 = vector.broadcast %292 : vector<1x256xf32> to vector<32x256xf32>
    %294 = arith.mulf %291, %293 : vector<32x256xf32>
    %295 = arith.addf %287, %294 : vector<32x256xf32>
    %c2_153 = arith.constant 2 : index
    %c2_154 = arith.constant 2 : index
    %c0_155 = arith.constant 0 : index
    %c0_156 = arith.constant 0 : index
    %296 = vector.load %arg4[%c2_153, %c2_154, %c0_155, %c0_156] : memref<3x9x32x40xbf16, #tpu.memory_space<vmem>>, vector<1x1x32x40xbf16>
    %297 = vector.shape_cast %296 : vector<1x1x32x40xbf16> to vector<32x40xbf16>
    %cst_157 = arith.constant dense<0.000000e+00> : vector<32x256xf32>
    %298 = tpu.matmul %297, %278, %cst_157 {dimension_numbers = #tpu.dot_dimension_numbers<[1], [0], [0], [1], [0, 0, 1, 1], [], []>} : vector<32x40xbf16>, vector<40x256xbf16>, vector<32x256xf32> -> vector<32x256xf32>
    %c15_i32_158 = arith.constant 15 : i32
    %299 = tpu.dynamic_rotate %298 by %c15_i32_158 dim 1 : vector<32x256xf32>, i32 -> vector<32x256xf32>
    %300 = vector.extract_strided_slice %10 {offsets = [2, 0], sizes = [1, 256], strides = [1, 1]} : vector<9x256xf32> to vector<1x256xf32>
    %301 = vector.broadcast %300 : vector<1x256xf32> to vector<32x256xf32>
    %302 = arith.mulf %299, %301 : vector<32x256xf32>
    %303 = arith.addf %295, %302 : vector<32x256xf32>
    %c2_159 = arith.constant 2 : index
    %c3_160 = arith.constant 3 : index
    %c0_161 = arith.constant 0 : index
    %c0_162 = arith.constant 0 : index
    %304 = vector.load %arg4[%c2_159, %c3_160, %c0_161, %c0_162] : memref<3x9x32x40xbf16, #tpu.memory_space<vmem>>, vector<1x1x32x40xbf16>
    %305 = vector.shape_cast %304 : vector<1x1x32x40xbf16> to vector<32x40xbf16>
    %cst_163 = arith.constant dense<0.000000e+00> : vector<32x256xf32>
    %306 = tpu.matmul %305, %278, %cst_163 {dimension_numbers = #tpu.dot_dimension_numbers<[1], [0], [0], [1], [0, 0, 1, 1], [], []>} : vector<32x40xbf16>, vector<40x256xbf16>, vector<32x256xf32> -> vector<32x256xf32>
    %c1_i32_164 = arith.constant 1 : i32
    %307 = tpu.dynamic_rotate %306 by %c1_i32_164 dim 1 : vector<32x256xf32>, i32 -> vector<32x256xf32>
    %308 = vector.extract_strided_slice %10 {offsets = [3, 0], sizes = [1, 256], strides = [1, 1]} : vector<9x256xf32> to vector<1x256xf32>
    %309 = vector.broadcast %308 : vector<1x256xf32> to vector<32x256xf32>
    %310 = arith.mulf %307, %309 : vector<32x256xf32>
    %311 = arith.addf %303, %310 : vector<32x256xf32>
    %c2_165 = arith.constant 2 : index
    %c4_166 = arith.constant 4 : index
    %c0_167 = arith.constant 0 : index
    %c0_168 = arith.constant 0 : index
    %312 = vector.load %arg4[%c2_165, %c4_166, %c0_167, %c0_168] : memref<3x9x32x40xbf16, #tpu.memory_space<vmem>>, vector<1x1x32x40xbf16>
    %313 = vector.shape_cast %312 : vector<1x1x32x40xbf16> to vector<32x40xbf16>
    %cst_169 = arith.constant dense<0.000000e+00> : vector<32x256xf32>
    %314 = tpu.matmul %313, %278, %cst_169 {dimension_numbers = #tpu.dot_dimension_numbers<[1], [0], [0], [1], [0, 0, 1, 1], [], []>} : vector<32x40xbf16>, vector<40x256xbf16>, vector<32x256xf32> -> vector<32x256xf32>
    %315 = arith.addf %311, %314 : vector<32x256xf32>
    %c2_170 = arith.constant 2 : index
    %c5_171 = arith.constant 5 : index
    %c0_172 = arith.constant 0 : index
    %c0_173 = arith.constant 0 : index
    %316 = vector.load %arg4[%c2_170, %c5_171, %c0_172, %c0_173] : memref<3x9x32x40xbf16, #tpu.memory_space<vmem>>, vector<1x1x32x40xbf16>
    %317 = vector.shape_cast %316 : vector<1x1x32x40xbf16> to vector<32x40xbf16>
    %cst_174 = arith.constant dense<0.000000e+00> : vector<32x256xf32>
    %318 = tpu.matmul %317, %278, %cst_174 {dimension_numbers = #tpu.dot_dimension_numbers<[1], [0], [0], [1], [0, 0, 1, 1], [], []>} : vector<32x40xbf16>, vector<40x256xbf16>, vector<32x256xf32> -> vector<32x256xf32>
    %c255_i32_175 = arith.constant 255 : i32
    %319 = tpu.dynamic_rotate %318 by %c255_i32_175 dim 1 : vector<32x256xf32>, i32 -> vector<32x256xf32>
    %320 = vector.extract_strided_slice %10 {offsets = [5, 0], sizes = [1, 256], strides = [1, 1]} : vector<9x256xf32> to vector<1x256xf32>
    %321 = vector.broadcast %320 : vector<1x256xf32> to vector<32x256xf32>
    %322 = arith.mulf %319, %321 : vector<32x256xf32>
    %323 = arith.addf %315, %322 : vector<32x256xf32>
    %c2_176 = arith.constant 2 : index
    %c6_177 = arith.constant 6 : index
    %c0_178 = arith.constant 0 : index
    %c0_179 = arith.constant 0 : index
    %324 = vector.load %arg4[%c2_176, %c6_177, %c0_178, %c0_179] : memref<3x9x32x40xbf16, #tpu.memory_space<vmem>>, vector<1x1x32x40xbf16>
    %325 = vector.shape_cast %324 : vector<1x1x32x40xbf16> to vector<32x40xbf16>
    %cst_180 = arith.constant dense<0.000000e+00> : vector<32x256xf32>
    %326 = tpu.matmul %325, %278, %cst_180 {dimension_numbers = #tpu.dot_dimension_numbers<[1], [0], [0], [1], [0, 0, 1, 1], [], []>} : vector<32x40xbf16>, vector<40x256xbf16>, vector<32x256xf32> -> vector<32x256xf32>
    %c241_i32_181 = arith.constant 241 : i32
    %327 = tpu.dynamic_rotate %326 by %c241_i32_181 dim 1 : vector<32x256xf32>, i32 -> vector<32x256xf32>
    %328 = vector.extract_strided_slice %10 {offsets = [6, 0], sizes = [1, 256], strides = [1, 1]} : vector<9x256xf32> to vector<1x256xf32>
    %329 = vector.broadcast %328 : vector<1x256xf32> to vector<32x256xf32>
    %330 = arith.mulf %327, %329 : vector<32x256xf32>
    %331 = arith.addf %323, %330 : vector<32x256xf32>
    %c2_182 = arith.constant 2 : index
    %c7_183 = arith.constant 7 : index
    %c0_184 = arith.constant 0 : index
    %c0_185 = arith.constant 0 : index
    %332 = vector.load %arg4[%c2_182, %c7_183, %c0_184, %c0_185] : memref<3x9x32x40xbf16, #tpu.memory_space<vmem>>, vector<1x1x32x40xbf16>
    %333 = vector.shape_cast %332 : vector<1x1x32x40xbf16> to vector<32x40xbf16>
    %cst_186 = arith.constant dense<0.000000e+00> : vector<32x256xf32>
    %334 = tpu.matmul %333, %278, %cst_186 {dimension_numbers = #tpu.dot_dimension_numbers<[1], [0], [0], [1], [0, 0, 1, 1], [], []>} : vector<32x40xbf16>, vector<40x256xbf16>, vector<32x256xf32> -> vector<32x256xf32>
    %c240_i32_187 = arith.constant 240 : i32
    %335 = tpu.dynamic_rotate %334 by %c240_i32_187 dim 1 : vector<32x256xf32>, i32 -> vector<32x256xf32>
    %336 = vector.extract_strided_slice %10 {offsets = [7, 0], sizes = [1, 256], strides = [1, 1]} : vector<9x256xf32> to vector<1x256xf32>
    %337 = vector.broadcast %336 : vector<1x256xf32> to vector<32x256xf32>
    %338 = arith.mulf %335, %337 : vector<32x256xf32>
    %339 = arith.addf %331, %338 : vector<32x256xf32>
    %c2_188 = arith.constant 2 : index
    %c8_189 = arith.constant 8 : index
    %c0_190 = arith.constant 0 : index
    %c0_191 = arith.constant 0 : index
    %340 = vector.load %arg4[%c2_188, %c8_189, %c0_190, %c0_191] : memref<3x9x32x40xbf16, #tpu.memory_space<vmem>>, vector<1x1x32x40xbf16>
    %341 = vector.shape_cast %340 : vector<1x1x32x40xbf16> to vector<32x40xbf16>
    %cst_192 = arith.constant dense<0.000000e+00> : vector<32x256xf32>
    %342 = tpu.matmul %341, %278, %cst_192 {dimension_numbers = #tpu.dot_dimension_numbers<[1], [0], [0], [1], [0, 0, 1, 1], [], []>} : vector<32x40xbf16>, vector<40x256xbf16>, vector<32x256xf32> -> vector<32x256xf32>
    %c239_i32_193 = arith.constant 239 : i32
    %343 = tpu.dynamic_rotate %342 by %c239_i32_193 dim 1 : vector<32x256xf32>, i32 -> vector<32x256xf32>
    %344 = vector.extract_strided_slice %10 {offsets = [8, 0], sizes = [1, 256], strides = [1, 1]} : vector<9x256xf32> to vector<1x256xf32>
    %345 = vector.broadcast %344 : vector<1x256xf32> to vector<32x256xf32>
    %346 = arith.mulf %343, %345 : vector<32x256xf32>
    %347 = arith.addf %339, %346 : vector<32x256xf32>
    %c2_194 = arith.constant 2 : index
    %c0_195 = arith.constant 0 : index
    %c0_196 = arith.constant 0 : index
    %348 = vector.load %arg5[%c2_194, %c0_195, %c0_196] : memref<3x32x1xf32, #tpu.memory_space<vmem>>, vector<1x32x1xf32>
    %349 = vector.shape_cast %348 : vector<1x32x1xf32> to vector<32x1xf32>
    %350 = vector.broadcast %349 : vector<32x1xf32> to vector<32x256xf32>
    %351 = arith.addf %347, %350 : vector<32x256xf32>
    %cst_197 = arith.constant 0.000000e+00 : f32
    %352 = vector.broadcast %cst_197 : f32 to vector<32x256xf32>
    %353 = arith.maximumf %351, %352 : vector<32x256xf32>
    %354 = arith.addf %222, %353 : vector<32x256xf32>
    %355 = arith.truncf %354 : vector<32x256xf32> to vector<32x256xbf16>
    %c2_198 = arith.constant 2 : index
    %c0_199 = arith.constant 0 : index
    %c0_200 = arith.constant 0 : index
    %356 = vector.load %arg6[%c2_198, %c0_199, %c0_200] : memref<3x9x32xbf16, #tpu.memory_space<vmem>>, vector<1x9x32xbf16>
    %357 = vector.shape_cast %356 : vector<1x9x32xbf16> to vector<9x32xbf16>
    %cst_201 = arith.constant dense<0.000000e+00> : vector<9x256xf32>
    %358 = tpu.matmul %357, %355, %cst_201 {dimension_numbers = #tpu.dot_dimension_numbers<[1], [0], [0], [1], [0, 0, 1, 1], [], []>} : vector<9x32xbf16>, vector<32x256xbf16>, vector<9x256xf32> -> vector<9x256xf32>
    %cst_202 = arith.constant 0.000000e+00 : f32
    %359 = vector.broadcast %cst_202 : f32 to vector<1x256xf32>
    %360 = vector.extract_strided_slice %358 {offsets = [0, 0], sizes = [1, 256], strides = [1, 1]} : vector<9x256xf32> to vector<1x256xf32>
    %c17_i32_203 = arith.constant 17 : i32
    %361 = tpu.dynamic_rotate %360 by %c17_i32_203 dim 1 : vector<1x256xf32>, i32 -> vector<1x256xf32>
    %362 = vector.extract_strided_slice %10 {offsets = [0, 0], sizes = [1, 256], strides = [1, 1]} : vector<9x256xf32> to vector<1x256xf32>
    %363 = arith.mulf %361, %362 : vector<1x256xf32>
    %364 = arith.addf %359, %363 : vector<1x256xf32>
    %365 = vector.extract_strided_slice %358 {offsets = [1, 0], sizes = [1, 256], strides = [1, 1]} : vector<9x256xf32> to vector<1x256xf32>
    %c16_i32_204 = arith.constant 16 : i32
    %366 = tpu.dynamic_rotate %365 by %c16_i32_204 dim 1 : vector<1x256xf32>, i32 -> vector<1x256xf32>
    %367 = vector.extract_strided_slice %10 {offsets = [1, 0], sizes = [1, 256], strides = [1, 1]} : vector<9x256xf32> to vector<1x256xf32>
    %368 = arith.mulf %366, %367 : vector<1x256xf32>
    %369 = arith.addf %364, %368 : vector<1x256xf32>
    %370 = vector.extract_strided_slice %358 {offsets = [2, 0], sizes = [1, 256], strides = [1, 1]} : vector<9x256xf32> to vector<1x256xf32>
    %c15_i32_205 = arith.constant 15 : i32
    %371 = tpu.dynamic_rotate %370 by %c15_i32_205 dim 1 : vector<1x256xf32>, i32 -> vector<1x256xf32>
    %372 = vector.extract_strided_slice %10 {offsets = [2, 0], sizes = [1, 256], strides = [1, 1]} : vector<9x256xf32> to vector<1x256xf32>
    %373 = arith.mulf %371, %372 : vector<1x256xf32>
    %374 = arith.addf %369, %373 : vector<1x256xf32>
    %375 = vector.extract_strided_slice %358 {offsets = [3, 0], sizes = [1, 256], strides = [1, 1]} : vector<9x256xf32> to vector<1x256xf32>
    %c1_i32_206 = arith.constant 1 : i32
    %376 = tpu.dynamic_rotate %375 by %c1_i32_206 dim 1 : vector<1x256xf32>, i32 -> vector<1x256xf32>
    %377 = vector.extract_strided_slice %10 {offsets = [3, 0], sizes = [1, 256], strides = [1, 1]} : vector<9x256xf32> to vector<1x256xf32>
    %378 = arith.mulf %376, %377 : vector<1x256xf32>
    %379 = arith.addf %374, %378 : vector<1x256xf32>
    %380 = vector.extract_strided_slice %358 {offsets = [4, 0], sizes = [1, 256], strides = [1, 1]} : vector<9x256xf32> to vector<1x256xf32>
    %381 = arith.addf %379, %380 : vector<1x256xf32>
    %382 = vector.extract_strided_slice %358 {offsets = [5, 0], sizes = [1, 256], strides = [1, 1]} : vector<9x256xf32> to vector<1x256xf32>
    %c255_i32_207 = arith.constant 255 : i32
    %383 = tpu.dynamic_rotate %382 by %c255_i32_207 dim 1 : vector<1x256xf32>, i32 -> vector<1x256xf32>
    %384 = vector.extract_strided_slice %10 {offsets = [5, 0], sizes = [1, 256], strides = [1, 1]} : vector<9x256xf32> to vector<1x256xf32>
    %385 = arith.mulf %383, %384 : vector<1x256xf32>
    %386 = arith.addf %381, %385 : vector<1x256xf32>
    %387 = vector.extract_strided_slice %358 {offsets = [6, 0], sizes = [1, 256], strides = [1, 1]} : vector<9x256xf32> to vector<1x256xf32>
    %c241_i32_208 = arith.constant 241 : i32
    %388 = tpu.dynamic_rotate %387 by %c241_i32_208 dim 1 : vector<1x256xf32>, i32 -> vector<1x256xf32>
    %389 = vector.extract_strided_slice %10 {offsets = [6, 0], sizes = [1, 256], strides = [1, 1]} : vector<9x256xf32> to vector<1x256xf32>
    %390 = arith.mulf %388, %389 : vector<1x256xf32>
    %391 = arith.addf %386, %390 : vector<1x256xf32>
    %392 = vector.extract_strided_slice %358 {offsets = [7, 0], sizes = [1, 256], strides = [1, 1]} : vector<9x256xf32> to vector<1x256xf32>
    %c240_i32_209 = arith.constant 240 : i32
    %393 = tpu.dynamic_rotate %392 by %c240_i32_209 dim 1 : vector<1x256xf32>, i32 -> vector<1x256xf32>
    %394 = vector.extract_strided_slice %10 {offsets = [7, 0], sizes = [1, 256], strides = [1, 1]} : vector<9x256xf32> to vector<1x256xf32>
    %395 = arith.mulf %393, %394 : vector<1x256xf32>
    %396 = arith.addf %391, %395 : vector<1x256xf32>
    %397 = vector.extract_strided_slice %358 {offsets = [8, 0], sizes = [1, 256], strides = [1, 1]} : vector<9x256xf32> to vector<1x256xf32>
    %c239_i32_210 = arith.constant 239 : i32
    %398 = tpu.dynamic_rotate %397 by %c239_i32_210 dim 1 : vector<1x256xf32>, i32 -> vector<1x256xf32>
    %399 = vector.extract_strided_slice %10 {offsets = [8, 0], sizes = [1, 256], strides = [1, 1]} : vector<9x256xf32> to vector<1x256xf32>
    %400 = arith.mulf %398, %399 : vector<1x256xf32>
    %401 = arith.addf %396, %400 : vector<1x256xf32>
    %402 = arith.addf %274, %401 : vector<1x256xf32>
    %c2_211 = arith.constant 2 : index
    %c0_212 = arith.constant 0 : index
    %c0_213 = arith.constant 0 : index
    %403 = vector.load %arg7[%c2_211, %c0_212, %c0_213] : memref<3x1x1xf32, #tpu.memory_space<vmem>>, vector<1x1x1xf32>
    %404 = vector.shape_cast %403 : vector<1x1x1xf32> to vector<1x1xf32>
    %405 = vector.broadcast %404 : vector<1x1xf32> to vector<1x256xf32>
    %406 = arith.addf %402, %405 : vector<1x256xf32>
    %c0_214 = arith.constant 0 : index
    %c0_215 = arith.constant 0 : index
    %c0_216 = arith.constant 0 : index
    %407 = vector.load %arg8[%c0_214, %c0_215, %c0_216] : memref<1x1x256xf32, #tpu.memory_space<vmem>>, vector<1x1x256xf32>
    %408 = vector.shape_cast %407 : vector<1x1x256xf32> to vector<1x256xf32>
    %409 = vector.shape_cast %406 : vector<1x256xf32> to vector<1x1x256xf32>
    tpu.vector_store %arg8[%c0_214, %c0_215, %c0_216], %409 {strides = array<i32>} : memref<1x1x256xf32, #tpu.memory_space<vmem>>, vector<1x1x256xf32>,
    return
  }
  func.func @transform_0(%arg0: i32) -> (i32, i32, i32) {
    %c0_i32 = arith.constant 0 : i32
    %c0_i32_0 = arith.constant 0 : i32
    %c0_i32_1 = arith.constant 0 : i32
    return %arg0, %c0_i32, %c0_i32_0 : i32, i32, i32
  }
  func.func @transform_1(%arg0: i32) -> (i32, i32, i32) {
    %c0_i32 = arith.constant 0 : i32
    %c0_i32_0 = arith.constant 0 : i32
    %c0_i32_1 = arith.constant 0 : i32
    return %arg0, %c0_i32, %c0_i32_0 : i32, i32, i32
  }
  func.func @transform_2(%arg0: i32) -> (i32, i32) {
    %c0_i32 = arith.constant 0 : i32
    %c0_i32_0 = arith.constant 0 : i32
    %c0_i32_1 = arith.constant 0 : i32
    return %c0_i32, %c0_i32_0 : i32, i32
  }
  func.func @transform_3(%arg0: i32) -> (i32, i32, i32, i32) {
    %c0_i32 = arith.constant 0 : i32
    %c0_i32_0 = arith.constant 0 : i32
    %c0_i32_1 = arith.constant 0 : i32
    %c0_i32_2 = arith.constant 0 : i32
    %c0_i32_3 = arith.constant 0 : i32
    return %c0_i32, %c0_i32_0, %c0_i32_1, %c0_i32_2 : i32, i32, i32, i32
  }
  func.func @transform_4(%arg0: i32) -> (i32, i32, i32) {
    %c0_i32 = arith.constant 0 : i32
    %c0_i32_0 = arith.constant 0 : i32
    %c0_i32_1 = arith.constant 0 : i32
    %c0_i32_2 = arith.constant 0 : i32
    return %c0_i32, %c0_i32_0, %c0_i32_1 : i32, i32, i32
  }
  func.func @transform_5(%arg0: i32) -> (i32, i32, i32) {
    %c0_i32 = arith.constant 0 : i32
    %c0_i32_0 = arith.constant 0 : i32
    %c0_i32_1 = arith.constant 0 : i32
    %c0_i32_2 = arith.constant 0 : i32
    return %c0_i32, %c0_i32_0, %c0_i32_1 : i32, i32, i32
  }
  func.func @transform_6(%arg0: i32) -> (i32, i32, i32) {
    %c0_i32 = arith.constant 0 : i32
    %c0_i32_0 = arith.constant 0 : i32
    %c0_i32_1 = arith.constant 0 : i32
    %c0_i32_2 = arith.constant 0 : i32
    return %c0_i32, %c0_i32_0, %c0_i32_1 : i32, i32, i32
  }
  func.func @transform_7(%arg0: i32) -> (i32, i32, i32) {
    %c0_i32 = arith.constant 0 : i32
    %c0_i32_0 = arith.constant 0 : i32
    %c0_i32_1 = arith.constant 0 : i32
    return %arg0, %c0_i32, %c0_i32_0 : i32, i32, i32
  }
}

</mosaic_0001>

<llo_original>
// kernel: reverse_stage_forward.1
$region0: #{reverse_stage_forward.1}
  #allocation0 [shape = 'u32[]', space=smem, size = 0x4, offset = 0x4, fixed_abs, tag = 'smem constant byte address 0x4 - core index']
  #allocation1 [shape = 'u32[72,128]{1,0:T(1,128)}', space=vmem, size = 0x9000, scoped, tag = 'internal scratch']
  %s0 = inlined_call_operand.vmem [shape: f32[2,32,256], index: 0, kind: input, shape index: {}]
  %s1 = inlined_call_operand.vmem [shape: f32[2,1,256], index: 1, kind: input, shape index: {}]
  %s2 = inlined_call_operand.vmem [shape: f32[9,256], index: 2, kind: input, shape index: {}]
  %s3 = inlined_call_operand.vmem [shape: bf16[3,9,32,40], index: 3, kind: input, shape index: {}]
  %s4 = inlined_call_operand.vmem [shape: f32[3,32,1], index: 4, kind: input, shape index: {}]
  %s5 = inlined_call_operand.vmem [shape: bf16[3,9,32], index: 5, kind: input, shape index: {}]
  %s6 = inlined_call_operand.vmem [shape: f32[3,1,1], index: 6, kind: input, shape index: {}]
  %s7 = inlined_call_operand.vmem [shape: f32[2,1,256], index: 7, kind: output, shape index: {}]
  %s8 = sld [smem:[#allocation0]]
  $region61: #{reverse_stage_forward.1} parent=0
    _
  %s10 = ssub.s32 1, %s8
  %s11 = scalar_select 0, %s10, %s8
  loop: start=0, step=1, limit=4
  $region2: #{reverse_stage_forward.1} parent=0 // loop_pre_header
    _
  $region3: #{reverse_stage_forward.1} parent=0 // loop_header
    %s13 = sphi 0, %s17
    %p14 = scmp.ge.s32.totalorder %s13, 4
    %s23 = sphi 0, %s25
    %s26 = sphi 0, %s23
    %s27 = sphi 0, %s26
    %s43 = sphi 0, %s27
    %s49 = sphi 0, %s51
    %s52 = sphi 0, %s49
    %s53 = sphi 0, %s52
    %s69 = sphi 0, %s53
    %s73 = sphi 0, %s73
    %s75 = sphi 0, %s73
    %s76 = sphi 0, %s75
    %s90 = sphi 0, %s76
    %s94 = sphi 0, %s94
    %s96 = sphi 0, %s94
    %s97 = sphi 0, %s96
    %s111 = sphi 0, %s97
    %s115 = sphi 0, %s115
    %s117 = sphi 0, %s115
    %s118 = sphi 0, %s117
    %s132 = sphi 0, %s118
    %s136 = sphi 0, %s136
    %s138 = sphi 0, %s136
    %s139 = sphi 0, %s138
    %s153 = sphi 0, %s139
    %s157 = sphi 0, %s157
    %s159 = sphi 0, %s157
    %s160 = sphi 0, %s159
    %s174 = sphi 0, %s160
    %s180 = sphi 0, %s182
    %s183 = sphi 0, %s180
    %s184 = sphi 0, %s183
    %s200 = sphi 0, %s184
  $region4: #{reverse_stage_forward.1} parent=0 // loop_header_branch
    %16 = sbr.rel (%p14) target = $region8
  $region5: #{reverse_stage_forward.1} parent=0 // loop_body
    %s18 = ssub.s32 %s13, 1
    %s19 = ssub.s32 %s13, 2
    %s20 = sadd.s32 %s13, 1
    %s21 = ssub.s32 %s13, %s20
    %p22 = scmp.eq.s32.totalorder %s21, 0
    %s24 = sadd.s32 %s23, 1
    %s25 = scalar_select %p22, %s23, %s24
    %p28 = pneg %p22
    %p29 = scmp.eq.s32.totalorder %s13, 1
    %p30 = por %p28, %p29
    %p31 = scmp.ne.s32.totalorder %s23, %s26
    %p32 = scmp.eq.s32.totalorder %s13, 0
    %p33 = por %p31, %p32
    %p34 = scmp.ne.s32.totalorder %s23, %s26
    %p35 = scmp.eq.s32.totalorder %s18, 1
    %p36 = por %p34, %p35
    %p37 = scmp.ne.s32.totalorder %s26, %s27
    %p38 = scmp.eq.s32.totalorder %s18, 0
    %p39 = por %p37, %p38
    %p40 = scmp.ne.s32.totalorder %s26, %s27
    %p41 = scmp.eq.s32.totalorder %s19, 1
    %p42 = por %p40, %p41
    %p44 = scmp.ne.s32.totalorder %s27, %s43
    %p45 = scmp.eq.s32.totalorder %s19, 0
    %p46 = por %p44, %p45
    %s47 = ssub.s32 %s13, %s20
    %p48 = scmp.eq.s32.totalorder %s47, 0
    %s50 = sadd.s32 %s49, 1
    %s51 = scalar_select %p48, %s49, %s50
    %p54 = pneg %p48
    %p55 = scmp.eq.s32.totalorder %s13, 1
    %p56 = por %p54, %p55
    %p57 = scmp.ne.s32.totalorder %s49, %s52
    %p58 = scmp.eq.s32.totalorder %s13, 0
    %p59 = por %p57, %p58
    %p60 = scmp.ne.s32.totalorder %s49, %s52
    %p61 = scmp.eq.s32.totalorder %s18, 1
    %p62 = por %p60, %p61
    %p63 = scmp.ne.s32.totalorder %s52, %s53
    %p64 = scmp.eq.s32.totalorder %s18, 0
    %p65 = por %p63, %p64
    %p66 = scmp.ne.s32.totalorder %s52, %s53
    %p67 = scmp.eq.s32.totalorder %s19, 1
    %p68 = por %p66, %p67
    %p70 = scmp.ne.s32.totalorder %s53, %s69
    %p71 = scmp.eq.s32.totalorder %s19, 0
    %p72 = por %p70, %p71
    %s74 = sadd.s32 %s73, 1
    %p77 = scmp.eq.s32.totalorder %s13, 1
    %p78 = scmp.ne.s32.totalorder %s73, %s75
    %p79 = scmp.eq.s32.totalorder %s13, 0
    %p80 = por %p78, %p79
    %p81 = scmp.ne.s32.totalorder %s73, %s75
    %p82 = scmp.eq.s32.totalorder %s18, 1
    %p83 = por %p81, %p82
    %p84 = scmp.ne.s32.totalorder %s75, %s76
    %p85 = scmp.eq.s32.totalorder %s18, 0
    %p86 = por %p84, %p85
    %p87 = scmp.ne.s32.totalorder %s75, %s76
    %p88 = scmp.eq.s32.totalorder %s19, 1
    %p89 = por %p87, %p88
    %p91 = scmp.ne.s32.totalorder %s76, %s90
    %p92 = scmp.eq.s32.totalorder %s19, 0
    %p93 = por %p91, %p92
    %s95 = sadd.s32 %s94, 1
    %p98 = scmp.eq.s32.totalorder %s13, 1
    %p99 = scmp.ne.s32.totalorder %s94, %s96
    %p100 = scmp.eq.s32.totalorder %s13, 0
    %p101 = por %p99, %p100
    %p102 = scmp.ne.s32.totalorder %s94, %s96
    %p103 = scmp.eq.s32.totalorder %s18, 1
    %p104 = por %p102, %p103
    %p105 = scmp.ne.s32.totalorder %s96, %s97
    %p106 = scmp.eq.s32.totalorder %s18, 0
    %p107 = por %p105, %p106
    %p108 = scmp.ne.s32.totalorder %s96, %s97
    %p109 = scmp.eq.s32.totalorder %s19, 1
    %p110 = por %p108, %p109
    %p112 = scmp.ne.s32.totalorder %s97, %s111
    %p113 = scmp.eq.s32.totalorder %s19, 0
    %p114 = por %p112, %p113
    %s116 = sadd.s32 %s115, 1
    %p119 = scmp.eq.s32.totalorder %s13, 1
    %p120 = scmp.ne.s32.totalorder %s115, %s117
    %p121 = scmp.eq.s32.totalorder %s13, 0
    %p122 = por %p120, %p121
    %p123 = scmp.ne.s32.totalorder %s115, %s117
    %p124 = scmp.eq.s32.totalorder %s18, 1
    %p125 = por %p123, %p124
    %p126 = scmp.ne.s32.totalorder %s117, %s118
    %p127 = scmp.eq.s32.totalorder %s18, 0
    %p128 = por %p126, %p127
    %p129 = scmp.ne.s32.totalorder %s117, %s118
    %p130 = scmp.eq.s32.totalorder %s19, 1
    %p131 = por %p129, %p130
    %p133 = scmp.ne.s32.totalorder %s118, %s132
    %p134 = scmp.eq.s32.totalorder %s19, 0
    %p135 = por %p133, %p134
    %s137 = sadd.s32 %s136, 1
    %p140 = scmp.eq.s32.totalorder %s13, 1
    %p141 = scmp.ne.s32.totalorder %s136, %s138
    %p142 = scmp.eq.s32.totalorder %s13, 0
    %p143 = por %p141, %p142
    %p144 = scmp.ne.s32.totalorder %s136, %s138
    %p145 = scmp.eq.s32.totalorder %s18, 1
    %p146 = por %p144, %p145
    %p147 = scmp.ne.s32.totalorder %s138, %s139
    %p148 = scmp.eq.s32.totalorder %s18, 0
    %p149 = por %p147, %p148
    %p150 = scmp.ne.s32.totalorder %s138, %s139
    %p151 = scmp.eq.s32.totalorder %s19, 1
    %p152 = por %p150, %p151
    %p154 = scmp.ne.s32.totalorder %s139, %s153
    %p155 = scmp.eq.s32.totalorder %s19, 0
    %p156 = por %p154, %p155
    %s158 = sadd.s32 %s157, 1
    %p161 = scmp.eq.s32.totalorder %s13, 1
    %p162 = scmp.ne.s32.totalorder %s157, %s159
    %p163 = scmp.eq.s32.totalorder %s13, 0
    %p164 = por %p162, %p163
    %p165 = scmp.ne.s32.totalorder %s157, %s159
    %p166 = scmp.eq.s32.totalorder %s18, 1
    %p167 = por %p165, %p166
    %p168 = scmp.ne.s32.totalorder %s159, %s160
    %p169 = scmp.eq.s32.totalorder %s18, 0
    %p170 = por %p168, %p169
    %p171 = scmp.ne.s32.totalorder %s159, %s160
    %p172 = scmp.eq.s32.totalorder %s19, 1
    %p173 = por %p171, %p172
    %p175 = scmp.ne.s32.totalorder %s160, %s174
    %p176 = scmp.eq.s32.totalorder %s19, 0
    %p177 = por %p175, %p176
    %s178 = ssub.s32 %s13, %s20
    %p179 = scmp.eq.s32.totalorder %s178, 0
    %s181 = sadd.s32 %s180, 1
    %s182 = scalar_select %p179, %s180, %s181
    %p185 = pneg %p179
    %p186 = scmp.eq.s32.totalorder %s13, 1
    %p187 = por %p185, %p186
    %p188 = scmp.ne.s32.totalorder %s180, %s183
    %p189 = scmp.eq.s32.totalorder %s13, 0
    %p190 = por %p188, %p189
    %p191 = scmp.ne.s32.totalorder %s180, %s183
    %p192 = scmp.eq.s32.totalorder %s18, 1
    %p193 = por %p191, %p192
    %p194 = scmp.ne.s32.totalorder %s183, %s184
    %p195 = scmp.eq.s32.totalorder %s18, 0
    %p196 = por %p194, %p195
    %p197 = scmp.ne.s32.totalorder %s183, %s184
    %p198 = scmp.eq.s32.totalorder %s19, 1
    %p199 = por %p197, %p198
    %p201 = scmp.ne.s32.totalorder %s184, %s200
    %p202 = scmp.eq.s32.totalorder %s19, 0
    %p203 = por %p201, %p202
    %p204 = scmp.le.s32.totalorder 1, %s13
    %p205 = scmp.lt.s32.totalorder %s13, 3
    %p206 = pnand %p204, %p205
    %p207 = pneg %p206
    // Predicated region
    $region9: #{reverse_stage_forward.1} parent=5 // pred_check
      _
    $region10: #{reverse_stage_forward.1} parent=5 // pred_check_branch
      %209 = sbr.rel (%p206) target = $region12
    $region11: #{reverse_stage_forward.1} parent=5 // pred_region
      %s210 = ssub.s32 %s13, 1
      // Predicated region
      $region13: #{reverse_stage_forward.1} parent=11 // pred_check
        %p211 = pneg %p86
      $region14: #{reverse_stage_forward.1} parent=11 // pred_check_branch
        %213 = sbr.rel (%p211) target = $region16
      $region15: #{reverse_stage_forward.1} parent=11 // pred_region
        _
      $region16: #{reverse_stage_forward.1} parent=11 // pred_fallthru
        _
      // Predicated region
      $region17: #{reverse_stage_forward.1} parent=11 // pred_check
        %p214 = pneg %p107
      $region18: #{reverse_stage_forward.1} parent=11 // pred_check_branch
        %216 = sbr.rel (%p214) target = $region20
      $region19: #{reverse_stage_forward.1} parent=11 // pred_region
        _
      $region20: #{reverse_stage_forward.1} parent=11 // pred_fallthru
        _
      // Predicated region
      $region21: #{reverse_stage_forward.1} parent=11 // pred_check
        %p217 = pneg %p128
      $region22: #{reverse_stage_forward.1} parent=11 // pred_check_branch
        %219 = sbr.rel (%p217) target = $region24
      $region23: #{reverse_stage_forward.1} parent=11 // pred_region
        _
      $region24: #{reverse_stage_forward.1} parent=11 // pred_fallthru
        _
      // Predicated region
      $region25: #{reverse_stage_forward.1} parent=11 // pred_check
        %p220 = pneg %p149
      $region26: #{reverse_stage_forward.1} parent=11 // pred_check_branch
        %222 = sbr.rel (%p220) target = $region28
      $region27: #{reverse_stage_forward.1} parent=11 // pred_region
        _
      $region28: #{reverse_stage_forward.1} parent=11 // pred_fallthru
        _
      // Predicated region
      $region29: #{reverse_stage_forward.1} parent=11 // pred_check
        %p223 = pneg %p170
      $region30: #{reverse_stage_forward.1} parent=11 // pred_check_branch
        %225 = sbr.rel (%p223) target = $region32
      $region31: #{reverse_stage_forward.1} parent=11 // pred_region
        _
      $region32: #{reverse_stage_forward.1} parent=11 // pred_fallthru
        _
    $region12: #{reverse_stage_forward.1} parent=5 // pred_fallthru
      _
    %p226 = scmp.lt.s32.totalorder %s13, 2
    // Predicated region
    $region33: #{reverse_stage_forward.1} parent=5 // pred_check
      %p227 = pneg %p226
    $region34: #{reverse_stage_forward.1} parent=5 // pred_check_branch
      %229 = sbr.rel (%p227) target = $region36
    $region35: #{reverse_stage_forward.1} parent=5 // pred_region
      // Predicated region
      $region37: #{reverse_stage_forward.1} parent=35 // pred_check
        %p230 = pneg %p33
      $region38: #{reverse_stage_forward.1} parent=35 // pred_check_branch
        %232 = sbr.rel (%p230) target = $region40
      $region39: #{reverse_stage_forward.1} parent=35 // pred_region
        %p233 = scmp.lt.s32.totalorder %s13, 1
        %s234 = scalar_select %p233, %s13, 1
        %s235 = smul.addr %s234, 8
        %s236 = smul.addr %s235, 8
        %s237 = scalar_lea.vmem %s0, %s236
      $region40: #{reverse_stage_forward.1} parent=35 // pred_fallthru
        _
      // Predicated region
      $region41: #{reverse_stage_forward.1} parent=35 // pred_check
        %p238 = pneg %p59
      $region42: #{reverse_stage_forward.1} parent=35 // pred_check_branch
        %240 = sbr.rel (%p238) target = $region44
      $region43: #{reverse_stage_forward.1} parent=35 // pred_region
        %p241 = scmp.lt.s32.totalorder %s13, 1
        %s242 = scalar_select %p241, %s13, 1
        %s243 = smul.addr %s242, 2
        %s244 = scalar_lea.vmem %s1, %s243
      $region44: #{reverse_stage_forward.1} parent=35 // pred_fallthru
        _
    $region36: #{reverse_stage_forward.1} parent=5 // pred_fallthru
      _
    %p245 = scmp.le.s32.totalorder 1, %s13
    %p246 = scmp.lt.s32.totalorder %s13, 3
    %p247 = pnand %p245, %p246
    %p248 = pneg %p247
    // Predicated region
    $region45: #{reverse_stage_forward.1} parent=5 // pred_check
      _
    $region46: #{reverse_stage_forward.1} parent=5 // pred_check_branch
      %250 = sbr.rel (%p247) target = $region48
    $region47: #{reverse_stage_forward.1} parent=5 // pred_region
      %s251 = ssub.s32 %s13, 1
      %p252 = scmp.lt.s32.totalorder %s18, 1
      %s253 = scalar_select %p252, %s18, 1
      %s254 = smul.addr %s253, 8
      %s255 = smul.addr %s254, 8
      %s256 = scalar_lea.vmem %s0, %s255
      %p257 = pneg %p39
      %p258 = pneg %p36
      %p259 = scmp.lt.s32.totalorder %s18, 1
      %s260 = scalar_select %p259, %s18, 1
      %s261 = smul.addr %s260, 2
      %s262 = scalar_lea.vmem %s1, %s261
      %p263 = pneg %p65
      %p264 = pneg %p62
      %p265 = pneg %p86
      %p266 = pneg %p83
      %p267 = pneg %p107
      %p268 = pneg %p104
      %p269 = pneg %p128
      %p270 = pneg %p125
      %p271 = pneg %p149
      %p272 = pneg %p146
      %p273 = pneg %p170
      %p274 = pneg %p167
      %p275 = pneg %p196
      %p276 = pneg %p193
      %p277 = scmp.lt.s32.totalorder %s18, 1
      %s278 = scalar_select %p277, %s18, 1
      %s279 = smul.addr %s278, 2
      %s280 = scalar_lea.vmem %s7, %s279
      %p281 = scmp.lt.s32.totalorder %s18, 1
      %s282 = scalar_select %p281, %s18, 1
      %s283 = smul.addr %s282, 8
      %s284 = smul.addr %s283, 8
      %s285 = scalar_lea.vmem %s0, %s284
      %p286 = scmp.lt.s32.totalorder %s18, 1
      %s287 = scalar_select %p286, %s18, 1
      %s288 = smul.addr %s287, 2
      %s289 = scalar_lea.vmem %s1, %s288
      %p290 = scmp.lt.s32.totalorder %s18, 1
      %s291 = scalar_select %p290, %s18, 1
      %s292 = smul.addr %s291, 2
      %s293 = scalar_lea.vmem %s7, %s292
      %v295 = vld [vmem:[%s285] sm:$0xff]
      %v296 = vld [vmem:[%s285 + $0x8] sm:$0xff]
      %v297 = vld [vmem:[%s285 + $0x10] sm:$0xff]
      %v298 = vld [vmem:[%s285 + $0x18] sm:$0xff]
      %v299 = vld [vmem:[%s285 + $0x20] sm:$0xff]
      %v300 = vld [vmem:[%s285 + $0x28] sm:$0xff]
      %v301 = vld [vmem:[%s285 + $0x30] sm:$0xff]
      %v302 = vld [vmem:[%s285 + $0x38] sm:$0xff]
      %v303 = vpack.c.bf16 %v296, %v295
      %v304 = vpack.c.bf16 %v298, %v297
      %v305 = vpack.c.bf16 %v300, %v299
      %v306 = vpack.c.bf16 %v302, %v301
      %v307 = vld [vmem:[%s289] sm:$0x3]
      %v308 = vmul.f32 %v307, 1.442695
      %v309 = vpow.pop %v308
      %v310 = vadd.f32 %v309, 1.0
      %v311 = vrcp.pop %v310
      %v312 = vmul.f32 %v310, %v311
      %v313 = vsub.f32 1.0, %v312
      %v314 = vmul.f32 %v311, %v313
      %v315 = vadd.f32 %v311, %v314
      %vm316 = vweird.f32 %v310
      %vm317 = vweird.f32 %v311
      %vm318 = vmor %vm316, %vm317
      %v319 = vsel %vm318, %v311, %v315
      %v320 = vand.u32 2147483647, %v310
      %vm321 = vcmp.eq.f32.partialorder %v320, 8.507059e+37
      %v322 = vand.u32 %v310, 2147483648
      %v323 = vor.u32 1.1754944e-38, %v322
      %v324 = vsel %vm321, %v323, %v319
      %v325 = vmul.f32 1.0, %v324
      %v326 = vld [vmem:[%s2] sm:$0xff]
      %v327 = vld [vmem:[%s2 + $0x8] sm:$0xff]
      %v328 = vld [vmem:[%s2 + $0x10] sm:$0x1]
      %v329 = vld [vmem:[%s2 + $0x18] sm:$0x1]
      %v331 = vperm.slane %v325, 0
      %v332 = vperm.slane %v325, 1
      %v335 = vpack.c.bf16 %v332, %v331
      %v340 = vunpack.c.l.b16 %v303
      %v341 = vunpack.c.h.b16 %v303
      %v342 = vunpack.c.l.b16 %v304
      %v343 = vunpack.c.h.b16 %v304
      %v344 = vunpack.c.l.b16 %v305
      %v345 = vunpack.c.h.b16 %v305
      %v346 = vunpack.c.l.b16 %v306
      %v347 = vunpack.c.h.b16 %v306
      %v348 = vpack.c.b16 %v342, %v340
      %v349 = vpack.c.b16 %v343, %v341
      %v350 = vpack.c.b16 %v346, %v344
      %v351 = vpack.c.b16 %v347, %v345
      %v357 = vperm.slane %v335, 0
      %v358 = vperm.slane %v335, 4
      %v359 = vld [vmem:[%s3] sm:$0xf]
      %v360 = vld [vmem:[%s3 + $0x4] sm:$0xf]
      %v361 = vld [vmem:[%s3 + $0x8] sm:$0xf]
      %v362 = vld [vmem:[%s3 + $0xc] sm:$0xf]
      %v367 = vunpack.c.l.b16 %v359
      %v368 = vunpack.c.l.b16 %v360
      %v369 = vunpack.c.l.b16 %v361
      %v370 = vunpack.c.l.b16 %v362
      %v371 = vpack.c.b16 %v368, %v367
      %v372 = vpack.c.b16 %v370, %v369
      %vm373 = vcmask 326656
      %v375 = vsel %vm373, %v371, 0
      %v378 = vsel %vm373, %v372, 0
      %vm380 = vcmask 1043456
      %v382 = vsel %vm380, %v357, 0
      %v385 = vsel %vm380, %v358, 0
      %387 = vmatpush.bf16.msra.mxu0 0
      %388 = vmatpush.bf16.msra.mxu0 0
      %389 = vmatpush.bf16.msra.mxu0 0
      %390 = vmatpush.bf16.msra.mxu0 0
      %391 = vmatpush.bf16.msra.mxu0 0
      %392 = vmatpush.bf16.msra.mxu0 %v382
      %393 = vmatpush.bf16.msra.mxu0 %v350
      %394 = vmatpush.bf16.msra.mxu0 %v348
      %395 = vmatmul.bf16.gmra.mxu0 %v375
      %v396 = vpop.f32.mrf.mxu0
      %v397 = vadd.f32 0.0, %v396
      %v398 = vpop.f32.mrf.mxu0
      %v399 = vadd.f32 0.0, %v398
      %400 = vmatmul.bf16.gmra.mxu0 %v378
      %v401 = vpop.f32.mrf.mxu0
      %v402 = vadd.f32 0.0, %v401
      %v403 = vpop.f32.mrf.mxu0
      %v404 = vadd.f32 0.0, %v403
      %405 = vdwg.mxu0
      %406 = vmatpush.bf16.msra.mxu0 0
      %407 = vmatpush.bf16.msra.mxu0 0
      %408 = vmatpush.bf16.msra.mxu0 0
      %409 = vmatpush.bf16.msra.mxu0 0
      %410 = vmatpush.bf16.msra.mxu0 0
      %411 = vmatpush.bf16.msra.mxu0 %v385
      %412 = vmatpush.bf16.msra.mxu0 %v351
      %413 = vmatpush.bf16.msra.mxu0 %v349
      %414 = vmatmul.bf16.gmra.mxu0 %v375
      %v415 = vpop.f32.mrf.mxu0
      %v416 = vadd.f32 0.0, %v415
      %v417 = vpop.f32.mrf.mxu0
      %v418 = vadd.f32 0.0, %v417
      %419 = vmatmul.bf16.gmra.mxu0 %v378
      %v420 = vpop.f32.mrf.mxu0
      %v421 = vadd.f32 0.0, %v420
      %v422 = vpop.f32.mrf.mxu0
      %v423 = vadd.f32 0.0, %v422
      %424 = vdwg.mxu0
      %425 = vrot.lane.b32.xlu0 %v397, 17
      %v426 = vpop.permute.xlu0 %425
      %427 = vrot.lane.b32.xlu0 %v399, 17
      %v428 = vpop.permute.xlu0 %427
      %429 = vrot.lane.b32.xlu0 %v402, 17
      %v430 = vpop.permute.xlu0 %429
      %431 = vrot.lane.b32.xlu0 %v404, 17
      %v432 = vpop.permute.xlu0 %431
      %433 = vrot.lane.b32.xlu0 %v416, 17
      %v434 = vpop.permute.xlu0 %433
      %435 = vrot.lane.b32.xlu0 %v418, 17
      %v436 = vpop.permute.xlu0 %435
      %437 = vrot.lane.b32.xlu0 %v421, 17
      %v438 = vpop.permute.xlu0 %437
      %439 = vrot.lane.b32.xlu0 %v423, 17
      %v440 = vpop.permute.xlu0 %439
      %v441 = vlaneseq
      %v442 = vand.u32 %v441, 127
      %vm443 = vcmp.lt.s32.totalorder %v442, 17
      %v444 = vsel %vm443, %v426, %v434
      %v445 = vsel %vm443, %v428, %v436
      %v446 = vsel %vm443, %v430, %v438
      %v447 = vsel %vm443, %v432, %v440
      %v448 = vsel %vm443, %v434, %v426
      %v449 = vsel %vm443, %v436, %v428
      %v450 = vsel %vm443, %v438, %v430
      %v451 = vsel %vm443, %v440, %v432
      %v452 = vperm.slane %v326, 0
      %v453 = vperm.slane %v327, 0
      %v454 = vmul.f32 %v448, %v452
      %v455 = vmul.f32 %v444, %v453
      %v456 = vmul.f32 %v449, %v452
      %v457 = vmul.f32 %v445, %v453
      %v458 = vmul.f32 %v450, %v452
      %v459 = vmul.f32 %v446, %v453
      %v460 = vmul.f32 %v451, %v452
      %v461 = vmul.f32 %v447, %v453
      %v462 = vadd.f32 %v454, 0.0
      %v463 = vadd.f32 %v455, 0.0
      %v464 = vadd.f32 %v456, 0.0
      %v465 = vadd.f32 %v457, 0.0
      %v466 = vadd.f32 %v458, 0.0
      %v467 = vadd.f32 %v459, 0.0
      %v468 = vadd.f32 %v460, 0.0
      %v469 = vadd.f32 %v461, 0.0
      %s470 = scalar_lea.vmem %s3, 16
      %v471 = vld [vmem:[%s470] sm:$0xf]
      %v472 = vld [vmem:[%s470 + $0x4] sm:$0xf]
      %v473 = vld [vmem:[%s470 + $0x8] sm:$0xf]
      %v474 = vld [vmem:[%s470 + $0xc] sm:$0xf]
      %v479 = vunpack.c.l.b16 %v471
      %v480 = vunpack.c.l.b16 %v472
      %v481 = vunpack.c.l.b16 %v473
      %v482 = vunpack.c.l.b16 %v474
      %v483 = vpack.c.b16 %v480, %v479
      %v484 = vpack.c.b16 %v482, %v481
      %v486 = vsel %vm373, %v483, 0
      %v489 = vsel %vm373, %v484, 0
      %491 = vmatpush.bf16.msra.mxu0 0
      %492 = vmatpush.bf16.msra.mxu0 0
      %493 = vmatpush.bf16.msra.mxu0 0
      %494 = vmatpush.bf16.msra.mxu0 0
      %495 = vmatpush.bf16.msra.mxu0 0
      %496 = vmatpush.bf16.msra.mxu0 %v382
      %497 = vmatpush.bf16.msra.mxu0 %v350
      %498 = vmatpush.bf16.msra.mxu0 %v348
      %499 = vmatmul.bf16.gmra.mxu0 %v486
      %v500 = vpop.f32.mrf.mxu0
      %v501 = vadd.f32 0.0, %v500
      %v502 = vpop.f32.mrf.mxu0
      %v503 = vadd.f32 0.0, %v502
      %504 = vmatmul.bf16.gmra.mxu0 %v489
      %v505 = vpop.f32.mrf.mxu0
      %v506 = vadd.f32 0.0, %v505
      %v507 = vpop.f32.mrf.mxu0
      %v508 = vadd.f32 0.0, %v507
      %509 = vdwg.mxu0
      %510 = vmatpush.bf16.msra.mxu0 0
      %511 = vmatpush.bf16.msra.mxu0 0
      %512 = vmatpush.bf16.msra.mxu0 0
      %513 = vmatpush.bf16.msra.mxu0 0
      %514 = vmatpush.bf16.msra.mxu0 0
      %515 = vmatpush.bf16.msra.mxu0 %v385
      %516 = vmatpush.bf16.msra.mxu0 %v351
      %517 = vmatpush.bf16.msra.mxu0 %v349
      %518 = vmatmul.bf16.gmra.mxu0 %v486
      %v519 = vpop.f32.mrf.mxu0
      %v520 = vadd.f32 0.0, %v519
      %v521 = vpop.f32.mrf.mxu0
      %v522 = vadd.f32 0.0, %v521
      %523 = vmatmul.bf16.gmra.mxu0 %v489
      %v524 = vpop.f32.mrf.mxu0
      %v525 = vadd.f32 0.0, %v524
      %v526 = vpop.f32.mrf.mxu0
      %v527 = vadd.f32 0.0, %v526
      %528 = vdwg.mxu0
      %529 = vrot.lane.b32.xlu0 %v501, 16
      %v530 = vpop.permute.xlu0 %529
      %531 = vrot.lane.b32.xlu0 %v503, 16
      %v532 = vpop.permute.xlu0 %531
      %533 = vrot.lane.b32.xlu0 %v506, 16
      %v534 = vpop.permute.xlu0 %533
      %535 = vrot.lane.b32.xlu0 %v508, 16
      %v536 = vpop.permute.xlu0 %535
      %537 = vrot.lane.b32.xlu0 %v520, 16
      %v538 = vpop.permute.xlu0 %537
      %539 = vrot.lane.b32.xlu0 %v522, 16
      %v540 = vpop.permute.xlu0 %539
      %541 = vrot.lane.b32.xlu0 %v525, 16
      %v542 = vpop.permute.xlu0 %541
      %543 = vrot.lane.b32.xlu0 %v527, 16
      %v544 = vpop.permute.xlu0 %543
      %vm545 = vcmp.lt.s32.totalorder %v442, 16
      %v546 = vsel %vm545, %v530, %v538
      %v547 = vsel %vm545, %v532, %v540
      %v548 = vsel %vm545, %v534, %v542
      %v549 = vsel %vm545, %v536, %v544
      %v550 = vsel %vm545, %v538, %v530
      %v551 = vsel %vm545, %v540, %v532
      %v552 = vsel %vm545, %v542, %v534
      %v553 = vsel %vm545, %v544, %v536
      %v554 = vperm.slane %v326, 1
      %v555 = vperm.slane %v327, 1
      %v556 = vmul.f32 %v550, %v554
      %v557 = vmul.f32 %v546, %v555
      %v558 = vmul.f32 %v551, %v554
      %v559 = vmul.f32 %v547, %v555
      %v560 = vmul.f32 %v552, %v554
      %v561 = vmul.f32 %v548, %v555
      %v562 = vmul.f32 %v553, %v554
      %v563 = vmul.f32 %v549, %v555
      %v564 = vadd.f32 %v462, %v556
      %v565 = vadd.f32 %v463, %v557
      %v566 = vadd.f32 %v464, %v558
      %v567 = vadd.f32 %v465, %v559
      %v568 = vadd.f32 %v466, %v560
      %v569 = vadd.f32 %v467, %v561
      %v570 = vadd.f32 %v468, %v562
      %v571 = vadd.f32 %v469, %v563
      %s572 = scalar_lea.vmem %s3, 32
      %v573 = vld [vmem:[%s572] sm:$0xf]
      %v574 = vld [vmem:[%s572 + $0x4] sm:$0xf]
      %v575 = vld [vmem:[%s572 + $0x8] sm:$0xf]
      %v576 = vld [vmem:[%s572 + $0xc] sm:$0xf]
      %v581 = vunpack.c.l.b16 %v573
      %v582 = vunpack.c.l.b16 %v574
      %v583 = vunpack.c.l.b16 %v575
      %v584 = vunpack.c.l.b16 %v576
      %v585 = vpack.c.b16 %v582, %v581
      %v586 = vpack.c.b16 %v584, %v583
      %v588 = vsel %vm373, %v585, 0
      %v591 = vsel %vm373, %v586, 0
      %593 = vmatpush.bf16.msra.mxu0 0
      %594 = vmatpush.bf16.msra.mxu0 0
      %595 = vmatpush.bf16.msra.mxu0 0
      %596 = vmatpush.bf16.msra.mxu0 0
      %597 = vmatpush.bf16.msra.mxu0 0
      %598 = vmatpush.bf16.msra.mxu0 %v382
      %599 = vmatpush.bf16.msra.mxu0 %v350
      %600 = vmatpush.bf16.msra.mxu0 %v348
      %601 = vmatmul.bf16.gmra.mxu0 %v588
      %v602 = vpop.f32.mrf.mxu0
      %v603 = vadd.f32 0.0, %v602
      %v604 = vpop.f32.mrf.mxu0
      %v605 = vadd.f32 0.0, %v604
      %606 = vmatmul.bf16.gmra.mxu0 %v591
      %v607 = vpop.f32.mrf.mxu0
      %v608 = vadd.f32 0.0, %v607
      %v609 = vpop.f32.mrf.mxu0
      %v610 = vadd.f32 0.0, %v609
      %611 = vdwg.mxu0
      %612 = vmatpush.bf16.msra.mxu0 0
      %613 = vmatpush.bf16.msra.mxu0 0
      %614 = vmatpush.bf16.msra.mxu0 0
      %615 = vmatpush.bf16.msra.mxu0 0
      %616 = vmatpush.bf16.msra.mxu0 0
      %617 = vmatpush.bf16.msra.mxu0 %v385
      %618 = vmatpush.bf16.msra.mxu0 %v351
      %619 = vmatpush.bf16.msra.mxu0 %v349
      %620 = vmatmul.bf16.gmra.mxu0 %v588
      %v621 = vpop.f32.mrf.mxu0
      %v622 = vadd.f32 0.0, %v621
      %v623 = vpop.f32.mrf.mxu0
      %v624 = vadd.f32 0.0, %v623
      %625 = vmatmul.bf16.gmra.mxu0 %v591
      %v626 = vpop.f32.mrf.mxu0
      %v627 = vadd.f32 0.0, %v626
      %v628 = vpop.f32.mrf.mxu0
      %v629 = vadd.f32 0.0, %v628
      %630 = vdwg.mxu0
      %631 = vrot.lane.b32.xlu0 %v603, 15
      %v632 = vpop.permute.xlu0 %631
      %633 = vrot.lane.b32.xlu0 %v605, 15
      %v634 = vpop.permute.xlu0 %633
      %635 = vrot.lane.b32.xlu0 %v608, 15
      %v636 = vpop.permute.xlu0 %635
      %637 = vrot.lane.b32.xlu0 %v610, 15
      %v638 = vpop.permute.xlu0 %637
      %639 = vrot.lane.b32.xlu0 %v622, 15
      %v640 = vpop.permute.xlu0 %639
      %641 = vrot.lane.b32.xlu0 %v624, 15
      %v642 = vpop.permute.xlu0 %641
      %643 = vrot.lane.b32.xlu0 %v627, 15
      %v644 = vpop.permute.xlu0 %643
      %645 = vrot.lane.b32.xlu0 %v629, 15
      %v646 = vpop.permute.xlu0 %645
      %vm647 = vcmp.lt.s32.totalorder %v442, 15
      %v648 = vsel %vm647, %v632, %v640
      %v649 = vsel %vm647, %v634, %v642
      %v650 = vsel %vm647, %v636, %v644
      %v651 = vsel %vm647, %v638, %v646
      %v652 = vsel %vm647, %v640, %v632
      %v653 = vsel %vm647, %v642, %v634
      %v654 = vsel %vm647, %v644, %v636
      %v655 = vsel %vm647, %v646, %v638
      %v656 = vperm.slane %v326, 2
      %v657 = vperm.slane %v327, 2
      %v658 = vmul.f32 %v652, %v656
      %v659 = vmul.f32 %v648, %v657
      %v660 = vmul.f32 %v653, %v656
      %v661 = vmul.f32 %v649, %v657
      %v662 = vmul.f32 %v654, %v656
      %v663 = vmul.f32 %v650, %v657
      %v664 = vmul.f32 %v655, %v656
      %v665 = vmul.f32 %v651, %v657
      %v666 = vadd.f32 %v564, %v658
      %v667 = vadd.f32 %v565, %v659
      %v668 = vadd.f32 %v566, %v660
      %v669 = vadd.f32 %v567, %v661
      %v670 = vadd.f32 %v568, %v662
      %v671 = vadd.f32 %v569, %v663
      %v672 = vadd.f32 %v570, %v664
      %v673 = vadd.f32 %v571, %v665
      %s674 = scalar_lea.vmem %s3, 48
      %v675 = vld [vmem:[%s674] sm:$0xf]
      %v676 = vld [vmem:[%s674 + $0x4] sm:$0xf]
      %v677 = vld [vmem:[%s674 + $0x8] sm:$0xf]
      %v678 = vld [vmem:[%s674 + $0xc] sm:$0xf]
      %v683 = vunpack.c.l.b16 %v675
      %v684 = vunpack.c.l.b16 %v676
      %v685 = vunpack.c.l.b16 %v677
      %v686 = vunpack.c.l.b16 %v678
      %v687 = vpack.c.b16 %v684, %v683
      %v688 = vpack.c.b16 %v686, %v685
      %v690 = vsel %vm373, %v687, 0
      %v693 = vsel %vm373, %v688, 0
      %695 = vmatpush.bf16.msra.mxu0 0
      %696 = vmatpush.bf16.msra.mxu0 0
      %697 = vmatpush.bf16.msra.mxu0 0
      %698 = vmatpush.bf16.msra.mxu0 0
      %699 = vmatpush.bf16.msra.mxu0 0
      %700 = vmatpush.bf16.msra.mxu0 %v382
      %701 = vmatpush.bf16.msra.mxu0 %v350
      %702 = vmatpush.bf16.msra.mxu0 %v348
      %703 = vmatmul.bf16.gmra.mxu0 %v690
      %v704 = vpop.f32.mrf.mxu0
      %v705 = vadd.f32 0.0, %v704
      %v706 = vpop.f32.mrf.mxu0
      %v707 = vadd.f32 0.0, %v706
      %708 = vmatmul.bf16.gmra.mxu0 %v693
      %v709 = vpop.f32.mrf.mxu0
      %v710 = vadd.f32 0.0, %v709
      %v711 = vpop.f32.mrf.mxu0
      %v712 = vadd.f32 0.0, %v711
      %713 = vdwg.mxu0
      %714 = vmatpush.bf16.msra.mxu0 0
      %715 = vmatpush.bf16.msra.mxu0 0
      %716 = vmatpush.bf16.msra.mxu0 0
      %717 = vmatpush.bf16.msra.mxu0 0
      %718 = vmatpush.bf16.msra.mxu0 0
      %719 = vmatpush.bf16.msra.mxu0 %v385
      %720 = vmatpush.bf16.msra.mxu0 %v351
      %721 = vmatpush.bf16.msra.mxu0 %v349
      %722 = vmatmul.bf16.gmra.mxu0 %v690
      %v723 = vpop.f32.mrf.mxu0
      %v724 = vadd.f32 0.0, %v723
      %v725 = vpop.f32.mrf.mxu0
      %v726 = vadd.f32 0.0, %v725
      %727 = vmatmul.bf16.gmra.mxu0 %v693
      %v728 = vpop.f32.mrf.mxu0
      %v729 = vadd.f32 0.0, %v728
      %v730 = vpop.f32.mrf.mxu0
      %v731 = vadd.f32 0.0, %v730
      %732 = vdwg.mxu0
      %733 = vrot.lane.b32.xlu0 %v705, 1
      %v734 = vpop.permute.xlu0 %733
      %735 = vrot.lane.b32.xlu0 %v707, 1
      %v736 = vpop.permute.xlu0 %735
      %737 = vrot.lane.b32.xlu0 %v710, 1
      %v738 = vpop.permute.xlu0 %737
      %739 = vrot.lane.b32.xlu0 %v712, 1
      %v740 = vpop.permute.xlu0 %739
      %741 = vrot.lane.b32.xlu0 %v724, 1
      %v742 = vpop.permute.xlu0 %741
      %743 = vrot.lane.b32.xlu0 %v726, 1
      %v744 = vpop.permute.xlu0 %743
      %745 = vrot.lane.b32.xlu0 %v729, 1
      %v746 = vpop.permute.xlu0 %745
      %747 = vrot.lane.b32.xlu0 %v731, 1
      %v748 = vpop.permute.xlu0 %747
      %vm749 = vcmp.lt.s32.totalorder %v442, 1
      %v750 = vsel %vm749, %v734, %v742
      %v751 = vsel %vm749, %v736, %v744
      %v752 = vsel %vm749, %v738, %v746
      %v753 = vsel %vm749, %v740, %v748
      %v754 = vsel %vm749, %v742, %v734
      %v755 = vsel %vm749, %v744, %v736
      %v756 = vsel %vm749, %v746, %v738
      %v757 = vsel %vm749, %v748, %v740
      %v758 = vperm.slane %v326, 3
      %v759 = vperm.slane %v327, 3
      %v760 = vmul.f32 %v754, %v758
      %v761 = vmul.f32 %v750, %v759
      %v762 = vmul.f32 %v755, %v758
      %v763 = vmul.f32 %v751, %v759
      %v764 = vmul.f32 %v756, %v758
      %v765 = vmul.f32 %v752, %v759
      %v766 = vmul.f32 %v757, %v758
      %v767 = vmul.f32 %v753, %v759
      %v768 = vadd.f32 %v666, %v760
      %v769 = vadd.f32 %v667, %v761
      %v770 = vadd.f32 %v668, %v762
      %v771 = vadd.f32 %v669, %v763
      %v772 = vadd.f32 %v670, %v764
      %v773 = vadd.f32 %v671, %v765
      %v774 = vadd.f32 %v672, %v766
      %v775 = vadd.f32 %v673, %v767
      %s776 = scalar_lea.vmem %s3, 64
      %v777 = vld [vmem:[%s776] sm:$0xf]
      %v778 = vld [vmem:[%s776 + $0x4] sm:$0xf]
      %v779 = vld [vmem:[%s776 + $0x8] sm:$0xf]
      %v780 = vld [vmem:[%s776 + $0xc] sm:$0xf]
      %v785 = vunpack.c.l.b16 %v777
      %v786 = vunpack.c.l.b16 %v778
      %v787 = vunpack.c.l.b16 %v779
      %v788 = vunpack.c.l.b16 %v780
      %v789 = vpack.c.b16 %v786, %v785
      %v790 = vpack.c.b16 %v788, %v787
      %v792 = vsel %vm373, %v789, 0
      %v795 = vsel %vm373, %v790, 0
      %797 = vmatpush.bf16.msra.mxu0 0
      %798 = vmatpush.bf16.msra.mxu0 0
      %799 = vmatpush.bf16.msra.mxu0 0
      %800 = vmatpush.bf16.msra.mxu0 0
      %801 = vmatpush.bf16.msra.mxu0 0
      %802 = vmatpush.bf16.msra.mxu0 %v382
      %803 = vmatpush.bf16.msra.mxu0 %v350
      %804 = vmatpush.bf16.msra.mxu0 %v348
      %805 = vmatmul.bf16.gmra.mxu0 %v792
      %v806 = vpop.f32.mrf.mxu0
      %v807 = vadd.f32 0.0, %v806
      %v808 = vpop.f32.mrf.mxu0
      %v809 = vadd.f32 0.0, %v808
      %810 = vmatmul.bf16.gmra.mxu0 %v795
      %v811 = vpop.f32.mrf.mxu0
      %v812 = vadd.f32 0.0, %v811
      %v813 = vpop.f32.mrf.mxu0
      %v814 = vadd.f32 0.0, %v813
      %815 = vdwg.mxu0
      %816 = vmatpush.bf16.msra.mxu0 0
      %817 = vmatpush.bf16.msra.mxu0 0
      %818 = vmatpush.bf16.msra.mxu0 0
      %819 = vmatpush.bf16.msra.mxu0 0
      %820 = vmatpush.bf16.msra.mxu0 0
      %821 = vmatpush.bf16.msra.mxu0 %v385
      %822 = vmatpush.bf16.msra.mxu0 %v351
      %823 = vmatpush.bf16.msra.mxu0 %v349
      %824 = vmatmul.bf16.gmra.mxu0 %v792
      %v825 = vpop.f32.mrf.mxu0
      %v826 = vadd.f32 0.0, %v825
      %v827 = vpop.f32.mrf.mxu0
      %v828 = vadd.f32 0.0, %v827
      %829 = vmatmul.bf16.gmra.mxu0 %v795
      %v830 = vpop.f32.mrf.mxu0
      %v831 = vadd.f32 0.0, %v830
      %v832 = vpop.f32.mrf.mxu0
      %v833 = vadd.f32 0.0, %v832
      %834 = vdwg.mxu0
      %v835 = vadd.f32 %v768, %v807
      %v836 = vadd.f32 %v769, %v826
      %v837 = vadd.f32 %v770, %v809
      %v838 = vadd.f32 %v771, %v828
      %v839 = vadd.f32 %v772, %v812
      %v840 = vadd.f32 %v773, %v831
      %v841 = vadd.f32 %v774, %v814
      %v842 = vadd.f32 %v775, %v833
      %s843 = scalar_lea.vmem %s3, 80
      %v844 = vld [vmem:[%s843] sm:$0xf]
      %v845 = vld [vmem:[%s843 + $0x4] sm:$0xf]
      %v846 = vld [vmem:[%s843 + $0x8] sm:$0xf]
      %v847 = vld [vmem:[%s843 + $0xc] sm:$0xf]
      %v852 = vunpack.c.l.b16 %v844
      %v853 = vunpack.c.l.b16 %v845
      %v854 = vunpack.c.l.b16 %v846
      %v855 = vunpack.c.l.b16 %v847
      %v856 = vpack.c.b16 %v853, %v852
      %v857 = vpack.c.b16 %v855, %v854
      %v859 = vsel %vm373, %v856, 0
      %v862 = vsel %vm373, %v857, 0
      %864 = vmatpush.bf16.msra.mxu0 0
      %865 = vmatpush.bf16.msra.mxu0 0
      %866 = vmatpush.bf16.msra.mxu0 0
      %867 = vmatpush.bf16.msra.mxu0 0
      %868 = vmatpush.bf16.msra.mxu0 0
      %869 = vmatpush.bf16.msra.mxu0 %v382
      %870 = vmatpush.bf16.msra.mxu0 %v350
      %871 = vmatpush.bf16.msra.mxu0 %v348
      %872 = vmatmul.bf16.gmra.mxu0 %v859
      %v873 = vpop.f32.mrf.mxu0
      %v874 = vadd.f32 0.0, %v873
      %v875 = vpop.f32.mrf.mxu0
      %v876 = vadd.f32 0.0, %v875
      %877 = vmatmul.bf16.gmra.mxu0 %v862
      %v878 = vpop.f32.mrf.mxu0
      %v879 = vadd.f32 0.0, %v878
      %v880 = vpop.f32.mrf.mxu0
      %v881 = vadd.f32 0.0, %v880
      %882 = vdwg.mxu0
      %883 = vmatpush.bf16.msra.mxu0 0
      %884 = vmatpush.bf16.msra.mxu0 0
      %885 = vmatpush.bf16.msra.mxu0 0
      %886 = vmatpush.bf16.msra.mxu0 0
      %887 = vmatpush.bf16.msra.mxu0 0
      %888 = vmatpush.bf16.msra.mxu0 %v385
      %889 = vmatpush.bf16.msra.mxu0 %v351
      %890 = vmatpush.bf16.msra.mxu0 %v349
      %891 = vmatmul.bf16.gmra.mxu0 %v859
      %v892 = vpop.f32.mrf.mxu0
      %v893 = vadd.f32 0.0, %v892
      %v894 = vpop.f32.mrf.mxu0
      %v895 = vadd.f32 0.0, %v894
      %896 = vmatmul.bf16.gmra.mxu0 %v862
      %v897 = vpop.f32.mrf.mxu0
      %v898 = vadd.f32 0.0, %v897
      %v899 = vpop.f32.mrf.mxu0
      %v900 = vadd.f32 0.0, %v899
      %901 = vdwg.mxu0
      %902 = vrot.lane.b32.xlu0 %v874, 127
      %v903 = vpop.permute.xlu0 %902
      %904 = vrot.lane.b32.xlu0 %v876, 127
      %v905 = vpop.permute.xlu0 %904
      %906 = vrot.lane.b32.xlu0 %v879, 127
      %v907 = vpop.permute.xlu0 %906
      %908 = vrot.lane.b32.xlu0 %v881, 127
      %v909 = vpop.permute.xlu0 %908
      %910 = vrot.lane.b32.xlu0 %v893, 127
      %v911 = vpop.permute.xlu0 %910
      %912 = vrot.lane.b32.xlu0 %v895, 127
      %v913 = vpop.permute.xlu0 %912
      %914 = vrot.lane.b32.xlu0 %v898, 127
      %v915 = vpop.permute.xlu0 %914
      %916 = vrot.lane.b32.xlu0 %v900, 127
      %v917 = vpop.permute.xlu0 %916
      %vm918 = vcmp.lt.s32.totalorder %v442, 127
      %v919 = vsel %vm918, %v903, %v911
      %v920 = vsel %vm918, %v905, %v913
      %v921 = vsel %vm918, %v907, %v915
      %v922 = vsel %vm918, %v909, %v917
      %v923 = vsel %vm918, %v911, %v903
      %v924 = vsel %vm918, %v913, %v905
      %v925 = vsel %vm918, %v915, %v907
      %v926 = vsel %vm918, %v917, %v909
      %v927 = vperm.slane %v326, 5
      %v928 = vperm.slane %v327, 5
      %v929 = vmul.f32 %v919, %v927
      %v930 = vmul.f32 %v923, %v928
      %v931 = vmul.f32 %v920, %v927
      %v932 = vmul.f32 %v924, %v928
      %v933 = vmul.f32 %v921, %v927
      %v934 = vmul.f32 %v925, %v928
      %v935 = vmul.f32 %v922, %v927
      %v936 = vmul.f32 %v926, %v928
      %v937 = vadd.f32 %v835, %v929
      %v938 = vadd.f32 %v836, %v930
      %v939 = vadd.f32 %v837, %v931
      %v940 = vadd.f32 %v838, %v932
      %v941 = vadd.f32 %v839, %v933
      %v942 = vadd.f32 %v840, %v934
      %v943 = vadd.f32 %v841, %v935
      %v944 = vadd.f32 %v842, %v936
      %s945 = scalar_lea.vmem %s3, 96
      %v946 = vld [vmem:[%s945] sm:$0xf]
      %v947 = vld [vmem:[%s945 + $0x4] sm:$0xf]
      %v948 = vld [vmem:[%s945 + $0x8] sm:$0xf]
      %v949 = vld [vmem:[%s945 + $0xc] sm:$0xf]
      %v954 = vunpack.c.l.b16 %v946
      %v955 = vunpack.c.l.b16 %v947
      %v956 = vunpack.c.l.b16 %v948
      %v957 = vunpack.c.l.b16 %v949
      %v958 = vpack.c.b16 %v955, %v954
      %v959 = vpack.c.b16 %v957, %v956
      %v961 = vsel %vm373, %v958, 0
      %v964 = vsel %vm373, %v959, 0
      %966 = vmatpush.bf16.msra.mxu0 0
      %967 = vmatpush.bf16.msra.mxu0 0
      %968 = vmatpush.bf16.msra.mxu0 0
      %969 = vmatpush.bf16.msra.mxu0 0
      %970 = vmatpush.bf16.msra.mxu0 0
      %971 = vmatpush.bf16.msra.mxu0 %v382
      %972 = vmatpush.bf16.msra.mxu0 %v350
      %973 = vmatpush.bf16.msra.mxu0 %v348
      %974 = vmatmul.bf16.gmra.mxu0 %v961
      %v975 = vpop.f32.mrf.mxu0
      %v976 = vadd.f32 0.0, %v975
      %v977 = vpop.f32.mrf.mxu0
      %v978 = vadd.f32 0.0, %v977
      %979 = vmatmul.bf16.gmra.mxu0 %v964
      %v980 = vpop.f32.mrf.mxu0
      %v981 = vadd.f32 0.0, %v980
      %v982 = vpop.f32.mrf.mxu0
      %v983 = vadd.f32 0.0, %v982
      %984 = vdwg.mxu0
      %985 = vmatpush.bf16.msra.mxu0 0
      %986 = vmatpush.bf16.msra.mxu0 0
      %987 = vmatpush.bf16.msra.mxu0 0
      %988 = vmatpush.bf16.msra.mxu0 0
      %989 = vmatpush.bf16.msra.mxu0 0
      %990 = vmatpush.bf16.msra.mxu0 %v385
      %991 = vmatpush.bf16.msra.mxu0 %v351
      %992 = vmatpush.bf16.msra.mxu0 %v349
      %993 = vmatmul.bf16.gmra.mxu0 %v961
      %v994 = vpop.f32.mrf.mxu0
      %v995 = vadd.f32 0.0, %v994
      %v996 = vpop.f32.mrf.mxu0
      %v997 = vadd.f32 0.0, %v996
      %998 = vmatmul.bf16.gmra.mxu0 %v964
      %v999 = vpop.f32.mrf.mxu0
      %v1000 = vadd.f32 0.0, %v999
      %v1001 = vpop.f32.mrf.mxu0
      %v1002 = vadd.f32 0.0, %v1001
      %1003 = vdwg.mxu0
      %1004 = vrot.lane.b32.xlu0 %v976, 113
      %v1005 = vpop.permute.xlu0 %1004
      %1006 = vrot.lane.b32.xlu0 %v978, 113
      %v1007 = vpop.permute.xlu0 %1006
      %1008 = vrot.lane.b32.xlu0 %v981, 113
      %v1009 = vpop.permute.xlu0 %1008
      %1010 = vrot.lane.b32.xlu0 %v983, 113
      %v1011 = vpop.permute.xlu0 %1010
      %1012 = vrot.lane.b32.xlu0 %v995, 113
      %v1013 = vpop.permute.xlu0 %1012
      %1014 = vrot.lane.b32.xlu0 %v997, 113
      %v1015 = vpop.permute.xlu0 %1014
      %1016 = vrot.lane.b32.xlu0 %v1000, 113
      %v1017 = vpop.permute.xlu0 %1016
      %1018 = vrot.lane.b32.xlu0 %v1002, 113
      %v1019 = vpop.permute.xlu0 %1018
      %vm1020 = vcmp.lt.s32.totalorder %v442, 113
      %v1021 = vsel %vm1020, %v1005, %v1013
      %v1022 = vsel %vm1020, %v1007, %v1015
      %v1023 = vsel %vm1020, %v1009, %v1017
      %v1024 = vsel %vm1020, %v1011, %v1019
      %v1025 = vsel %vm1020, %v1013, %v1005
      %v1026 = vsel %vm1020, %v1015, %v1007
      %v1027 = vsel %vm1020, %v1017, %v1009
      %v1028 = vsel %vm1020, %v1019, %v1011
      %v1029 = vperm.slane %v326, 6
      %v1030 = vperm.slane %v327, 6
      %v1031 = vmul.f32 %v1021, %v1029
      %v1032 = vmul.f32 %v1025, %v1030
      %v1033 = vmul.f32 %v1022, %v1029
      %v1034 = vmul.f32 %v1026, %v1030
      %v1035 = vmul.f32 %v1023, %v1029
      %v1036 = vmul.f32 %v1027, %v1030
      %v1037 = vmul.f32 %v1024, %v1029
      %v1038 = vmul.f32 %v1028, %v1030
      %v1039 = vadd.f32 %v937, %v1031
      %v1040 = vadd.f32 %v938, %v1032
      %v1041 = vadd.f32 %v939, %v1033
      %v1042 = vadd.f32 %v940, %v1034
      %v1043 = vadd.f32 %v941, %v1035
      %v1044 = vadd.f32 %v942, %v1036
      %v1045 = vadd.f32 %v943, %v1037
      %v1046 = vadd.f32 %v944, %v1038
      %s1047 = scalar_lea.vmem %s3, 112
      %v1048 = vld [vmem:[%s1047] sm:$0xf]
      %v1049 = vld [vmem:[%s1047 + $0x4] sm:$0xf]
      %v1050 = vld [vmem:[%s1047 + $0x8] sm:$0xf]
      %v1051 = vld [vmem:[%s1047 + $0xc] sm:$0xf]
      %v1056 = vunpack.c.l.b16 %v1048
      %v1057 = vunpack.c.l.b16 %v1049
      %v1058 = vunpack.c.l.b16 %v1050
      %v1059 = vunpack.c.l.b16 %v1051
      %v1060 = vpack.c.b16 %v1057, %v1056
      %v1061 = vpack.c.b16 %v1059, %v1058
      %v1063 = vsel %vm373, %v1060, 0
      %v1066 = vsel %vm373, %v1061, 0
      %1068 = vmatpush.bf16.msra.mxu0 0
      %1069 = vmatpush.bf16.msra.mxu0 0
      %1070 = vmatpush.bf16.msra.mxu0 0
      %1071 = vmatpush.bf16.msra.mxu0 0
      %1072 = vmatpush.bf16.msra.mxu0 0
      %1073 = vmatpush.bf16.msra.mxu0 %v382
      %1074 = vmatpush.bf16.msra.mxu0 %v350
      %1075 = vmatpush.bf16.msra.mxu0 %v348
      %1076 = vmatmul.bf16.gmra.mxu0 %v1063
      %v1077 = vpop.f32.mrf.mxu0
      %v1078 = vadd.f32 0.0, %v1077
      %v1079 = vpop.f32.mrf.mxu0
      %v1080 = vadd.f32 0.0, %v1079
      %1081 = vmatmul.bf16.gmra.mxu0 %v1066
      %v1082 = vpop.f32.mrf.mxu0
      %v1083 = vadd.f32 0.0, %v1082
      %v1084 = vpop.f32.mrf.mxu0
      %v1085 = vadd.f32 0.0, %v1084
      %1086 = vdwg.mxu0
      %1087 = vmatpush.bf16.msra.mxu0 0
      %1088 = vmatpush.bf16.msra.mxu0 0
      %1089 = vmatpush.bf16.msra.mxu0 0
      %1090 = vmatpush.bf16.msra.mxu0 0
      %1091 = vmatpush.bf16.msra.mxu0 0
      %1092 = vmatpush.bf16.msra.mxu0 %v385
      %1093 = vmatpush.bf16.msra.mxu0 %v351
      %1094 = vmatpush.bf16.msra.mxu0 %v349
      %1095 = vmatmul.bf16.gmra.mxu0 %v1063
      %v1096 = vpop.f32.mrf.mxu0
      %v1097 = vadd.f32 0.0, %v1096
      %v1098 = vpop.f32.mrf.mxu0
      %v1099 = vadd.f32 0.0, %v1098
      %1100 = vmatmul.bf16.gmra.mxu0 %v1066
      %v1101 = vpop.f32.mrf.mxu0
      %v1102 = vadd.f32 0.0, %v1101
      %v1103 = vpop.f32.mrf.mxu0
      %v1104 = vadd.f32 0.0, %v1103
      %1105 = vdwg.mxu0
      %1106 = vrot.lane.b32.xlu0 %v1078, 112
      %v1107 = vpop.permute.xlu0 %1106
      %1108 = vrot.lane.b32.xlu0 %v1080, 112
      %v1109 = vpop.permute.xlu0 %1108
      %1110 = vrot.lane.b32.xlu0 %v1083, 112
      %v1111 = vpop.permute.xlu0 %1110
      %1112 = vrot.lane.b32.xlu0 %v1085, 112
      %v1113 = vpop.permute.xlu0 %1112
      %1114 = vrot.lane.b32.xlu0 %v1097, 112
      %v1115 = vpop.permute.xlu0 %1114
      %1116 = vrot.lane.b32.xlu0 %v1099, 112
      %v1117 = vpop.permute.xlu0 %1116
      %1118 = vrot.lane.b32.xlu0 %v1102, 112
      %v1119 = vpop.permute.xlu0 %1118
      %1120 = vrot.lane.b32.xlu0 %v1104, 112
      %v1121 = vpop.permute.xlu0 %1120
      %vm1122 = vcmp.lt.s32.totalorder %v442, 112
      %v1123 = vsel %vm1122, %v1107, %v1115
      %v1124 = vsel %vm1122, %v1109, %v1117
      %v1125 = vsel %vm1122, %v1111, %v1119
      %v1126 = vsel %vm1122, %v1113, %v1121
      %v1127 = vsel %vm1122, %v1115, %v1107
      %v1128 = vsel %vm1122, %v1117, %v1109
      %v1129 = vsel %vm1122, %v1119, %v1111
      %v1130 = vsel %vm1122, %v1121, %v1113
      %v1131 = vperm.slane %v326, 7
      %v1132 = vperm.slane %v327, 7
      %v1133 = vmul.f32 %v1123, %v1131
      %v1134 = vmul.f32 %v1127, %v1132
      %v1135 = vmul.f32 %v1124, %v1131
      %v1136 = vmul.f32 %v1128, %v1132
      %v1137 = vmul.f32 %v1125, %v1131
      %v1138 = vmul.f32 %v1129, %v1132
      %v1139 = vmul.f32 %v1126, %v1131
      %v1140 = vmul.f32 %v1130, %v1132
      %v1141 = vadd.f32 %v1039, %v1133
      %v1142 = vadd.f32 %v1040, %v1134
      %v1143 = vadd.f32 %v1041, %v1135
      %v1144 = vadd.f32 %v1042, %v1136
      %v1145 = vadd.f32 %v1043, %v1137
      %v1146 = vadd.f32 %v1044, %v1138
      %v1147 = vadd.f32 %v1045, %v1139
      %v1148 = vadd.f32 %v1046, %v1140
      %s1149 = scalar_lea.vmem %s3, 128
      %v1150 = vld [vmem:[%s1149] sm:$0xf]
      %v1151 = vld [vmem:[%s1149 + $0x4] sm:$0xf]
      %v1152 = vld [vmem:[%s1149 + $0x8] sm:$0xf]
      %v1153 = vld [vmem:[%s1149 + $0xc] sm:$0xf]
      %v1158 = vunpack.c.l.b16 %v1150
      %v1159 = vunpack.c.l.b16 %v1151
      %v1160 = vunpack.c.l.b16 %v1152
      %v1161 = vunpack.c.l.b16 %v1153
      %v1162 = vpack.c.b16 %v1159, %v1158
      %v1163 = vpack.c.b16 %v1161, %v1160
      %v1165 = vsel %vm373, %v1162, 0
      %v1168 = vsel %vm373, %v1163, 0
      %1170 = vmatpush.bf16.msra.mxu0 0
      %1171 = vmatpush.bf16.msra.mxu0 0
      %1172 = vmatpush.bf16.msra.mxu0 0
      %1173 = vmatpush.bf16.msra.mxu0 0
      %1174 = vmatpush.bf16.msra.mxu0 0
      %1175 = vmatpush.bf16.msra.mxu0 %v382
      %1176 = vmatpush.bf16.msra.mxu0 %v350
      %1177 = vmatpush.bf16.msra.mxu0 %v348
      %1178 = vmatmul.bf16.gmra.mxu0 %v1165
      %v1179 = vpop.f32.mrf.mxu0
      %v1180 = vadd.f32 0.0, %v1179
      %v1181 = vpop.f32.mrf.mxu0
      %v1182 = vadd.f32 0.0, %v1181
      %1183 = vmatmul.bf16.gmra.mxu0 %v1168
      %v1184 = vpop.f32.mrf.mxu0
      %v1185 = vadd.f32 0.0, %v1184
      %v1186 = vpop.f32.mrf.mxu0
      %v1187 = vadd.f32 0.0, %v1186
      %1188 = vdwg.mxu0
      %1189 = vmatpush.bf16.msra.mxu0 0
      %1190 = vmatpush.bf16.msra.mxu0 0
      %1191 = vmatpush.bf16.msra.mxu0 0
      %1192 = vmatpush.bf16.msra.mxu0 0
      %1193 = vmatpush.bf16.msra.mxu0 0
      %1194 = vmatpush.bf16.msra.mxu0 %v385
      %1195 = vmatpush.bf16.msra.mxu0 %v351
      %1196 = vmatpush.bf16.msra.mxu0 %v349
      %1197 = vmatmul.bf16.gmra.mxu0 %v1165
      %v1198 = vpop.f32.mrf.mxu0
      %v1199 = vadd.f32 0.0, %v1198
      %v1200 = vpop.f32.mrf.mxu0
      %v1201 = vadd.f32 0.0, %v1200
      %1202 = vmatmul.bf16.gmra.mxu0 %v1168
      %v1203 = vpop.f32.mrf.mxu0
      %v1204 = vadd.f32 0.0, %v1203
      %v1205 = vpop.f32.mrf.mxu0
      %v1206 = vadd.f32 0.0, %v1205
      %1207 = vdwg.mxu0
      %1208 = vrot.lane.b32.xlu0 %v1180, 111
      %v1209 = vpop.permute.xlu0 %1208
      %1210 = vrot.lane.b32.xlu0 %v1182, 111
      %v1211 = vpop.permute.xlu0 %1210
      %1212 = vrot.lane.b32.xlu0 %v1185, 111
      %v1213 = vpop.permute.xlu0 %1212
      %1214 = vrot.lane.b32.xlu0 %v1187, 111
      %v1215 = vpop.permute.xlu0 %1214
      %1216 = vrot.lane.b32.xlu0 %v1199, 111
      %v1217 = vpop.permute.xlu0 %1216
      %1218 = vrot.lane.b32.xlu0 %v1201, 111
      %v1219 = vpop.permute.xlu0 %1218
      %1220 = vrot.lane.b32.xlu0 %v1204, 111
      %v1221 = vpop.permute.xlu0 %1220
      %1222 = vrot.lane.b32.xlu0 %v1206, 111
      %v1223 = vpop.permute.xlu0 %1222
      %vm1224 = vcmp.lt.s32.totalorder %v442, 111
      %v1225 = vsel %vm1224, %v1209, %v1217
      %v1226 = vsel %vm1224, %v1211, %v1219
      %v1227 = vsel %vm1224, %v1213, %v1221
      %v1228 = vsel %vm1224, %v1215, %v1223
      %v1229 = vsel %vm1224, %v1217, %v1209
      %v1230 = vsel %vm1224, %v1219, %v1211
      %v1231 = vsel %vm1224, %v1221, %v1213
      %v1232 = vsel %vm1224, %v1223, %v1215
      %v1233 = vperm.slane %v328, 0
      %v1234 = vperm.slane %v329, 0
      %v1235 = vmul.f32 %v1225, %v1233
      %v1236 = vmul.f32 %v1229, %v1234
      %v1237 = vmul.f32 %v1226, %v1233
      %v1238 = vmul.f32 %v1230, %v1234
      %v1239 = vmul.f32 %v1227, %v1233
      %v1240 = vmul.f32 %v1231, %v1234
      %v1241 = vmul.f32 %v1228, %v1233
      %v1242 = vmul.f32 %v1232, %v1234
      %v1243 = vadd.f32 %v1141, %v1235
      %v1244 = vadd.f32 %v1142, %v1236
      %v1245 = vadd.f32 %v1143, %v1237
      %v1246 = vadd.f32 %v1144, %v1238
      %v1247 = vadd.f32 %v1145, %v1239
      %v1248 = vadd.f32 %v1146, %v1240
      %v1249 = vadd.f32 %v1147, %v1241
      %v1250 = vadd.f32 %v1148, %v1242
      %v1251 = vld [vmem:[%s4] sm:$0xff]
      %v1252 = vld [vmem:[%s4 + $0x8] sm:$0xff]
      %v1253 = vld [vmem:[%s4 + $0x10] sm:$0xff]
      %v1254 = vld [vmem:[%s4 + $0x18] sm:$0xff]
      %1256 = vset.pattern.permute.xlu0 0
      %1257 = vperm.xlu0 %1256, %v1251
      %v1258 = vpop.permute.xlu0 %1257
      %1261 = vset.pattern.permute.xlu0 0
      %1262 = vperm.xlu0 %1261, %v1252
      %v1263 = vpop.permute.xlu0 %1262
      %1266 = vset.pattern.permute.xlu0 0
      %1267 = vperm.xlu0 %1266, %v1253
      %v1268 = vpop.permute.xlu0 %1267
      %1271 = vset.pattern.permute.xlu0 0
      %1272 = vperm.xlu0 %1271, %v1254
      %v1273 = vpop.permute.xlu0 %1272
      %v1275 = vadd.f32 %v1243, %v1258
      %v1276 = vadd.f32 %v1244, %v1258
      %v1277 = vadd.f32 %v1245, %v1263
      %v1278 = vadd.f32 %v1246, %v1263
      %v1279 = vadd.f32 %v1247, %v1268
      %v1280 = vadd.f32 %v1248, %v1268
      %v1281 = vadd.f32 %v1249, %v1273
      %v1282 = vadd.f32 %v1250, %v1273
      %v1283 = vmax.f32 %v1275, 0.0
      %v1284 = vmax.f32 %v1276, 0.0
      %v1285 = vmax.f32 %v1277, 0.0
      %v1286 = vmax.f32 %v1278, 0.0
      %v1287 = vmax.f32 %v1279, 0.0
      %v1288 = vmax.f32 %v1280, 0.0
      %v1289 = vmax.f32 %v1281, 0.0
      %v1290 = vmax.f32 %v1282, 0.0
      %v1291 = vadd.f32 %v295, %v1283
      %v1292 = vadd.f32 %v296, %v1284
      %v1293 = vadd.f32 %v297, %v1285
      %v1294 = vadd.f32 %v298, %v1286
      %v1295 = vadd.f32 %v299, %v1287
      %v1296 = vadd.f32 %v300, %v1288
      %v1297 = vadd.f32 %v301, %v1289
      %v1298 = vadd.f32 %v302, %v1290
      %v1299 = vpack.c.bf16 %v1292, %v1291
      %v1300 = vpack.c.bf16 %v1294, %v1293
      %v1301 = vpack.c.bf16 %v1296, %v1295
      %v1302 = vpack.c.bf16 %v1298, %v1297
      %v1303 = vld [vmem:[%s5] sm:$0xf]
      %v1304 = vld [vmem:[%s5 + $0x4] sm:$0x1]
      %v1307 = vunpack.c.l.b16 %v1303
      %v1308 = vunpack.c.l.b16 %v1304
      %v1309 = vpack.c.b16 %v1308, %v1307
      %v1314 = vunpack.c.l.b16 %v1299
      %v1315 = vunpack.c.h.b16 %v1299
      %v1316 = vunpack.c.l.b16 %v1300
      %v1317 = vunpack.c.h.b16 %v1300
      %v1318 = vunpack.c.l.b16 %v1301
      %v1319 = vunpack.c.h.b16 %v1301
      %v1320 = vunpack.c.l.b16 %v1302
      %v1321 = vunpack.c.h.b16 %v1302
      %v1322 = vpack.c.b16 %v1316, %v1314
      %v1323 = vpack.c.b16 %v1317, %v1315
      %v1324 = vpack.c.b16 %v1320, %v1318
      %v1325 = vpack.c.b16 %v1321, %v1319
      %vm1330 = vcmask 261120
      %v1332 = vsel %vm1330, %v1309, 0
      %1334 = vmatpush.bf16.msra.mxu0 0
      %1335 = vmatpush.bf16.msra.mxu0 0
      %1336 = vmatpush.bf16.msra.mxu0 0
      %1337 = vmatpush.bf16.msra.mxu0 0
      %1338 = vmatpush.bf16.msra.mxu0 0
      %1339 = vmatpush.bf16.msra.mxu0 0
      %1340 = vmatpush.bf16.msra.mxu0 %v1324
      %1341 = vmatpush.bf16.msra.mxu0 %v1322
      %1342 = vmatmul.bf16.gmra.mxu0 %v1332
      %v1343 = vpop.f32.mrf.mxu0
      %v1344 = vadd.f32 0.0, %v1343
      %v1345 = vpop.f32.mrf.mxu0
      %v1346 = vadd.f32 0.0, %v1345
      %1347 = vdwg.mxu0
      %1348 = vmatpush.bf16.msra.mxu0 0
      %1349 = vmatpush.bf16.msra.mxu0 0
      %1350 = vmatpush.bf16.msra.mxu0 0
      %1351 = vmatpush.bf16.msra.mxu0 0
      %1352 = vmatpush.bf16.msra.mxu0 0
      %1353 = vmatpush.bf16.msra.mxu0 0
      %1354 = vmatpush.bf16.msra.mxu0 %v1325
      %1355 = vmatpush.bf16.msra.mxu0 %v1323
      %1356 = vmatmul.bf16.gmra.mxu0 %v1332
      %v1357 = vpop.f32.mrf.mxu0
      %v1358 = vadd.f32 0.0, %v1357
      %v1359 = vpop.f32.mrf.mxu0
      %v1360 = vadd.f32 0.0, %v1359
      %1361 = vdwg.mxu0
      %1362 = vrot.lane.b32.xlu0 %v1344, 17
      %v1363 = vpop.permute.xlu0 %1362
      %1364 = vrot.lane.b32.xlu0 %v1358, 17
      %v1365 = vpop.permute.xlu0 %1364
      %v1366 = vsel %vm443, %v1363, %v1365
      %v1367 = vsel %vm443, %v1365, %v1363
      %v1368 = vmul.f32 %v1367, %v326
      %v1369 = vmul.f32 %v1366, %v327
      %v1370 = vadd.f32 %v1368, 0.0
      %v1371 = vadd.f32 %v1369, 0.0
      %v1374 = vrot.slane %v1344, 1
      %v1375 = vrot.slane %v1358, 1
      %1378 = vrot.lane.b32.xlu0 %v1374, 16
      %v1379 = vpop.permute.xlu0 %1378
      %1380 = vrot.lane.b32.xlu0 %v1375, 16
      %v1381 = vpop.permute.xlu0 %1380
      %v1382 = vsel %vm545, %v1379, %v1381
      %v1383 = vsel %vm545, %v1381, %v1379
      %v1386 = vrot.slane %v326, 1
      %v1387 = vrot.slane %v327, 1
      %v1390 = vmul.f32 %v1383, %v1386
      %v1391 = vmul.f32 %v1382, %v1387
      %v1392 = vadd.f32 %v1370, %v1390
      %v1393 = vadd.f32 %v1371, %v1391
      %v1394 = vrot.slane %v1344, 2
      %v1395 = vrot.slane %v1358, 2
      %1398 = vrot.lane.b32.xlu0 %v1394, 15
      %v1399 = vpop.permute.xlu0 %1398
      %1400 = vrot.lane.b32.xlu0 %v1395, 15
      %v1401 = vpop.permute.xlu0 %1400
      %v1402 = vsel %vm647, %v1399, %v1401
      %v1403 = vsel %vm647, %v1401, %v1399
      %v1404 = vrot.slane %v326, 2
      %v1405 = vrot.slane %v327, 2
      %v1408 = vmul.f32 %v1403, %v1404
      %v1409 = vmul.f32 %v1402, %v1405
      %v1410 = vadd.f32 %v1392, %v1408
      %v1411 = vadd.f32 %v1393, %v1409
      %v1412 = vrot.slane %v1344, 3
      %v1413 = vrot.slane %v1358, 3
      %1416 = vrot.lane.b32.xlu0 %v1412, 1
      %v1417 = vpop.permute.xlu0 %1416
      %1418 = vrot.lane.b32.xlu0 %v1413, 1
      %v1419 = vpop.permute.xlu0 %1418
      %v1420 = vsel %vm749, %v1417, %v1419
      %v1421 = vsel %vm749, %v1419, %v1417
      %v1422 = vrot.slane %v326, 3
      %v1423 = vrot.slane %v327, 3
      %v1426 = vmul.f32 %v1421, %v1422
      %v1427 = vmul.f32 %v1420, %v1423
      %v1428 = vadd.f32 %v1410, %v1426
      %v1429 = vadd.f32 %v1411, %v1427
      %v1430 = vrot.slane %v1344, 4
      %v1431 = vrot.slane %v1358, 4
      %v1434 = vadd.f32 %v1428, %v1430
      %v1435 = vadd.f32 %v1429, %v1431
      %v1436 = vrot.slane %v1344, 5
      %v1437 = vrot.slane %v1358, 5
      %1440 = vrot.lane.b32.xlu0 %v1436, 127
      %v1441 = vpop.permute.xlu0 %1440
      %1442 = vrot.lane.b32.xlu0 %v1437, 127
      %v1443 = vpop.permute.xlu0 %1442
      %v1444 = vsel %vm918, %v1441, %v1443
      %v1445 = vsel %vm918, %v1443, %v1441
      %v1446 = vrot.slane %v326, 5
      %v1447 = vrot.slane %v327, 5
      %v1450 = vmul.f32 %v1444, %v1446
      %v1451 = vmul.f32 %v1445, %v1447
      %v1452 = vadd.f32 %v1434, %v1450
      %v1453 = vadd.f32 %v1435, %v1451
      %v1454 = vrot.slane %v1344, 6
      %v1455 = vrot.slane %v1358, 6
      %1458 = vrot.lane.b32.xlu0 %v1454, 113
      %v1459 = vpop.permute.xlu0 %1458
      %1460 = vrot.lane.b32.xlu0 %v1455, 113
      %v1461 = vpop.permute.xlu0 %1460
      %v1462 = vsel %vm1020, %v1459, %v1461
      %v1463 = vsel %vm1020, %v1461, %v1459
      %v1464 = vrot.slane %v326, 6
      %v1465 = vrot.slane %v327, 6
      %v1468 = vmul.f32 %v1462, %v1464
      %v1469 = vmul.f32 %v1463, %v1465
      %v1470 = vadd.f32 %v1452, %v1468
      %v1471 = vadd.f32 %v1453, %v1469
      %v1472 = vrot.slane %v1344, 7
      %v1473 = vrot.slane %v1358, 7
      %1476 = vrot.lane.b32.xlu0 %v1472, 112
      %v1477 = vpop.permute.xlu0 %1476
      %1478 = vrot.lane.b32.xlu0 %v1473, 112
      %v1479 = vpop.permute.xlu0 %1478
      %v1480 = vsel %vm1122, %v1477, %v1479
      %v1481 = vsel %vm1122, %v1479, %v1477
      %v1482 = vrot.slane %v326, 7
      %v1483 = vrot.slane %v327, 7
      %v1486 = vmul.f32 %v1480, %v1482
      %v1487 = vmul.f32 %v1481, %v1483
      %v1488 = vadd.f32 %v1470, %v1486
      %v1489 = vadd.f32 %v1471, %v1487
      %1490 = vrot.lane.b32.xlu0 %v1346, 111
      %v1491 = vpop.permute.xlu0 %1490
      %1492 = vrot.lane.b32.xlu0 %v1360, 111
      %v1493 = vpop.permute.xlu0 %1492
      %v1494 = vsel %vm1224, %v1491, %v1493
      %v1495 = vsel %vm1224, %v1493, %v1491
      %v1496 = vmul.f32 %v1494, %v328
      %v1497 = vmul.f32 %v1495, %v329
      %v1498 = vadd.f32 %v1488, %v1496
      %v1499 = vadd.f32 %v1489, %v1497
      %v1502 = vrot.slane %v1499, 7
      %vm1503 = vcmask 1040384
      %v1504 = vsel %vm1503, %v1498, %v1502
      %v1506 = vadd.f32 %v325, %v1504
      %v1507 = vld [vmem:[%s6] sm:$0x1]
      %1509 = vset.pattern.permute.xlu0 0
      %1510 = vperm.xlu0 %1509, %v1507
      %v1511 = vpop.permute.xlu0 %1510
      %v1513 = vperm.slane %v1511, 0
      %v1514 = vadd.f32 %v1506, %v1513
      %v1516 = vperm.slane %v1514, 0
      %v1517 = vperm.slane %v1514, 1
      %v1520 = vpack.c.bf16 %v1517, %v1516
      %v1522 = vperm.slane %v1520, 0
      %v1523 = vperm.slane %v1520, 4
      %s1524 = scalar_lea.vmem %s3, 144
      %v1525 = vld [vmem:[%s1524] sm:$0xf]
      %v1526 = vld [vmem:[%s1524 + $0x4] sm:$0xf]
      %v1527 = vld [vmem:[%s1524 + $0x8] sm:$0xf]
      %v1528 = vld [vmem:[%s1524 + $0xc] sm:$0xf]
      %v1533 = vunpack.c.l.b16 %v1525
      %v1534 = vunpack.c.l.b16 %v1526
      %v1535 = vunpack.c.l.b16 %v1527
      %v1536 = vunpack.c.l.b16 %v1528
      %v1537 = vpack.c.b16 %v1534, %v1533
      %v1538 = vpack.c.b16 %v1536, %v1535
      %v1540 = vsel %vm373, %v1537, 0
      %v1543 = vsel %vm373, %v1538, 0
      %v1546 = vsel %vm380, %v1522, 0
      %v1549 = vsel %vm380, %v1523, 0
      %1551 = vmatpush.bf16.msra.mxu0 0
      %1552 = vmatpush.bf16.msra.mxu0 0
      %1553 = vmatpush.bf16.msra.mxu0 0
      %1554 = vmatpush.bf16.msra.mxu0 0
      %1555 = vmatpush.bf16.msra.mxu0 0
      %1556 = vmatpush.bf16.msra.mxu0 %v1546
      %1557 = vmatpush.bf16.msra.mxu0 %v1324
      %1558 = vmatpush.bf16.msra.mxu0 %v1322
      %1559 = vmatmul.bf16.gmra.mxu0 %v1540
      %v1560 = vpop.f32.mrf.mxu0
      %v1561 = vadd.f32 0.0, %v1560
      %v1562 = vpop.f32.mrf.mxu0
      %v1563 = vadd.f32 0.0, %v1562
      %1564 = vmatmul.bf16.gmra.mxu0 %v1543
      %v1565 = vpop.f32.mrf.mxu0
      %v1566 = vadd.f32 0.0, %v1565
      %v1567 = vpop.f32.mrf.mxu0
      %v1568 = vadd.f32 0.0, %v1567
      %1569 = vdwg.mxu0
      %1570 = vmatpush.bf16.msra.mxu0 0
      %1571 = vmatpush.bf16.msra.mxu0 0
      %1572 = vmatpush.bf16.msra.mxu0 0
      %1573 = vmatpush.bf16.msra.mxu0 0
      %1574 = vmatpush.bf16.msra.mxu0 0
      %1575 = vmatpush.bf16.msra.mxu0 %v1549
      %1576 = vmatpush.bf16.msra.mxu0 %v1325
      %1577 = vmatpush.bf16.msra.mxu0 %v1323
      %1578 = vmatmul.bf16.gmra.mxu0 %v1540
      %v1579 = vpop.f32.mrf.mxu0
      %v1580 = vadd.f32 0.0, %v1579
      %v1581 = vpop.f32.mrf.mxu0
      %v1582 = vadd.f32 0.0, %v1581
      %1583 = vmatmul.bf16.gmra.mxu0 %v1543
      %v1584 = vpop.f32.mrf.mxu0
      %v1585 = vadd.f32 0.0, %v1584
      %v1586 = vpop.f32.mrf.mxu0
      %v1587 = vadd.f32 0.0, %v1586
      %1588 = vdwg.mxu0
      %1589 = vrot.lane.b32.xlu0 %v1561, 17
      %v1590 = vpop.permute.xlu0 %1589
      %1591 = vrot.lane.b32.xlu0 %v1563, 17
      %v1592 = vpop.permute.xlu0 %1591
      %1593 = vrot.lane.b32.xlu0 %v1566, 17
      %v1594 = vpop.permute.xlu0 %1593
      %1595 = vrot.lane.b32.xlu0 %v1568, 17
      %v1596 = vpop.permute.xlu0 %1595
      %1597 = vrot.lane.b32.xlu0 %v1580, 17
      %v1598 = vpop.permute.xlu0 %1597
      %1599 = vrot.lane.b32.xlu0 %v1582, 17
      %v1600 = vpop.permute.xlu0 %1599
      %1601 = vrot.lane.b32.xlu0 %v1585, 17
      %v1602 = vpop.permute.xlu0 %1601
      %1603 = vrot.lane.b32.xlu0 %v1587, 17
      %v1604 = vpop.permute.xlu0 %1603
      %v1605 = vsel %vm443, %v1590, %v1598
      %v1606 = vsel %vm443, %v1592, %v1600
      %v1607 = vsel %vm443, %v1594, %v1602
      %v1608 = vsel %vm443, %v1596, %v1604
      %v1609 = vsel %vm443, %v1598, %v1590
      %v1610 = vsel %vm443, %v1600, %v1592
      %v1611 = vsel %vm443, %v1602, %v1594
      %v1612 = vsel %vm443, %v1604, %v1596
      %v1613 = vmul.f32 %v1609, %v452
      %v1614 = vmul.f32 %v1605, %v453
      %v1615 = vmul.f32 %v1610, %v452
      %v1616 = vmul.f32 %v1606, %v453
      %v1617 = vmul.f32 %v1611, %v452
      %v1618 = vmul.f32 %v1607, %v453
      %v1619 = vmul.f32 %v1612, %v452
      %v1620 = vmul.f32 %v1608, %v453
      %v1621 = vadd.f32 %v1613, 0.0
      %v1622 = vadd.f32 %v1614, 0.0
      %v1623 = vadd.f32 %v1615, 0.0
      %v1624 = vadd.f32 %v1616, 0.0
      %v1625 = vadd.f32 %v1617, 0.0
      %v1626 = vadd.f32 %v1618, 0.0
      %v1627 = vadd.f32 %v1619, 0.0
      %v1628 = vadd.f32 %v1620, 0.0
      %s1629 = scalar_lea.vmem %s3, 160
      %v1630 = vld [vmem:[%s1629] sm:$0xf]
      %v1631 = vld [vmem:[%s1629 + $0x4] sm:$0xf]
      %v1632 = vld [vmem:[%s1629 + $0x8] sm:$0xf]
      %v1633 = vld [vmem:[%s1629 + $0xc] sm:$0xf]
      %v1638 = vunpack.c.l.b16 %v1630
      %v1639 = vunpack.c.l.b16 %v1631
      %v1640 = vunpack.c.l.b16 %v1632
      %v1641 = vunpack.c.l.b16 %v1633
      %v1642 = vpack.c.b16 %v1639, %v1638
      %v1643 = vpack.c.b16 %v1641, %v1640
      %v1645 = vsel %vm373, %v1642, 0
      %v1648 = vsel %vm373, %v1643, 0
      %1650 = vmatpush.bf16.msra.mxu0 0
      %1651 = vmatpush.bf16.msra.mxu0 0
      %1652 = vmatpush.bf16.msra.mxu0 0
      %1653 = vmatpush.bf16.msra.mxu0 0
      %1654 = vmatpush.bf16.msra.mxu0 0
      %1655 = vmatpush.bf16.msra.mxu0 %v1546
      %1656 = vmatpush.bf16.msra.mxu0 %v1324
      %1657 = vmatpush.bf16.msra.mxu0 %v1322
      %1658 = vmatmul.bf16.gmra.mxu0 %v1645
      %v1659 = vpop.f32.mrf.mxu0
      %v1660 = vadd.f32 0.0, %v1659
      %v1661 = vpop.f32.mrf.mxu0
      %v1662 = vadd.f32 0.0, %v1661
      %1663 = vmatmul.bf16.gmra.mxu0 %v1648
      %v1664 = vpop.f32.mrf.mxu0
      %v1665 = vadd.f32 0.0, %v1664
      %v1666 = vpop.f32.mrf.mxu0
      %v1667 = vadd.f32 0.0, %v1666
      %1668 = vdwg.mxu0
      %1669 = vmatpush.bf16.msra.mxu0 0
      %1670 = vmatpush.bf16.msra.mxu0 0
      %1671 = vmatpush.bf16.msra.mxu0 0
      %1672 = vmatpush.bf16.msra.mxu0 0
      %1673 = vmatpush.bf16.msra.mxu0 0
      %1674 = vmatpush.bf16.msra.mxu0 %v1549
      %1675 = vmatpush.bf16.msra.mxu0 %v1325
      %1676 = vmatpush.bf16.msra.mxu0 %v1323
      %1677 = vmatmul.bf16.gmra.mxu0 %v1645
      %v1678 = vpop.f32.mrf.mxu0
      %v1679 = vadd.f32 0.0, %v1678
      %v1680 = vpop.f32.mrf.mxu0
      %v1681 = vadd.f32 0.0, %v1680
      %1682 = vmatmul.bf16.gmra.mxu0 %v1648
      %v1683 = vpop.f32.mrf.mxu0
      %v1684 = vadd.f32 0.0, %v1683
      %v1685 = vpop.f32.mrf.mxu0
      %v1686 = vadd.f32 0.0, %v1685
      %1687 = vdwg.mxu0
      %1688 = vrot.lane.b32.xlu0 %v1660, 16
      %v1689 = vpop.permute.xlu0 %1688
      %1690 = vrot.lane.b32.xlu0 %v1662, 16
      %v1691 = vpop.permute.xlu0 %1690
      %1692 = vrot.lane.b32.xlu0 %v1665, 16
      %v1693 = vpop.permute.xlu0 %1692
      %1694 = vrot.lane.b32.xlu0 %v1667, 16
      %v1695 = vpop.permute.xlu0 %1694
      %1696 = vrot.lane.b32.xlu0 %v1679, 16
      %v1697 = vpop.permute.xlu0 %1696
      %1698 = vrot.lane.b32.xlu0 %v1681, 16
      %v1699 = vpop.permute.xlu0 %1698
      %1700 = vrot.lane.b32.xlu0 %v1684, 16
      %v1701 = vpop.permute.xlu0 %1700
      %1702 = vrot.lane.b32.xlu0 %v1686, 16
      %v1703 = vpop.permute.xlu0 %1702
      %v1704 = vsel %vm545, %v1689, %v1697
      %v1705 = vsel %vm545, %v1691, %v1699
      %v1706 = vsel %vm545, %v1693, %v1701
      %v1707 = vsel %vm545, %v1695, %v1703
      %v1708 = vsel %vm545, %v1697, %v1689
      %v1709 = vsel %vm545, %v1699, %v1691
      %v1710 = vsel %vm545, %v1701, %v1693
      %v1711 = vsel %vm545, %v1703, %v1695
      %v1712 = vmul.f32 %v1708, %v554
      %v1713 = vmul.f32 %v1704, %v555
      %v1714 = vmul.f32 %v1709, %v554
      %v1715 = vmul.f32 %v1705, %v555
      %v1716 = vmul.f32 %v1710, %v554
      %v1717 = vmul.f32 %v1706, %v555
      %v1718 = vmul.f32 %v1711, %v554
      %v1719 = vmul.f32 %v1707, %v555
      %v1720 = vadd.f32 %v1621, %v1712
      %v1721 = vadd.f32 %v1622, %v1713
      %v1722 = vadd.f32 %v1623, %v1714
      %v1723 = vadd.f32 %v1624, %v1715
      %v1724 = vadd.f32 %v1625, %v1716
      %v1725 = vadd.f32 %v1626, %v1717
      %v1726 = vadd.f32 %v1627, %v1718
      %v1727 = vadd.f32 %v1628, %v1719
      %s1728 = scalar_lea.vmem %s3, 176
      %v1729 = vld [vmem:[%s1728] sm:$0xf]
      %v1730 = vld [vmem:[%s1728 + $0x4] sm:$0xf]
      %v1731 = vld [vmem:[%s1728 + $0x8] sm:$0xf]
      %v1732 = vld [vmem:[%s1728 + $0xc] sm:$0xf]
      %v1737 = vunpack.c.l.b16 %v1729
      %v1738 = vunpack.c.l.b16 %v1730
      %v1739 = vunpack.c.l.b16 %v1731
      %v1740 = vunpack.c.l.b16 %v1732
      %v1741 = vpack.c.b16 %v1738, %v1737
      %v1742 = vpack.c.b16 %v1740, %v1739
      %v1744 = vsel %vm373, %v1741, 0
      %v1747 = vsel %vm373, %v1742, 0
      %1749 = vmatpush.bf16.msra.mxu0 0
      %1750 = vmatpush.bf16.msra.mxu0 0
      %1751 = vmatpush.bf16.msra.mxu0 0
      %1752 = vmatpush.bf16.msra.mxu0 0
      %1753 = vmatpush.bf16.msra.mxu0 0
      %1754 = vmatpush.bf16.msra.mxu0 %v1546
      %1755 = vmatpush.bf16.msra.mxu0 %v1324
      %1756 = vmatpush.bf16.msra.mxu0 %v1322
      %1757 = vmatmul.bf16.gmra.mxu0 %v1744
      %v1758 = vpop.f32.mrf.mxu0
      %v1759 = vadd.f32 0.0, %v1758
      %v1760 = vpop.f32.mrf.mxu0
      %v1761 = vadd.f32 0.0, %v1760
      %1762 = vmatmul.bf16.gmra.mxu0 %v1747
      %v1763 = vpop.f32.mrf.mxu0
      %v1764 = vadd.f32 0.0, %v1763
      %v1765 = vpop.f32.mrf.mxu0
      %v1766 = vadd.f32 0.0, %v1765
      %1767 = vdwg.mxu0
      %1768 = vmatpush.bf16.msra.mxu0 0
      %1769 = vmatpush.bf16.msra.mxu0 0
      %1770 = vmatpush.bf16.msra.mxu0 0
      %1771 = vmatpush.bf16.msra.mxu0 0
      %1772 = vmatpush.bf16.msra.mxu0 0
      %1773 = vmatpush.bf16.msra.mxu0 %v1549
      %1774 = vmatpush.bf16.msra.mxu0 %v1325
      %1775 = vmatpush.bf16.msra.mxu0 %v1323
      %1776 = vmatmul.bf16.gmra.mxu0 %v1744
      %v1777 = vpop.f32.mrf.mxu0
      %v1778 = vadd.f32 0.0, %v1777
      %v1779 = vpop.f32.mrf.mxu0
      %v1780 = vadd.f32 0.0, %v1779
      %1781 = vmatmul.bf16.gmra.mxu0 %v1747
      %v1782 = vpop.f32.mrf.mxu0
      %v1783 = vadd.f32 0.0, %v1782
      %v1784 = vpop.f32.mrf.mxu0
      %v1785 = vadd.f32 0.0, %v1784
      %1786 = vdwg.mxu0
      %1787 = vrot.lane.b32.xlu0 %v1759, 15
      %v1788 = vpop.permute.xlu0 %1787
      %1789 = vrot.lane.b32.xlu0 %v1761, 15
      %v1790 = vpop.permute.xlu0 %1789
      %1791 = vrot.lane.b32.xlu0 %v1764, 15
      %v1792 = vpop.permute.xlu0 %1791
      %1793 = vrot.lane.b32.xlu0 %v1766, 15
      %v1794 = vpop.permute.xlu0 %1793
      %1795 = vrot.lane.b32.xlu0 %v1778, 15
      %v1796 = vpop.permute.xlu0 %1795
      %1797 = vrot.lane.b32.xlu0 %v1780, 15
      %v1798 = vpop.permute.xlu0 %1797
      %1799 = vrot.lane.b32.xlu0 %v1783, 15
      %v1800 = vpop.permute.xlu0 %1799
      %1801 = vrot.lane.b32.xlu0 %v1785, 15
      %v1802 = vpop.permute.xlu0 %1801
      %v1803 = vsel %vm647, %v1788, %v1796
      %v1804 = vsel %vm647, %v1790, %v1798
      %v1805 = vsel %vm647, %v1792, %v1800
      %v1806 = vsel %vm647, %v1794, %v1802
      %v1807 = vsel %vm647, %v1796, %v1788
      %v1808 = vsel %vm647, %v1798, %v1790
      %v1809 = vsel %vm647, %v1800, %v1792
      %v1810 = vsel %vm647, %v1802, %v1794
      %v1811 = vmul.f32 %v1807, %v656
      %v1812 = vmul.f32 %v1803, %v657
      %v1813 = vmul.f32 %v1808, %v656
      %v1814 = vmul.f32 %v1804, %v657
      %v1815 = vmul.f32 %v1809, %v656
      %v1816 = vmul.f32 %v1805, %v657
      %v1817 = vmul.f32 %v1810, %v656
      %v1818 = vmul.f32 %v1806, %v657
      %v1819 = vadd.f32 %v1720, %v1811
      %v1820 = vadd.f32 %v1721, %v1812
      %v1821 = vadd.f32 %v1722, %v1813
      %v1822 = vadd.f32 %v1723, %v1814
      %v1823 = vadd.f32 %v1724, %v1815
      %v1824 = vadd.f32 %v1725, %v1816
      %v1825 = vadd.f32 %v1726, %v1817
      %v1826 = vadd.f32 %v1727, %v1818
      %s1827 = scalar_lea.vmem %s3, 192
      %v1828 = vld [vmem:[%s1827] sm:$0xf]
      %v1829 = vld [vmem:[%s1827 + $0x4] sm:$0xf]
      %v1830 = vld [vmem:[%s1827 + $0x8] sm:$0xf]
      %v1831 = vld [vmem:[%s1827 + $0xc] sm:$0xf]
      %v1836 = vunpack.c.l.b16 %v1828
      %v1837 = vunpack.c.l.b16 %v1829
      %v1838 = vunpack.c.l.b16 %v1830
      %v1839 = vunpack.c.l.b16 %v1831
      %v1840 = vpack.c.b16 %v1837, %v1836
      %v1841 = vpack.c.b16 %v1839, %v1838
      %v1843 = vsel %vm373, %v1840, 0
      %v1846 = vsel %vm373, %v1841, 0
      %1848 = vmatpush.bf16.msra.mxu0 0
      %1849 = vmatpush.bf16.msra.mxu0 0
      %1850 = vmatpush.bf16.msra.mxu0 0
      %1851 = vmatpush.bf16.msra.mxu0 0
      %1852 = vmatpush.bf16.msra.mxu0 0
      %1853 = vmatpush.bf16.msra.mxu0 %v1546
      %1854 = vmatpush.bf16.msra.mxu0 %v1324
      %1855 = vmatpush.bf16.msra.mxu0 %v1322
      %1856 = vmatmul.bf16.gmra.mxu0 %v1843
      %v1857 = vpop.f32.mrf.mxu0
      %v1858 = vadd.f32 0.0, %v1857
      %v1859 = vpop.f32.mrf.mxu0
      %v1860 = vadd.f32 0.0, %v1859
      %1861 = vmatmul.bf16.gmra.mxu0 %v1846
      %v1862 = vpop.f32.mrf.mxu0
      %v1863 = vadd.f32 0.0, %v1862
      %v1864 = vpop.f32.mrf.mxu0
      %v1865 = vadd.f32 0.0, %v1864
      %1866 = vdwg.mxu0
      %1867 = vmatpush.bf16.msra.mxu0 0
      %1868 = vmatpush.bf16.msra.mxu0 0
      %1869 = vmatpush.bf16.msra.mxu0 0
      %1870 = vmatpush.bf16.msra.mxu0 0
      %1871 = vmatpush.bf16.msra.mxu0 0
      %1872 = vmatpush.bf16.msra.mxu0 %v1549
      %1873 = vmatpush.bf16.msra.mxu0 %v1325
      %1874 = vmatpush.bf16.msra.mxu0 %v1323
      %1875 = vmatmul.bf16.gmra.mxu0 %v1843
      %v1876 = vpop.f32.mrf.mxu0
      %v1877 = vadd.f32 0.0, %v1876
      %v1878 = vpop.f32.mrf.mxu0
      %v1879 = vadd.f32 0.0, %v1878
      %1880 = vmatmul.bf16.gmra.mxu0 %v1846
      %v1881 = vpop.f32.mrf.mxu0
      %v1882 = vadd.f32 0.0, %v1881
      %v1883 = vpop.f32.mrf.mxu0
      %v1884 = vadd.f32 0.0, %v1883
      %1885 = vdwg.mxu0
      %1886 = vrot.lane.b32.xlu0 %v1858, 1
      %v1887 = vpop.permute.xlu0 %1886
      %1888 = vrot.lane.b32.xlu0 %v1860, 1
      %v1889 = vpop.permute.xlu0 %1888
      %1890 = vrot.lane.b32.xlu0 %v1863, 1
      %v1891 = vpop.permute.xlu0 %1890
      %1892 = vrot.lane.b32.xlu0 %v1865, 1
      %v1893 = vpop.permute.xlu0 %1892
      %1894 = vrot.lane.b32.xlu0 %v1877, 1
      %v1895 = vpop.permute.xlu0 %1894
      %1896 = vrot.lane.b32.xlu0 %v1879, 1
      %v1897 = vpop.permute.xlu0 %1896
      %1898 = vrot.lane.b32.xlu0 %v1882, 1
      %v1899 = vpop.permute.xlu0 %1898
      %1900 = vrot.lane.b32.xlu0 %v1884, 1
      %v1901 = vpop.permute.xlu0 %1900
      %v1902 = vsel %vm749, %v1887, %v1895
      %v1903 = vsel %vm749, %v1889, %v1897
      %v1904 = vsel %vm749, %v1891, %v1899
      %v1905 = vsel %vm749, %v1893, %v1901
      %v1906 = vsel %vm749, %v1895, %v1887
      %v1907 = vsel %vm749, %v1897, %v1889
      %v1908 = vsel %vm749, %v1899, %v1891
      %v1909 = vsel %vm749, %v1901, %v1893
      %v1910 = vmul.f32 %v1906, %v758
      %v1911 = vmul.f32 %v1902, %v759
      %v1912 = vmul.f32 %v1907, %v758
      %v1913 = vmul.f32 %v1903, %v759
      %v1914 = vmul.f32 %v1908, %v758
      %v1915 = vmul.f32 %v1904, %v759
      %v1916 = vmul.f32 %v1909, %v758
      %v1917 = vmul.f32 %v1905, %v759
      %v1918 = vadd.f32 %v1819, %v1910
      %v1919 = vadd.f32 %v1820, %v1911
      %v1920 = vadd.f32 %v1821, %v1912
      %v1921 = vadd.f32 %v1822, %v1913
      %v1922 = vadd.f32 %v1823, %v1914
      %v1923 = vadd.f32 %v1824, %v1915
      %v1924 = vadd.f32 %v1825, %v1916
      %v1925 = vadd.f32 %v1826, %v1917
      %s1926 = scalar_lea.vmem %s3, 208
      %v1927 = vld [vmem:[%s1926] sm:$0xf]
      %v1928 = vld [vmem:[%s1926 + $0x4] sm:$0xf]
      %v1929 = vld [vmem:[%s1926 + $0x8] sm:$0xf]
      %v1930 = vld [vmem:[%s1926 + $0xc] sm:$0xf]
      %v1935 = vunpack.c.l.b16 %v1927
      %v1936 = vunpack.c.l.b16 %v1928
      %v1937 = vunpack.c.l.b16 %v1929
      %v1938 = vunpack.c.l.b16 %v1930
      %v1939 = vpack.c.b16 %v1936, %v1935
      %v1940 = vpack.c.b16 %v1938, %v1937
      %v1942 = vsel %vm373, %v1939, 0
      %v1945 = vsel %vm373, %v1940, 0
      %1947 = vmatpush.bf16.msra.mxu0 0
      %1948 = vmatpush.bf16.msra.mxu0 0
      %1949 = vmatpush.bf16.msra.mxu0 0
      %1950 = vmatpush.bf16.msra.mxu0 0
      %1951 = vmatpush.bf16.msra.mxu0 0
      %1952 = vmatpush.bf16.msra.mxu0 %v1546
      %1953 = vmatpush.bf16.msra.mxu0 %v1324
      %1954 = vmatpush.bf16.msra.mxu0 %v1322
      %1955 = vmatmul.bf16.gmra.mxu0 %v1942
      %v1956 = vpop.f32.mrf.mxu0
      %v1957 = vadd.f32 0.0, %v1956
      %v1958 = vpop.f32.mrf.mxu0
      %v1959 = vadd.f32 0.0, %v1958
      %1960 = vmatmul.bf16.gmra.mxu0 %v1945
      %v1961 = vpop.f32.mrf.mxu0
      %v1962 = vadd.f32 0.0, %v1961
      %v1963 = vpop.f32.mrf.mxu0
      %v1964 = vadd.f32 0.0, %v1963
      %1965 = vdwg.mxu0
      %1966 = vmatpush.bf16.msra.mxu0 0
      %1967 = vmatpush.bf16.msra.mxu0 0
      %1968 = vmatpush.bf16.msra.mxu0 0
      %1969 = vmatpush.bf16.msra.mxu0 0
      %1970 = vmatpush.bf16.msra.mxu0 0
      %1971 = vmatpush.bf16.msra.mxu0 %v1549
      %1972 = vmatpush.bf16.msra.mxu0 %v1325
      %1973 = vmatpush.bf16.msra.mxu0 %v1323
      %1974 = vmatmul.bf16.gmra.mxu0 %v1942
      %v1975 = vpop.f32.mrf.mxu0
      %v1976 = vadd.f32 0.0, %v1975
      %v1977 = vpop.f32.mrf.mxu0
      %v1978 = vadd.f32 0.0, %v1977
      %1979 = vmatmul.bf16.gmra.mxu0 %v1945
      %v1980 = vpop.f32.mrf.mxu0
      %v1981 = vadd.f32 0.0, %v1980
      %v1982 = vpop.f32.mrf.mxu0
      %v1983 = vadd.f32 0.0, %v1982
      %1984 = vdwg.mxu0
      %v1985 = vadd.f32 %v1918, %v1957
      %v1986 = vadd.f32 %v1919, %v1976
      %v1987 = vadd.f32 %v1920, %v1959
      %v1988 = vadd.f32 %v1921, %v1978
      %v1989 = vadd.f32 %v1922, %v1962
      %v1990 = vadd.f32 %v1923, %v1981
      %v1991 = vadd.f32 %v1924, %v1964
      %v1992 = vadd.f32 %v1925, %v1983
      %s1993 = scalar_lea.vmem %s3, 224
      %v1994 = vld [vmem:[%s1993] sm:$0xf]
      %v1995 = vld [vmem:[%s1993 + $0x4] sm:$0xf]
      %v1996 = vld [vmem:[%s1993 + $0x8] sm:$0xf]
      %v1997 = vld [vmem:[%s1993 + $0xc] sm:$0xf]
      %v2002 = vunpack.c.l.b16 %v1994
      %v2003 = vunpack.c.l.b16 %v1995
      %v2004 = vunpack.c.l.b16 %v1996
      %v2005 = vunpack.c.l.b16 %v1997
      %v2006 = vpack.c.b16 %v2003, %v2002
      %v2007 = vpack.c.b16 %v2005, %v2004
      %v2009 = vsel %vm373, %v2006, 0
      %v2012 = vsel %vm373, %v2007, 0
      %2014 = vmatpush.bf16.msra.mxu0 0
      %2015 = vmatpush.bf16.msra.mxu0 0
      %2016 = vmatpush.bf16.msra.mxu0 0
      %2017 = vmatpush.bf16.msra.mxu0 0
      %2018 = vmatpush.bf16.msra.mxu0 0
      %2019 = vmatpush.bf16.msra.mxu0 %v1546
      %2020 = vmatpush.bf16.msra.mxu0 %v1324
      %2021 = vmatpush.bf16.msra.mxu0 %v1322
      %2022 = vmatmul.bf16.gmra.mxu0 %v2009
      %v2023 = vpop.f32.mrf.mxu0
      %v2024 = vadd.f32 0.0, %v2023
      %v2025 = vpop.f32.mrf.mxu0
      %v2026 = vadd.f32 0.0, %v2025
      %2027 = vmatmul.bf16.gmra.mxu0 %v2012
      %v2028 = vpop.f32.mrf.mxu0
      %v2029 = vadd.f32 0.0, %v2028
      %v2030 = vpop.f32.mrf.mxu0
      %v2031 = vadd.f32 0.0, %v2030
      %2032 = vdwg.mxu0
      %2033 = vmatpush.bf16.msra.mxu0 0
      %2034 = vmatpush.bf16.msra.mxu0 0
      %2035 = vmatpush.bf16.msra.mxu0 0
      %2036 = vmatpush.bf16.msra.mxu0 0
      %2037 = vmatpush.bf16.msra.mxu0 0
      %2038 = vmatpush.bf16.msra.mxu0 %v1549
      %2039 = vmatpush.bf16.msra.mxu0 %v1325
      %2040 = vmatpush.bf16.msra.mxu0 %v1323
      %2041 = vmatmul.bf16.gmra.mxu0 %v2009
      %v2042 = vpop.f32.mrf.mxu0
      %v2043 = vadd.f32 0.0, %v2042
      %v2044 = vpop.f32.mrf.mxu0
      %v2045 = vadd.f32 0.0, %v2044
      %2046 = vmatmul.bf16.gmra.mxu0 %v2012
      %v2047 = vpop.f32.mrf.mxu0
      %v2048 = vadd.f32 0.0, %v2047
      %v2049 = vpop.f32.mrf.mxu0
      %v2050 = vadd.f32 0.0, %v2049
      %2051 = vdwg.mxu0
      %2052 = vrot.lane.b32.xlu0 %v2024, 127
      %v2053 = vpop.permute.xlu0 %2052
      %2054 = vrot.lane.b32.xlu0 %v2026, 127
      %v2055 = vpop.permute.xlu0 %2054
      %2056 = vrot.lane.b32.xlu0 %v2029, 127
      %v2057 = vpop.permute.xlu0 %2056
      %2058 = vrot.lane.b32.xlu0 %v2031, 127
      %v2059 = vpop.permute.xlu0 %2058
      %2060 = vrot.lane.b32.xlu0 %v2043, 127
      %v2061 = vpop.permute.xlu0 %2060
      %2062 = vrot.lane.b32.xlu0 %v2045, 127
      %v2063 = vpop.permute.xlu0 %2062
      %2064 = vrot.lane.b32.xlu0 %v2048, 127
      %v2065 = vpop.permute.xlu0 %2064
      %2066 = vrot.lane.b32.xlu0 %v2050, 127
      %v2067 = vpop.permute.xlu0 %2066
      %v2068 = vsel %vm918, %v2053, %v2061
      %v2069 = vsel %vm918, %v2055, %v2063
      %v2070 = vsel %vm918, %v2057, %v2065
      %v2071 = vsel %vm918, %v2059, %v2067
      %v2072 = vsel %vm918, %v2061, %v2053
      %v2073 = vsel %vm918, %v2063, %v2055
      %v2074 = vsel %vm918, %v2065, %v2057
      %v2075 = vsel %vm918, %v2067, %v2059
      %v2076 = vmul.f32 %v2068, %v927
      %v2077 = vmul.f32 %v2072, %v928
      %v2078 = vmul.f32 %v2069, %v927
      %v2079 = vmul.f32 %v2073, %v928
      %v2080 = vmul.f32 %v2070, %v927
      %v2081 = vmul.f32 %v2074, %v928
      %v2082 = vmul.f32 %v2071, %v927
      %v2083 = vmul.f32 %v2075, %v928
      %v2084 = vadd.f32 %v1985, %v2076
      %v2085 = vadd.f32 %v1986, %v2077
      %v2086 = vadd.f32 %v1987, %v2078
      %v2087 = vadd.f32 %v1988, %v2079
      %v2088 = vadd.f32 %v1989, %v2080
      %v2089 = vadd.f32 %v1990, %v2081
      %v2090 = vadd.f32 %v1991, %v2082
      %v2091 = vadd.f32 %v1992, %v2083
      %s2092 = scalar_lea.vmem %s3, 240
      %v2093 = vld [vmem:[%s2092] sm:$0xf]
      %v2094 = vld [vmem:[%s2092 + $0x4] sm:$0xf]
      %v2095 = vld [vmem:[%s2092 + $0x8] sm:$0xf]
      %v2096 = vld [vmem:[%s2092 + $0xc] sm:$0xf]
      %v2101 = vunpack.c.l.b16 %v2093
      %v2102 = vunpack.c.l.b16 %v2094
      %v2103 = vunpack.c.l.b16 %v2095
      %v2104 = vunpack.c.l.b16 %v2096
      %v2105 = vpack.c.b16 %v2102, %v2101
      %v2106 = vpack.c.b16 %v2104, %v2103
      %v2108 = vsel %vm373, %v2105, 0
      %v2111 = vsel %vm373, %v2106, 0
      %2113 = vmatpush.bf16.msra.mxu0 0
      %2114 = vmatpush.bf16.msra.mxu0 0
      %2115 = vmatpush.bf16.msra.mxu0 0
      %2116 = vmatpush.bf16.msra.mxu0 0
      %2117 = vmatpush.bf16.msra.mxu0 0
      %2118 = vmatpush.bf16.msra.mxu0 %v1546
      %2119 = vmatpush.bf16.msra.mxu0 %v1324
      %2120 = vmatpush.bf16.msra.mxu0 %v1322
      %2121 = vmatmul.bf16.gmra.mxu0 %v2108
      %v2122 = vpop.f32.mrf.mxu0
      %v2123 = vadd.f32 0.0, %v2122
      %v2124 = vpop.f32.mrf.mxu0
      %v2125 = vadd.f32 0.0, %v2124
      %2126 = vmatmul.bf16.gmra.mxu0 %v2111
      %v2127 = vpop.f32.mrf.mxu0
      %v2128 = vadd.f32 0.0, %v2127
      %v2129 = vpop.f32.mrf.mxu0
      %v2130 = vadd.f32 0.0, %v2129
      %2131 = vdwg.mxu0
      %2132 = vmatpush.bf16.msra.mxu0 0
      %2133 = vmatpush.bf16.msra.mxu0 0
      %2134 = vmatpush.bf16.msra.mxu0 0
      %2135 = vmatpush.bf16.msra.mxu0 0
      %2136 = vmatpush.bf16.msra.mxu0 0
      %2137 = vmatpush.bf16.msra.mxu0 %v1549
      %2138 = vmatpush.bf16.msra.mxu0 %v1325
      %2139 = vmatpush.bf16.msra.mxu0 %v1323
      %2140 = vmatmul.bf16.gmra.mxu0 %v2108
      %v2141 = vpop.f32.mrf.mxu0
      %v2142 = vadd.f32 0.0, %v2141
      %v2143 = vpop.f32.mrf.mxu0
      %v2144 = vadd.f32 0.0, %v2143
      %2145 = vmatmul.bf16.gmra.mxu0 %v2111
      %v2146 = vpop.f32.mrf.mxu0
      %v2147 = vadd.f32 0.0, %v2146
      %v2148 = vpop.f32.mrf.mxu0
      %v2149 = vadd.f32 0.0, %v2148
      %2150 = vdwg.mxu0
      %2151 = vrot.lane.b32.xlu0 %v2123, 113
      %v2152 = vpop.permute.xlu0 %2151
      %2153 = vrot.lane.b32.xlu0 %v2125, 113
      %v2154 = vpop.permute.xlu0 %2153
      %2155 = vrot.lane.b32.xlu0 %v2128, 113
      %v2156 = vpop.permute.xlu0 %2155
      %2157 = vrot.lane.b32.xlu0 %v2130, 113
      %v2158 = vpop.permute.xlu0 %2157
      %2159 = vrot.lane.b32.xlu0 %v2142, 113
      %v2160 = vpop.permute.xlu0 %2159
      %2161 = vrot.lane.b32.xlu0 %v2144, 113
      %v2162 = vpop.permute.xlu0 %2161
      %2163 = vrot.lane.b32.xlu0 %v2147, 113
      %v2164 = vpop.permute.xlu0 %2163
      %2165 = vrot.lane.b32.xlu0 %v2149, 113
      %v2166 = vpop.permute.xlu0 %2165
      %v2167 = vsel %vm1020, %v2152, %v2160
      %v2168 = vsel %vm1020, %v2154, %v2162
      %v2169 = vsel %vm1020, %v2156, %v2164
      %v2170 = vsel %vm1020, %v2158, %v2166
      %v2171 = vsel %vm1020, %v2160, %v2152
      %v2172 = vsel %vm1020, %v2162, %v2154
      %v2173 = vsel %vm1020, %v2164, %v2156
      %v2174 = vsel %vm1020, %v2166, %v2158
      %v2175 = vmul.f32 %v2167, %v1029
      %v2176 = vmul.f32 %v2171, %v1030
      %v2177 = vmul.f32 %v2168, %v1029
      %v2178 = vmul.f32 %v2172, %v1030
      %v2179 = vmul.f32 %v2169, %v1029
      %v2180 = vmul.f32 %v2173, %v1030
      %v2181 = vmul.f32 %v2170, %v1029
      %v2182 = vmul.f32 %v2174, %v1030
      %v2183 = vadd.f32 %v2084, %v2175
      %v2184 = vadd.f32 %v2085, %v2176
      %v2185 = vadd.f32 %v2086, %v2177
      %v2186 = vadd.f32 %v2087, %v2178
      %v2187 = vadd.f32 %v2088, %v2179
      %v2188 = vadd.f32 %v2089, %v2180
      %v2189 = vadd.f32 %v2090, %v2181
      %v2190 = vadd.f32 %v2091, %v2182
      %s2191 = scalar_lea.vmem %s3, 256
      %v2192 = vld [vmem:[%s2191] sm:$0xf]
      %v2193 = vld [vmem:[%s2191 + $0x4] sm:$0xf]
      %v2194 = vld [vmem:[%s2191 + $0x8] sm:$0xf]
      %v2195 = vld [vmem:[%s2191 + $0xc] sm:$0xf]
      %v2200 = vunpack.c.l.b16 %v2192
      %v2201 = vunpack.c.l.b16 %v2193
      %v2202 = vunpack.c.l.b16 %v2194
      %v2203 = vunpack.c.l.b16 %v2195
      %v2204 = vpack.c.b16 %v2201, %v2200
      %v2205 = vpack.c.b16 %v2203, %v2202
      %v2207 = vsel %vm373, %v2204, 0
      %v2210 = vsel %vm373, %v2205, 0
      %2212 = vmatpush.bf16.msra.mxu0 0
      %2213 = vmatpush.bf16.msra.mxu0 0
      %2214 = vmatpush.bf16.msra.mxu0 0
      %2215 = vmatpush.bf16.msra.mxu0 0
      %2216 = vmatpush.bf16.msra.mxu0 0
      %2217 = vmatpush.bf16.msra.mxu0 %v1546
      %2218 = vmatpush.bf16.msra.mxu0 %v1324
      %2219 = vmatpush.bf16.msra.mxu0 %v1322
      %2220 = vmatmul.bf16.gmra.mxu0 %v2207
      %v2221 = vpop.f32.mrf.mxu0
      %v2222 = vadd.f32 0.0, %v2221
      %v2223 = vpop.f32.mrf.mxu0
      %v2224 = vadd.f32 0.0, %v2223
      %2225 = vmatmul.bf16.gmra.mxu0 %v2210
      %v2226 = vpop.f32.mrf.mxu0
      %v2227 = vadd.f32 0.0, %v2226
      %v2228 = vpop.f32.mrf.mxu0
      %v2229 = vadd.f32 0.0, %v2228
      %2230 = vdwg.mxu0
      %2231 = vmatpush.bf16.msra.mxu0 0
      %2232 = vmatpush.bf16.msra.mxu0 0
      %2233 = vmatpush.bf16.msra.mxu0 0
      %2234 = vmatpush.bf16.msra.mxu0 0
      %2235 = vmatpush.bf16.msra.mxu0 0
      %2236 = vmatpush.bf16.msra.mxu0 %v1549
      %2237 = vmatpush.bf16.msra.mxu0 %v1325
      %2238 = vmatpush.bf16.msra.mxu0 %v1323
      %2239 = vmatmul.bf16.gmra.mxu0 %v2207
      %v2240 = vpop.f32.mrf.mxu0
      %v2241 = vadd.f32 0.0, %v2240
      %v2242 = vpop.f32.mrf.mxu0
      %v2243 = vadd.f32 0.0, %v2242
      %2244 = vmatmul.bf16.gmra.mxu0 %v2210
      %v2245 = vpop.f32.mrf.mxu0
      %v2246 = vadd.f32 0.0, %v2245
      %v2247 = vpop.f32.mrf.mxu0
      %v2248 = vadd.f32 0.0, %v2247
      %2249 = vdwg.mxu0
      %2250 = vrot.lane.b32.xlu0 %v2222, 112
      %v2251 = vpop.permute.xlu0 %2250
      %2252 = vrot.lane.b32.xlu0 %v2224, 112
      %v2253 = vpop.permute.xlu0 %2252
      %2254 = vrot.lane.b32.xlu0 %v2227, 112
      %v2255 = vpop.permute.xlu0 %2254
      %2256 = vrot.lane.b32.xlu0 %v2229, 112
      %v2257 = vpop.permute.xlu0 %2256
      %2258 = vrot.lane.b32.xlu0 %v2241, 112
      %v2259 = vpop.permute.xlu0 %2258
      %2260 = vrot.lane.b32.xlu0 %v2243, 112
      %v2261 = vpop.permute.xlu0 %2260
      %2262 = vrot.lane.b32.xlu0 %v2246, 112
      %v2263 = vpop.permute.xlu0 %2262
      %2264 = vrot.lane.b32.xlu0 %v2248, 112
      %v2265 = vpop.permute.xlu0 %2264
      %v2266 = vsel %vm1122, %v2251, %v2259
      %v2267 = vsel %vm1122, %v2253, %v2261
      %v2268 = vsel %vm1122, %v2255, %v2263
      %v2269 = vsel %vm1122, %v2257, %v2265
      %v2270 = vsel %vm1122, %v2259, %v2251
      %v2271 = vsel %vm1122, %v2261, %v2253
      %v2272 = vsel %vm1122, %v2263, %v2255
      %v2273 = vsel %vm1122, %v2265, %v2257
      %v2274 = vmul.f32 %v2266, %v1131
      %v2275 = vmul.f32 %v2270, %v1132
      %v2276 = vmul.f32 %v2267, %v1131
      %v2277 = vmul.f32 %v2271, %v1132
      %v2278 = vmul.f32 %v2268, %v1131
      %v2279 = vmul.f32 %v2272, %v1132
      %v2280 = vmul.f32 %v2269, %v1131
      %v2281 = vmul.f32 %v2273, %v1132
      %v2282 = vadd.f32 %v2183, %v2274
      %v2283 = vadd.f32 %v2184, %v2275
      %v2284 = vadd.f32 %v2185, %v2276
      %v2285 = vadd.f32 %v2186, %v2277
      %v2286 = vadd.f32 %v2187, %v2278
      %v2287 = vadd.f32 %v2188, %v2279
      %v2288 = vadd.f32 %v2189, %v2280
      %v2289 = vadd.f32 %v2190, %v2281
      %s2290 = scalar_lea.vmem %s3, 272
      %v2291 = vld [vmem:[%s2290] sm:$0xf]
      %v2292 = vld [vmem:[%s2290 + $0x4] sm:$0xf]
      %v2293 = vld [vmem:[%s2290 + $0x8] sm:$0xf]
      %v2294 = vld [vmem:[%s2290 + $0xc] sm:$0xf]
      %v2299 = vunpack.c.l.b16 %v2291
      %v2300 = vunpack.c.l.b16 %v2292
      %v2301 = vunpack.c.l.b16 %v2293
      %v2302 = vunpack.c.l.b16 %v2294
      %v2303 = vpack.c.b16 %v2300, %v2299
      %v2304 = vpack.c.b16 %v2302, %v2301
      %v2306 = vsel %vm373, %v2303, 0
      %v2309 = vsel %vm373, %v2304, 0
      %2311 = vmatpush.bf16.msra.mxu0 0
      %2312 = vmatpush.bf16.msra.mxu0 0
      %2313 = vmatpush.bf16.msra.mxu0 0
      %2314 = vmatpush.bf16.msra.mxu0 0
      %2315 = vmatpush.bf16.msra.mxu0 0
      %2316 = vmatpush.bf16.msra.mxu0 %v1546
      %2317 = vmatpush.bf16.msra.mxu0 %v1324
      %2318 = vmatpush.bf16.msra.mxu0 %v1322
      %2319 = vmatmul.bf16.gmra.mxu0 %v2306
      %v2320 = vpop.f32.mrf.mxu0
      %v2321 = vadd.f32 0.0, %v2320
      %v2322 = vpop.f32.mrf.mxu0
      %v2323 = vadd.f32 0.0, %v2322
      %2324 = vmatmul.bf16.gmra.mxu0 %v2309
      %v2325 = vpop.f32.mrf.mxu0
      %v2326 = vadd.f32 0.0, %v2325
      %v2327 = vpop.f32.mrf.mxu0
      %v2328 = vadd.f32 0.0, %v2327
      %2329 = vdwg.mxu0
      %2330 = vmatpush.bf16.msra.mxu0 0
      %2331 = vmatpush.bf16.msra.mxu0 0
      %2332 = vmatpush.bf16.msra.mxu0 0
      %2333 = vmatpush.bf16.msra.mxu0 0
      %2334 = vmatpush.bf16.msra.mxu0 0
      %2335 = vmatpush.bf16.msra.mxu0 %v1549
      %2336 = vmatpush.bf16.msra.mxu0 %v1325
      %2337 = vmatpush.bf16.msra.mxu0 %v1323
      %2338 = vmatmul.bf16.gmra.mxu0 %v2306
      %v2339 = vpop.f32.mrf.mxu0
      %v2340 = vadd.f32 0.0, %v2339
      %v2341 = vpop.f32.mrf.mxu0
      %v2342 = vadd.f32 0.0, %v2341
      %2343 = vmatmul.bf16.gmra.mxu0 %v2309
      %v2344 = vpop.f32.mrf.mxu0
      %v2345 = vadd.f32 0.0, %v2344
      %v2346 = vpop.f32.mrf.mxu0
      %v2347 = vadd.f32 0.0, %v2346
      %2348 = vdwg.mxu0
      %2349 = vrot.lane.b32.xlu0 %v2321, 111
      %v2350 = vpop.permute.xlu0 %2349
      %2351 = vrot.lane.b32.xlu0 %v2323, 111
      %v2352 = vpop.permute.xlu0 %2351
      %2353 = vrot.lane.b32.xlu0 %v2326, 111
      %v2354 = vpop.permute.xlu0 %2353
      %2355 = vrot.lane.b32.xlu0 %v2328, 111
      %v2356 = vpop.permute.xlu0 %2355
      %2357 = vrot.lane.b32.xlu0 %v2340, 111
      %v2358 = vpop.permute.xlu0 %2357
      %2359 = vrot.lane.b32.xlu0 %v2342, 111
      %v2360 = vpop.permute.xlu0 %2359
      %2361 = vrot.lane.b32.xlu0 %v2345, 111
      %v2362 = vpop.permute.xlu0 %2361
      %2363 = vrot.lane.b32.xlu0 %v2347, 111
      %v2364 = vpop.permute.xlu0 %2363
      %v2365 = vsel %vm1224, %v2350, %v2358
      %v2366 = vsel %vm1224, %v2352, %v2360
      %v2367 = vsel %vm1224, %v2354, %v2362
      %v2368 = vsel %vm1224, %v2356, %v2364
      %v2369 = vsel %vm1224, %v2358, %v2350
      %v2370 = vsel %vm1224, %v2360, %v2352
      %v2371 = vsel %vm1224, %v2362, %v2354
      %v2372 = vsel %vm1224, %v2364, %v2356
      %v2373 = vmul.f32 %v2365, %v1233
      %v2374 = vmul.f32 %v2369, %v1234
      %v2375 = vmul.f32 %v2366, %v1233
      %v2376 = vmul.f32 %v2370, %v1234
      %v2377 = vmul.f32 %v2367, %v1233
      %v2378 = vmul.f32 %v2371, %v1234
      %v2379 = vmul.f32 %v2368, %v1233
      %v2380 = vmul.f32 %v2372, %v1234
      %v2381 = vadd.f32 %v2282, %v2373
      %v2382 = vadd.f32 %v2283, %v2374
      %v2383 = vadd.f32 %v2284, %v2375
      %v2384 = vadd.f32 %v2285, %v2376
      %v2385 = vadd.f32 %v2286, %v2377
      %v2386 = vadd.f32 %v2287, %v2378
      %v2387 = vadd.f32 %v2288, %v2379
      %v2388 = vadd.f32 %v2289, %v2380
      %s2389 = scalar_lea.vmem %s4, 32
      %v2390 = vld [vmem:[%s2389] sm:$0xff]
      %v2391 = vld [vmem:[%s2389 + $0x8] sm:$0xff]
      %v2392 = vld [vmem:[%s2389 + $0x10] sm:$0xff]
      %v2393 = vld [vmem:[%s2389 + $0x18] sm:$0xff]
      %2395 = vset.pattern.permute.xlu0 0
      %2396 = vperm.xlu0 %2395, %v2390
      %v2397 = vpop.permute.xlu0 %2396
      %2400 = vset.pattern.permute.xlu0 0
      %2401 = vperm.xlu0 %2400, %v2391
      %v2402 = vpop.permute.xlu0 %2401
      %2405 = vset.pattern.permute.xlu0 0
      %2406 = vperm.xlu0 %2405, %v2392
      %v2407 = vpop.permute.xlu0 %2406
      %2410 = vset.pattern.permute.xlu0 0
      %2411 = vperm.xlu0 %2410, %v2393
      %v2412 = vpop.permute.xlu0 %2411
      %v2414 = vadd.f32 %v2381, %v2397
      %v2415 = vadd.f32 %v2382, %v2397
      %v2416 = vadd.f32 %v2383, %v2402
      %v2417 = vadd.f32 %v2384, %v2402
      %v2418 = vadd.f32 %v2385, %v2407
      %v2419 = vadd.f32 %v2386, %v2407
      %v2420 = vadd.f32 %v2387, %v2412
      %v2421 = vadd.f32 %v2388, %v2412
      %v2422 = vmax.f32 %v2414, 0.0
      %v2423 = vmax.f32 %v2415, 0.0
      %v2424 = vmax.f32 %v2416, 0.0
      %v2425 = vmax.f32 %v2417, 0.0
      %v2426 = vmax.f32 %v2418, 0.0
      %v2427 = vmax.f32 %v2419, 0.0
      %v2428 = vmax.f32 %v2420, 0.0
      %v2429 = vmax.f32 %v2421, 0.0
      %v2430 = vadd.f32 %v1291, %v2422
      %v2431 = vadd.f32 %v1292, %v2423
      %v2432 = vadd.f32 %v1293, %v2424
      %v2433 = vadd.f32 %v1294, %v2425
      %v2434 = vadd.f32 %v1295, %v2426
      %v2435 = vadd.f32 %v1296, %v2427
      %v2436 = vadd.f32 %v1297, %v2428
      %v2437 = vadd.f32 %v1298, %v2429
      %v2438 = vpack.c.bf16 %v2431, %v2430
      %v2439 = vpack.c.bf16 %v2433, %v2432
      %v2440 = vpack.c.bf16 %v2435, %v2434
      %v2441 = vpack.c.bf16 %v2437, %v2436
      %s2442 = scalar_lea.vmem %s5, 8
      %v2443 = vld [vmem:[%s2442] sm:$0xf]
      %v2444 = vld [vmem:[%s2442 + $0x4] sm:$0x1]
      %v2447 = vunpack.c.l.b16 %v2443
      %v2448 = vunpack.c.l.b16 %v2444
      %v2449 = vpack.c.b16 %v2448, %v2447
      %v2454 = vunpack.c.l.b16 %v2438
      %v2455 = vunpack.c.h.b16 %v2438
      %v2456 = vunpack.c.l.b16 %v2439
      %v2457 = vunpack.c.h.b16 %v2439
      %v2458 = vunpack.c.l.b16 %v2440
      %v2459 = vunpack.c.h.b16 %v2440
      %v2460 = vunpack.c.l.b16 %v2441
      %v2461 = vunpack.c.h.b16 %v2441
      %v2462 = vpack.c.b16 %v2456, %v2454
      %v2463 = vpack.c.b16 %v2457, %v2455
      %v2464 = vpack.c.b16 %v2460, %v2458
      %v2465 = vpack.c.b16 %v2461, %v2459
      %v2471 = vsel %vm1330, %v2449, 0
      %2473 = vmatpush.bf16.msra.mxu0 0
      %2474 = vmatpush.bf16.msra.mxu0 0
      %2475 = vmatpush.bf16.msra.mxu0 0
      %2476 = vmatpush.bf16.msra.mxu0 0
      %2477 = vmatpush.bf16.msra.mxu0 0
      %2478 = vmatpush.bf16.msra.mxu0 0
      %2479 = vmatpush.bf16.msra.mxu0 %v2464
      %2480 = vmatpush.bf16.msra.mxu0 %v2462
      %2481 = vmatmul.bf16.gmra.mxu0 %v2471
      %v2482 = vpop.f32.mrf.mxu0
      %v2483 = vadd.f32 0.0, %v2482
      %v2484 = vpop.f32.mrf.mxu0
      %v2485 = vadd.f32 0.0, %v2484
      %2486 = vdwg.mxu0
      %2487 = vmatpush.bf16.msra.mxu0 0
      %2488 = vmatpush.bf16.msra.mxu0 0
      %2489 = vmatpush.bf16.msra.mxu0 0
      %2490 = vmatpush.bf16.msra.mxu0 0
      %2491 = vmatpush.bf16.msra.mxu0 0
      %2492 = vmatpush.bf16.msra.mxu0 0
      %2493 = vmatpush.bf16.msra.mxu0 %v2465
      %2494 = vmatpush.bf16.msra.mxu0 %v2463
      %2495 = vmatmul.bf16.gmra.mxu0 %v2471
      %v2496 = vpop.f32.mrf.mxu0
      %v2497 = vadd.f32 0.0, %v2496
      %v2498 = vpop.f32.mrf.mxu0
      %v2499 = vadd.f32 0.0, %v2498
      %2500 = vdwg.mxu0
      %2501 = vrot.lane.b32.xlu0 %v2483, 17
      %v2502 = vpop.permute.xlu0 %2501
      %2503 = vrot.lane.b32.xlu0 %v2497, 17
      %v2504 = vpop.permute.xlu0 %2503
      %v2505 = vsel %vm443, %v2502, %v2504
      %v2506 = vsel %vm443, %v2504, %v2502
      %v2507 = vmul.f32 %v2506, %v326
      %v2508 = vmul.f32 %v2505, %v327
      %v2509 = vadd.f32 %v2507, 0.0
      %v2510 = vadd.f32 %v2508, 0.0
      %v2513 = vrot.slane %v2483, 1
      %v2514 = vrot.slane %v2497, 1
      %2517 = vrot.lane.b32.xlu0 %v2513, 16
      %v2518 = vpop.permute.xlu0 %2517
      %2519 = vrot.lane.b32.xlu0 %v2514, 16
      %v2520 = vpop.permute.xlu0 %2519
      %v2521 = vsel %vm545, %v2518, %v2520
      %v2522 = vsel %vm545, %v2520, %v2518
      %v2523 = vmul.f32 %v2522, %v1386
      %v2524 = vmul.f32 %v2521, %v1387
      %v2525 = vadd.f32 %v2509, %v2523
      %v2526 = vadd.f32 %v2510, %v2524
      %v2527 = vrot.slane %v2483, 2
      %v2528 = vrot.slane %v2497, 2
      %2531 = vrot.lane.b32.xlu0 %v2527, 15
      %v2532 = vpop.permute.xlu0 %2531
      %2533 = vrot.lane.b32.xlu0 %v2528, 15
      %v2534 = vpop.permute.xlu0 %2533
      %v2535 = vsel %vm647, %v2532, %v2534
      %v2536 = vsel %vm647, %v2534, %v2532
      %v2537 = vmul.f32 %v2536, %v1404
      %v2538 = vmul.f32 %v2535, %v1405
      %v2539 = vadd.f32 %v2525, %v2537
      %v2540 = vadd.f32 %v2526, %v2538
      %v2541 = vrot.slane %v2483, 3
      %v2542 = vrot.slane %v2497, 3
      %2545 = vrot.lane.b32.xlu0 %v2541, 1
      %v2546 = vpop.permute.xlu0 %2545
      %2547 = vrot.lane.b32.xlu0 %v2542, 1
      %v2548 = vpop.permute.xlu0 %2547
      %v2549 = vsel %vm749, %v2546, %v2548
      %v2550 = vsel %vm749, %v2548, %v2546
      %v2551 = vmul.f32 %v2550, %v1422
      %v2552 = vmul.f32 %v2549, %v1423
      %v2553 = vadd.f32 %v2539, %v2551
      %v2554 = vadd.f32 %v2540, %v2552
      %v2555 = vrot.slane %v2483, 4
      %v2556 = vrot.slane %v2497, 4
      %v2559 = vadd.f32 %v2553, %v2555
      %v2560 = vadd.f32 %v2554, %v2556
      %v2561 = vrot.slane %v2483, 5
      %v2562 = vrot.slane %v2497, 5
      %2565 = vrot.lane.b32.xlu0 %v2561, 127
      %v2566 = vpop.permute.xlu0 %2565
      %2567 = vrot.lane.b32.xlu0 %v2562, 127
      %v2568 = vpop.permute.xlu0 %2567
      %v2569 = vsel %vm918, %v2566, %v2568
      %v2570 = vsel %vm918, %v2568, %v2566
      %v2571 = vmul.f32 %v2569, %v1446
      %v2572 = vmul.f32 %v2570, %v1447
      %v2573 = vadd.f32 %v2559, %v2571
      %v2574 = vadd.f32 %v2560, %v2572
      %v2575 = vrot.slane %v2483, 6
      %v2576 = vrot.slane %v2497, 6
      %2579 = vrot.lane.b32.xlu0 %v2575, 113
      %v2580 = vpop.permute.xlu0 %2579
      %2581 = vrot.lane.b32.xlu0 %v2576, 113
      %v2582 = vpop.permute.xlu0 %2581
      %v2583 = vsel %vm1020, %v2580, %v2582
      %v2584 = vsel %vm1020, %v2582, %v2580
      %v2585 = vmul.f32 %v2583, %v1464
      %v2586 = vmul.f32 %v2584, %v1465
      %v2587 = vadd.f32 %v2573, %v2585
      %v2588 = vadd.f32 %v2574, %v2586
      %v2589 = vrot.slane %v2483, 7
      %v2590 = vrot.slane %v2497, 7
      %2593 = vrot.lane.b32.xlu0 %v2589, 112
      %v2594 = vpop.permute.xlu0 %2593
      %2595 = vrot.lane.b32.xlu0 %v2590, 112
      %v2596 = vpop.permute.xlu0 %2595
      %v2597 = vsel %vm1122, %v2594, %v2596
      %v2598 = vsel %vm1122, %v2596, %v2594
      %v2599 = vmul.f32 %v2597, %v1482
      %v2600 = vmul.f32 %v2598, %v1483
      %v2601 = vadd.f32 %v2587, %v2599
      %v2602 = vadd.f32 %v2588, %v2600
      %2603 = vrot.lane.b32.xlu0 %v2485, 111
      %v2604 = vpop.permute.xlu0 %2603
      %2605 = vrot.lane.b32.xlu0 %v2499, 111
      %v2606 = vpop.permute.xlu0 %2605
      %v2607 = vsel %vm1224, %v2604, %v2606
      %v2608 = vsel %vm1224, %v2606, %v2604
      %v2609 = vmul.f32 %v2607, %v328
      %v2610 = vmul.f32 %v2608, %v329
      %v2611 = vadd.f32 %v2601, %v2609
      %v2612 = vadd.f32 %v2602, %v2610
      %v2615 = vrot.slane %v2612, 7
      %v2616 = vsel %vm1503, %v2611, %v2615
      %v2618 = vadd.f32 %v1514, %v2616
      %s2619 = scalar_lea.vmem %s6, 1
      %v2620 = vld [vmem:[%s2619] sm:$0x1]
      %2622 = vset.pattern.permute.xlu0 0
      %2623 = vperm.xlu0 %2622, %v2620
      %v2624 = vpop.permute.xlu0 %2623
      %v2626 = vperm.slane %v2624, 0
      %v2627 = vadd.f32 %v2618, %v2626
      %v2629 = vperm.slane %v2627, 0
      %v2630 = vperm.slane %v2627, 1
      %v2633 = vpack.c.bf16 %v2630, %v2629
      %v2635 = vperm.slane %v2633, 0
      %v2636 = vperm.slane %v2633, 4
      %s2637 = scalar_lea.vmem %s3, 288
      %v2638 = vld [vmem:[%s2637] sm:$0xf]
      %v2639 = vld [vmem:[%s2637 + $0x4] sm:$0xf]
      %v2640 = vld [vmem:[%s2637 + $0x8] sm:$0xf]
      %v2641 = vld [vmem:[%s2637 + $0xc] sm:$0xf]
      %v2646 = vunpack.c.l.b16 %v2638
      %v2647 = vunpack.c.l.b16 %v2639
      %v2648 = vunpack.c.l.b16 %v2640
      %v2649 = vunpack.c.l.b16 %v2641
      %v2650 = vpack.c.b16 %v2647, %v2646
      %v2651 = vpack.c.b16 %v2649, %v2648
      %v2653 = vsel %vm373, %v2650, 0
      %v2656 = vsel %vm373, %v2651, 0
      %v2659 = vsel %vm380, %v2635, 0
      %v2662 = vsel %vm380, %v2636, 0
      %2664 = vmatpush.bf16.msra.mxu0 0
      %2665 = vmatpush.bf16.msra.mxu0 0
      %2666 = vmatpush.bf16.msra.mxu0 0
      %2667 = vmatpush.bf16.msra.mxu0 0
      %2668 = vmatpush.bf16.msra.mxu0 0
      %2669 = vmatpush.bf16.msra.mxu0 %v2659
      %2670 = vmatpush.bf16.msra.mxu0 %v2464
      %2671 = vmatpush.bf16.msra.mxu0 %v2462
      %2672 = vmatmul.bf16.gmra.mxu0 %v2653
      %v2673 = vpop.f32.mrf.mxu0
      %v2674 = vadd.f32 0.0, %v2673
      %v2675 = vpop.f32.mrf.mxu0
      %v2676 = vadd.f32 0.0, %v2675
      %2677 = vmatmul.bf16.gmra.mxu0 %v2656
      %v2678 = vpop.f32.mrf.mxu0
      %v2679 = vadd.f32 0.0, %v2678
      %v2680 = vpop.f32.mrf.mxu0
      %v2681 = vadd.f32 0.0, %v2680
      %2682 = vdwg.mxu0
      %2683 = vmatpush.bf16.msra.mxu0 0
      %2684 = vmatpush.bf16.msra.mxu0 0
      %2685 = vmatpush.bf16.msra.mxu0 0
      %2686 = vmatpush.bf16.msra.mxu0 0
      %2687 = vmatpush.bf16.msra.mxu0 0
      %2688 = vmatpush.bf16.msra.mxu0 %v2662
      %2689 = vmatpush.bf16.msra.mxu0 %v2465
      %2690 = vmatpush.bf16.msra.mxu0 %v2463
      %2691 = vmatmul.bf16.gmra.mxu0 %v2653
      %v2692 = vpop.f32.mrf.mxu0
      %v2693 = vadd.f32 0.0, %v2692
      %v2694 = vpop.f32.mrf.mxu0
      %v2695 = vadd.f32 0.0, %v2694
      %2696 = vmatmul.bf16.gmra.mxu0 %v2656
      %v2697 = vpop.f32.mrf.mxu0
      %v2698 = vadd.f32 0.0, %v2697
      %v2699 = vpop.f32.mrf.mxu0
      %v2700 = vadd.f32 0.0, %v2699
      %2701 = vdwg.mxu0
      %2702 = vrot.lane.b32.xlu0 %v2674, 17
      %v2703 = vpop.permute.xlu0 %2702
      %2704 = vrot.lane.b32.xlu0 %v2676, 17
      %v2705 = vpop.permute.xlu0 %2704
      %2706 = vrot.lane.b32.xlu0 %v2679, 17
      %v2707 = vpop.permute.xlu0 %2706
      %2708 = vrot.lane.b32.xlu0 %v2681, 17
      %v2709 = vpop.permute.xlu0 %2708
      %2710 = vrot.lane.b32.xlu0 %v2693, 17
      %v2711 = vpop.permute.xlu0 %2710
      %2712 = vrot.lane.b32.xlu0 %v2695, 17
      %v2713 = vpop.permute.xlu0 %2712
      %2714 = vrot.lane.b32.xlu0 %v2698, 17
      %v2715 = vpop.permute.xlu0 %2714
      %2716 = vrot.lane.b32.xlu0 %v2700, 17
      %v2717 = vpop.permute.xlu0 %2716
      %v2718 = vsel %vm443, %v2703, %v2711
      %v2719 = vsel %vm443, %v2705, %v2713
      %v2720 = vsel %vm443, %v2707, %v2715
      %v2721 = vsel %vm443, %v2709, %v2717
      %v2722 = vsel %vm443, %v2711, %v2703
      %v2723 = vsel %vm443, %v2713, %v2705
      %v2724 = vsel %vm443, %v2715, %v2707
      %v2725 = vsel %vm443, %v2717, %v2709
      %v2726 = vmul.f32 %v2722, %v452
      %v2727 = vmul.f32 %v2718, %v453
      %v2728 = vmul.f32 %v2723, %v452
      %v2729 = vmul.f32 %v2719, %v453
      %v2730 = vmul.f32 %v2724, %v452
      %v2731 = vmul.f32 %v2720, %v453
      %v2732 = vmul.f32 %v2725, %v452
      %v2733 = vmul.f32 %v2721, %v453
      %v2734 = vadd.f32 %v2726, 0.0
      %v2735 = vadd.f32 %v2727, 0.0
      %v2736 = vadd.f32 %v2728, 0.0
      %v2737 = vadd.f32 %v2729, 0.0
      %v2738 = vadd.f32 %v2730, 0.0
      %v2739 = vadd.f32 %v2731, 0.0
      %v2740 = vadd.f32 %v2732, 0.0
      %v2741 = vadd.f32 %v2733, 0.0
      %s2742 = scalar_lea.vmem %s3, 304
      %v2743 = vld [vmem:[%s2742] sm:$0xf]
      %v2744 = vld [vmem:[%s2742 + $0x4] sm:$0xf]
      %v2745 = vld [vmem:[%s2742 + $0x8] sm:$0xf]
      %v2746 = vld [vmem:[%s2742 + $0xc] sm:$0xf]
      %v2751 = vunpack.c.l.b16 %v2743
      %v2752 = vunpack.c.l.b16 %v2744
      %v2753 = vunpack.c.l.b16 %v2745
      %v2754 = vunpack.c.l.b16 %v2746
      %v2755 = vpack.c.b16 %v2752, %v2751
      %v2756 = vpack.c.b16 %v2754, %v2753
      %v2758 = vsel %vm373, %v2755, 0
      %v2761 = vsel %vm373, %v2756, 0
      %2763 = vmatpush.bf16.msra.mxu0 0
      %2764 = vmatpush.bf16.msra.mxu0 0
      %2765 = vmatpush.bf16.msra.mxu0 0
      %2766 = vmatpush.bf16.msra.mxu0 0
      %2767 = vmatpush.bf16.msra.mxu0 0
      %2768 = vmatpush.bf16.msra.mxu0 %v2659
      %2769 = vmatpush.bf16.msra.mxu0 %v2464
      %2770 = vmatpush.bf16.msra.mxu0 %v2462
      %2771 = vmatmul.bf16.gmra.mxu0 %v2758
      %v2772 = vpop.f32.mrf.mxu0
      %v2773 = vadd.f32 0.0, %v2772
      %v2774 = vpop.f32.mrf.mxu0
      %v2775 = vadd.f32 0.0, %v2774
      %2776 = vmatmul.bf16.gmra.mxu0 %v2761
      %v2777 = vpop.f32.mrf.mxu0
      %v2778 = vadd.f32 0.0, %v2777
      %v2779 = vpop.f32.mrf.mxu0
      %v2780 = vadd.f32 0.0, %v2779
      %2781 = vdwg.mxu0
      %2782 = vmatpush.bf16.msra.mxu0 0
      %2783 = vmatpush.bf16.msra.mxu0 0
      %2784 = vmatpush.bf16.msra.mxu0 0
      %2785 = vmatpush.bf16.msra.mxu0 0
      %2786 = vmatpush.bf16.msra.mxu0 0
      %2787 = vmatpush.bf16.msra.mxu0 %v2662
      %2788 = vmatpush.bf16.msra.mxu0 %v2465
      %2789 = vmatpush.bf16.msra.mxu0 %v2463
      %2790 = vmatmul.bf16.gmra.mxu0 %v2758
      %v2791 = vpop.f32.mrf.mxu0
      %v2792 = vadd.f32 0.0, %v2791
      %v2793 = vpop.f32.mrf.mxu0
      %v2794 = vadd.f32 0.0, %v2793
      %2795 = vmatmul.bf16.gmra.mxu0 %v2761
      %v2796 = vpop.f32.mrf.mxu0
      %v2797 = vadd.f32 0.0, %v2796
      %v2798 = vpop.f32.mrf.mxu0
      %v2799 = vadd.f32 0.0, %v2798
      %2800 = vdwg.mxu0
      %2801 = vrot.lane.b32.xlu0 %v2773, 16
      %v2802 = vpop.permute.xlu0 %2801
      %2803 = vrot.lane.b32.xlu0 %v2775, 16
      %v2804 = vpop.permute.xlu0 %2803
      %2805 = vrot.lane.b32.xlu0 %v2778, 16
      %v2806 = vpop.permute.xlu0 %2805
      %2807 = vrot.lane.b32.xlu0 %v2780, 16
      %v2808 = vpop.permute.xlu0 %2807
      %2809 = vrot.lane.b32.xlu0 %v2792, 16
      %v2810 = vpop.permute.xlu0 %2809
      %2811 = vrot.lane.b32.xlu0 %v2794, 16
      %v2812 = vpop.permute.xlu0 %2811
      %2813 = vrot.lane.b32.xlu0 %v2797, 16
      %v2814 = vpop.permute.xlu0 %2813
      %2815 = vrot.lane.b32.xlu0 %v2799, 16
      %v2816 = vpop.permute.xlu0 %2815
      %v2817 = vsel %vm545, %v2802, %v2810
      %v2818 = vsel %vm545, %v2804, %v2812
      %v2819 = vsel %vm545, %v2806, %v2814
      %v2820 = vsel %vm545, %v2808, %v2816
      %v2821 = vsel %vm545, %v2810, %v2802
      %v2822 = vsel %vm545, %v2812, %v2804
      %v2823 = vsel %vm545, %v2814, %v2806
      %v2824 = vsel %vm545, %v2816, %v2808
      %v2825 = vmul.f32 %v2821, %v554
      %v2826 = vmul.f32 %v2817, %v555
      %v2827 = vmul.f32 %v2822, %v554
      %v2828 = vmul.f32 %v2818, %v555
      %v2829 = vmul.f32 %v2823, %v554
      %v2830 = vmul.f32 %v2819, %v555
      %v2831 = vmul.f32 %v2824, %v554
      %v2832 = vmul.f32 %v2820, %v555
      %v2833 = vadd.f32 %v2734, %v2825
      %v2834 = vadd.f32 %v2735, %v2826
      %v2835 = vadd.f32 %v2736, %v2827
      %v2836 = vadd.f32 %v2737, %v2828
      %v2837 = vadd.f32 %v2738, %v2829
      %v2838 = vadd.f32 %v2739, %v2830
      %v2839 = vadd.f32 %v2740, %v2831
      %v2840 = vadd.f32 %v2741, %v2832
      %s2841 = scalar_lea.vmem %s3, 320
      %v2842 = vld [vmem:[%s2841] sm:$0xf]
      %v2843 = vld [vmem:[%s2841 + $0x4] sm:$0xf]
      %v2844 = vld [vmem:[%s2841 + $0x8] sm:$0xf]
      %v2845 = vld [vmem:[%s2841 + $0xc] sm:$0xf]
      %v2850 = vunpack.c.l.b16 %v2842
      %v2851 = vunpack.c.l.b16 %v2843
      %v2852 = vunpack.c.l.b16 %v2844
      %v2853 = vunpack.c.l.b16 %v2845
      %v2854 = vpack.c.b16 %v2851, %v2850
      %v2855 = vpack.c.b16 %v2853, %v2852
      %v2857 = vsel %vm373, %v2854, 0
      %v2860 = vsel %vm373, %v2855, 0
      %2862 = vmatpush.bf16.msra.mxu0 0
      %2863 = vmatpush.bf16.msra.mxu0 0
      %2864 = vmatpush.bf16.msra.mxu0 0
      %2865 = vmatpush.bf16.msra.mxu0 0
      %2866 = vmatpush.bf16.msra.mxu0 0
      %2867 = vmatpush.bf16.msra.mxu0 %v2659
      %2868 = vmatpush.bf16.msra.mxu0 %v2464
      %2869 = vmatpush.bf16.msra.mxu0 %v2462
      %2870 = vmatmul.bf16.gmra.mxu0 %v2857
      %v2871 = vpop.f32.mrf.mxu0
      %v2872 = vadd.f32 0.0, %v2871
      %v2873 = vpop.f32.mrf.mxu0
      %v2874 = vadd.f32 0.0, %v2873
      %2875 = vmatmul.bf16.gmra.mxu0 %v2860
      %v2876 = vpop.f32.mrf.mxu0
      %v2877 = vadd.f32 0.0, %v2876
      %v2878 = vpop.f32.mrf.mxu0
      %v2879 = vadd.f32 0.0, %v2878
      %2880 = vdwg.mxu0
      %2881 = vmatpush.bf16.msra.mxu0 0
      %2882 = vmatpush.bf16.msra.mxu0 0
      %2883 = vmatpush.bf16.msra.mxu0 0
      %2884 = vmatpush.bf16.msra.mxu0 0
      %2885 = vmatpush.bf16.msra.mxu0 0
      %2886 = vmatpush.bf16.msra.mxu0 %v2662
      %2887 = vmatpush.bf16.msra.mxu0 %v2465
      %2888 = vmatpush.bf16.msra.mxu0 %v2463
      %2889 = vmatmul.bf16.gmra.mxu0 %v2857
      %v2890 = vpop.f32.mrf.mxu0
      %v2891 = vadd.f32 0.0, %v2890
      %v2892 = vpop.f32.mrf.mxu0
      %v2893 = vadd.f32 0.0, %v2892
      %2894 = vmatmul.bf16.gmra.mxu0 %v2860
      %v2895 = vpop.f32.mrf.mxu0
      %v2896 = vadd.f32 0.0, %v2895
      %v2897 = vpop.f32.mrf.mxu0
      %v2898 = vadd.f32 0.0, %v2897
      %2899 = vdwg.mxu0
      %2900 = vrot.lane.b32.xlu0 %v2872, 15
      %v2901 = vpop.permute.xlu0 %2900
      %2902 = vrot.lane.b32.xlu0 %v2874, 15
      %v2903 = vpop.permute.xlu0 %2902
      %2904 = vrot.lane.b32.xlu0 %v2877, 15
      %v2905 = vpop.permute.xlu0 %2904
      %2906 = vrot.lane.b32.xlu0 %v2879, 15
      %v2907 = vpop.permute.xlu0 %2906
      %2908 = vrot.lane.b32.xlu0 %v2891, 15
      %v2909 = vpop.permute.xlu0 %2908
      %2910 = vrot.lane.b32.xlu0 %v2893, 15
      %v2911 = vpop.permute.xlu0 %2910
      %2912 = vrot.lane.b32.xlu0 %v2896, 15
      %v2913 = vpop.permute.xlu0 %2912
      %2914 = vrot.lane.b32.xlu0 %v2898, 15
      %v2915 = vpop.permute.xlu0 %2914
      %v2916 = vsel %vm647, %v2901, %v2909
      %v2917 = vsel %vm647, %v2903, %v2911
      %v2918 = vsel %vm647, %v2905, %v2913
      %v2919 = vsel %vm647, %v2907, %v2915
      %v2920 = vsel %vm647, %v2909, %v2901
      %v2921 = vsel %vm647, %v2911, %v2903
      %v2922 = vsel %vm647, %v2913, %v2905
      %v2923 = vsel %vm647, %v2915, %v2907
      %v2924 = vmul.f32 %v2920, %v656
      %v2925 = vmul.f32 %v2916, %v657
      %v2926 = vmul.f32 %v2921, %v656
      %v2927 = vmul.f32 %v2917, %v657
      %v2928 = vmul.f32 %v2922, %v656
      %v2929 = vmul.f32 %v2918, %v657
      %v2930 = vmul.f32 %v2923, %v656
      %v2931 = vmul.f32 %v2919, %v657
      %v2932 = vadd.f32 %v2833, %v2924
      %v2933 = vadd.f32 %v2834, %v2925
      %v2934 = vadd.f32 %v2835, %v2926
      %v2935 = vadd.f32 %v2836, %v2927
      %v2936 = vadd.f32 %v2837, %v2928
      %v2937 = vadd.f32 %v2838, %v2929
      %v2938 = vadd.f32 %v2839, %v2930
      %v2939 = vadd.f32 %v2840, %v2931
      %s2940 = scalar_lea.vmem %s3, 336
      %v2941 = vld [vmem:[%s2940] sm:$0xf]
      %v2942 = vld [vmem:[%s2940 + $0x4] sm:$0xf]
      %v2943 = vld [vmem:[%s2940 + $0x8] sm:$0xf]
      %v2944 = vld [vmem:[%s2940 + $0xc] sm:$0xf]
      %v2949 = vunpack.c.l.b16 %v2941
      %v2950 = vunpack.c.l.b16 %v2942
      %v2951 = vunpack.c.l.b16 %v2943
      %v2952 = vunpack.c.l.b16 %v2944
      %v2953 = vpack.c.b16 %v2950, %v2949
      %v2954 = vpack.c.b16 %v2952, %v2951
      %v2956 = vsel %vm373, %v2953, 0
      %v2959 = vsel %vm373, %v2954, 0
      %2961 = vmatpush.bf16.msra.mxu0 0
      %2962 = vmatpush.bf16.msra.mxu0 0
      %2963 = vmatpush.bf16.msra.mxu0 0
      %2964 = vmatpush.bf16.msra.mxu0 0
      %2965 = vmatpush.bf16.msra.mxu0 0
      %2966 = vmatpush.bf16.msra.mxu0 %v2659
      %2967 = vmatpush.bf16.msra.mxu0 %v2464
      %2968 = vmatpush.bf16.msra.mxu0 %v2462
      %2969 = vmatmul.bf16.gmra.mxu0 %v2956
      %v2970 = vpop.f32.mrf.mxu0
      %v2971 = vadd.f32 0.0, %v2970
      %v2972 = vpop.f32.mrf.mxu0
      %v2973 = vadd.f32 0.0, %v2972
      %2974 = vmatmul.bf16.gmra.mxu0 %v2959
      %v2975 = vpop.f32.mrf.mxu0
      %v2976 = vadd.f32 0.0, %v2975
      %v2977 = vpop.f32.mrf.mxu0
      %v2978 = vadd.f32 0.0, %v2977
      %2979 = vdwg.mxu0
      %2980 = vmatpush.bf16.msra.mxu0 0
      %2981 = vmatpush.bf16.msra.mxu0 0
      %2982 = vmatpush.bf16.msra.mxu0 0
      %2983 = vmatpush.bf16.msra.mxu0 0
      %2984 = vmatpush.bf16.msra.mxu0 0
      %2985 = vmatpush.bf16.msra.mxu0 %v2662
      %2986 = vmatpush.bf16.msra.mxu0 %v2465
      %2987 = vmatpush.bf16.msra.mxu0 %v2463
      %2988 = vmatmul.bf16.gmra.mxu0 %v2956
      %v2989 = vpop.f32.mrf.mxu0
      %v2990 = vadd.f32 0.0, %v2989
      %v2991 = vpop.f32.mrf.mxu0
      %v2992 = vadd.f32 0.0, %v2991
      %2993 = vmatmul.bf16.gmra.mxu0 %v2959
      %v2994 = vpop.f32.mrf.mxu0
      %v2995 = vadd.f32 0.0, %v2994
      %v2996 = vpop.f32.mrf.mxu0
      %v2997 = vadd.f32 0.0, %v2996
      %2998 = vdwg.mxu0
      %2999 = vrot.lane.b32.xlu0 %v2971, 1
      %v3000 = vpop.permute.xlu0 %2999
      %3001 = vrot.lane.b32.xlu0 %v2973, 1
      %v3002 = vpop.permute.xlu0 %3001
      %3003 = vrot.lane.b32.xlu0 %v2976, 1
      %v3004 = vpop.permute.xlu0 %3003
      %3005 = vrot.lane.b32.xlu0 %v2978, 1
      %v3006 = vpop.permute.xlu0 %3005
      %3007 = vrot.lane.b32.xlu0 %v2990, 1
      %v3008 = vpop.permute.xlu0 %3007
      %3009 = vrot.lane.b32.xlu0 %v2992, 1
      %v3010 = vpop.permute.xlu0 %3009
      %3011 = vrot.lane.b32.xlu0 %v2995, 1
      %v3012 = vpop.permute.xlu0 %3011
      %3013 = vrot.lane.b32.xlu0 %v2997, 1
      %v3014 = vpop.permute.xlu0 %3013
      %v3015 = vsel %vm749, %v3000, %v3008
      %v3016 = vsel %vm749, %v3002, %v3010
      %v3017 = vsel %vm749, %v3004, %v3012
      %v3018 = vsel %vm749, %v3006, %v3014
      %v3019 = vsel %vm749, %v3008, %v3000
      %v3020 = vsel %vm749, %v3010, %v3002
      %v3021 = vsel %vm749, %v3012, %v3004
      %v3022 = vsel %vm749, %v3014, %v3006
      %v3023 = vmul.f32 %v3019, %v758
      %v3024 = vmul.f32 %v3015, %v759
      %v3025 = vmul.f32 %v3020, %v758
      %v3026 = vmul.f32 %v3016, %v759
      %v3027 = vmul.f32 %v3021, %v758
      %v3028 = vmul.f32 %v3017, %v759
      %v3029 = vmul.f32 %v3022, %v758
      %v3030 = vmul.f32 %v3018, %v759
      %v3031 = vadd.f32 %v2932, %v3023
      %v3032 = vadd.f32 %v2933, %v3024
      %v3033 = vadd.f32 %v2934, %v3025
      %v3034 = vadd.f32 %v2935, %v3026
      %v3035 = vadd.f32 %v2936, %v3027
      %v3036 = vadd.f32 %v2937, %v3028
      %v3037 = vadd.f32 %v2938, %v3029
      %v3038 = vadd.f32 %v2939, %v3030
      %s3039 = scalar_lea.vmem %s3, 352
      %v3040 = vld [vmem:[%s3039] sm:$0xf]
      %v3041 = vld [vmem:[%s3039 + $0x4] sm:$0xf]
      %v3042 = vld [vmem:[%s3039 + $0x8] sm:$0xf]
      %v3043 = vld [vmem:[%s3039 + $0xc] sm:$0xf]
      %v3048 = vunpack.c.l.b16 %v3040
      %v3049 = vunpack.c.l.b16 %v3041
      %v3050 = vunpack.c.l.b16 %v3042
      %v3051 = vunpack.c.l.b16 %v3043
      %v3052 = vpack.c.b16 %v3049, %v3048
      %v3053 = vpack.c.b16 %v3051, %v3050
      %v3055 = vsel %vm373, %v3052, 0
      %v3058 = vsel %vm373, %v3053, 0
      %3060 = vmatpush.bf16.msra.mxu0 0
      %3061 = vmatpush.bf16.msra.mxu0 0
      %3062 = vmatpush.bf16.msra.mxu0 0
      %3063 = vmatpush.bf16.msra.mxu0 0
      %3064 = vmatpush.bf16.msra.mxu0 0
      %3065 = vmatpush.bf16.msra.mxu0 %v2659
      %3066 = vmatpush.bf16.msra.mxu0 %v2464
      %3067 = vmatpush.bf16.msra.mxu0 %v2462
      %3068 = vmatmul.bf16.gmra.mxu0 %v3055
      %v3069 = vpop.f32.mrf.mxu0
      %v3070 = vadd.f32 0.0, %v3069
      %v3071 = vpop.f32.mrf.mxu0
      %v3072 = vadd.f32 0.0, %v3071
      %3073 = vmatmul.bf16.gmra.mxu0 %v3058
      %v3074 = vpop.f32.mrf.mxu0
      %v3075 = vadd.f32 0.0, %v3074
      %v3076 = vpop.f32.mrf.mxu0
      %v3077 = vadd.f32 0.0, %v3076
      %3078 = vdwg.mxu0
      %3079 = vmatpush.bf16.msra.mxu0 0
      %3080 = vmatpush.bf16.msra.mxu0 0
      %3081 = vmatpush.bf16.msra.mxu0 0
      %3082 = vmatpush.bf16.msra.mxu0 0
      %3083 = vmatpush.bf16.msra.mxu0 0
      %3084 = vmatpush.bf16.msra.mxu0 %v2662
      %3085 = vmatpush.bf16.msra.mxu0 %v2465
      %3086 = vmatpush.bf16.msra.mxu0 %v2463
      %3087 = vmatmul.bf16.gmra.mxu0 %v3055
      %v3088 = vpop.f32.mrf.mxu0
      %v3089 = vadd.f32 0.0, %v3088
      %v3090 = vpop.f32.mrf.mxu0
      %v3091 = vadd.f32 0.0, %v3090
      %3092 = vmatmul.bf16.gmra.mxu0 %v3058
      %v3093 = vpop.f32.mrf.mxu0
      %v3094 = vadd.f32 0.0, %v3093
      %v3095 = vpop.f32.mrf.mxu0
      %v3096 = vadd.f32 0.0, %v3095
      %3097 = vdwg.mxu0
      %v3098 = vadd.f32 %v3031, %v3070
      %v3099 = vadd.f32 %v3032, %v3089
      %v3100 = vadd.f32 %v3033, %v3072
      %v3101 = vadd.f32 %v3034, %v3091
      %v3102 = vadd.f32 %v3035, %v3075
      %v3103 = vadd.f32 %v3036, %v3094
      %v3104 = vadd.f32 %v3037, %v3077
      %v3105 = vadd.f32 %v3038, %v3096
      %s3106 = scalar_lea.vmem %s3, 368
      %v3107 = vld [vmem:[%s3106] sm:$0xf]
      %v3108 = vld [vmem:[%s3106 + $0x4] sm:$0xf]
      %v3109 = vld [vmem:[%s3106 + $0x8] sm:$0xf]
      %v3110 = vld [vmem:[%s3106 + $0xc] sm:$0xf]
      %v3115 = vunpack.c.l.b16 %v3107
      %v3116 = vunpack.c.l.b16 %v3108
      %v3117 = vunpack.c.l.b16 %v3109
      %v3118 = vunpack.c.l.b16 %v3110
      %v3119 = vpack.c.b16 %v3116, %v3115
      %v3120 = vpack.c.b16 %v3118, %v3117
      %v3122 = vsel %vm373, %v3119, 0
      %v3125 = vsel %vm373, %v3120, 0
      %3127 = vmatpush.bf16.msra.mxu0 0
      %3128 = vmatpush.bf16.msra.mxu0 0
      %3129 = vmatpush.bf16.msra.mxu0 0
      %3130 = vmatpush.bf16.msra.mxu0 0
      %3131 = vmatpush.bf16.msra.mxu0 0
      %3132 = vmatpush.bf16.msra.mxu0 %v2659
      %3133 = vmatpush.bf16.msra.mxu0 %v2464
      %3134 = vmatpush.bf16.msra.mxu0 %v2462
      %3135 = vmatmul.bf16.gmra.mxu0 %v3122
      %v3136 = vpop.f32.mrf.mxu0
      %v3137 = vadd.f32 0.0, %v3136
      %v3138 = vpop.f32.mrf.mxu0
      %v3139 = vadd.f32 0.0, %v3138
      %3140 = vmatmul.bf16.gmra.mxu0 %v3125
      %v3141 = vpop.f32.mrf.mxu0
      %v3142 = vadd.f32 0.0, %v3141
      %v3143 = vpop.f32.mrf.mxu0
      %v3144 = vadd.f32 0.0, %v3143
      %3145 = vdwg.mxu0
      %3146 = vmatpush.bf16.msra.mxu0 0
      %3147 = vmatpush.bf16.msra.mxu0 0
      %3148 = vmatpush.bf16.msra.mxu0 0
      %3149 = vmatpush.bf16.msra.mxu0 0
      %3150 = vmatpush.bf16.msra.mxu0 0
      %3151 = vmatpush.bf16.msra.mxu0 %v2662
      %3152 = vmatpush.bf16.msra.mxu0 %v2465
      %3153 = vmatpush.bf16.msra.mxu0 %v2463
      %3154 = vmatmul.bf16.gmra.mxu0 %v3122
      %v3155 = vpop.f32.mrf.mxu0
      %v3156 = vadd.f32 0.0, %v3155
      %v3157 = vpop.f32.mrf.mxu0
      %v3158 = vadd.f32 0.0, %v3157
      %3159 = vmatmul.bf16.gmra.mxu0 %v3125
      %v3160 = vpop.f32.mrf.mxu0
      %v3161 = vadd.f32 0.0, %v3160
      %v3162 = vpop.f32.mrf.mxu0
      %v3163 = vadd.f32 0.0, %v3162
      %3164 = vdwg.mxu0
      %3165 = vrot.lane.b32.xlu0 %v3137, 127
      %v3166 = vpop.permute.xlu0 %3165
      %3167 = vrot.lane.b32.xlu0 %v3139, 127
      %v3168 = vpop.permute.xlu0 %3167
      %3169 = vrot.lane.b32.xlu0 %v3142, 127
      %v3170 = vpop.permute.xlu0 %3169
      %3171 = vrot.lane.b32.xlu0 %v3144, 127
      %v3172 = vpop.permute.xlu0 %3171
      %3173 = vrot.lane.b32.xlu0 %v3156, 127
      %v3174 = vpop.permute.xlu0 %3173
      %3175 = vrot.lane.b32.xlu0 %v3158, 127
      %v3176 = vpop.permute.xlu0 %3175
      %3177 = vrot.lane.b32.xlu0 %v3161, 127
      %v3178 = vpop.permute.xlu0 %3177
      %3179 = vrot.lane.b32.xlu0 %v3163, 127
      %v3180 = vpop.permute.xlu0 %3179
      %v3181 = vsel %vm918, %v3166, %v3174
      %v3182 = vsel %vm918, %v3168, %v3176
      %v3183 = vsel %vm918, %v3170, %v3178
      %v3184 = vsel %vm918, %v3172, %v3180
      %v3185 = vsel %vm918, %v3174, %v3166
      %v3186 = vsel %vm918, %v3176, %v3168
      %v3187 = vsel %vm918, %v3178, %v3170
      %v3188 = vsel %vm918, %v3180, %v3172
      %v3189 = vmul.f32 %v3181, %v927
      %v3190 = vmul.f32 %v3185, %v928
      %v3191 = vmul.f32 %v3182, %v927
      %v3192 = vmul.f32 %v3186, %v928
      %v3193 = vmul.f32 %v3183, %v927
      %v3194 = vmul.f32 %v3187, %v928
      %v3195 = vmul.f32 %v3184, %v927
      %v3196 = vmul.f32 %v3188, %v928
      %v3197 = vadd.f32 %v3098, %v3189
      %v3198 = vadd.f32 %v3099, %v3190
      %v3199 = vadd.f32 %v3100, %v3191
      %v3200 = vadd.f32 %v3101, %v3192
      %v3201 = vadd.f32 %v3102, %v3193
      %v3202 = vadd.f32 %v3103, %v3194
      %v3203 = vadd.f32 %v3104, %v3195
      %v3204 = vadd.f32 %v3105, %v3196
      %s3205 = scalar_lea.vmem %s3, 384
      %v3206 = vld [vmem:[%s3205] sm:$0xf]
      %v3207 = vld [vmem:[%s3205 + $0x4] sm:$0xf]
      %v3208 = vld [vmem:[%s3205 + $0x8] sm:$0xf]
      %v3209 = vld [vmem:[%s3205 + $0xc] sm:$0xf]
      %v3214 = vunpack.c.l.b16 %v3206
      %v3215 = vunpack.c.l.b16 %v3207
      %v3216 = vunpack.c.l.b16 %v3208
      %v3217 = vunpack.c.l.b16 %v3209
      %v3218 = vpack.c.b16 %v3215, %v3214
      %v3219 = vpack.c.b16 %v3217, %v3216
      %v3221 = vsel %vm373, %v3218, 0
      %v3224 = vsel %vm373, %v3219, 0
      %3226 = vmatpush.bf16.msra.mxu0 0
      %3227 = vmatpush.bf16.msra.mxu0 0
      %3228 = vmatpush.bf16.msra.mxu0 0
      %3229 = vmatpush.bf16.msra.mxu0 0
      %3230 = vmatpush.bf16.msra.mxu0 0
      %3231 = vmatpush.bf16.msra.mxu0 %v2659
      %3232 = vmatpush.bf16.msra.mxu0 %v2464
      %3233 = vmatpush.bf16.msra.mxu0 %v2462
      %3234 = vmatmul.bf16.gmra.mxu0 %v3221
      %v3235 = vpop.f32.mrf.mxu0
      %v3236 = vadd.f32 0.0, %v3235
      %v3237 = vpop.f32.mrf.mxu0
      %v3238 = vadd.f32 0.0, %v3237
      %3239 = vmatmul.bf16.gmra.mxu0 %v3224
      %v3240 = vpop.f32.mrf.mxu0
      %v3241 = vadd.f32 0.0, %v3240
      %v3242 = vpop.f32.mrf.mxu0
      %v3243 = vadd.f32 0.0, %v3242
      %3244 = vdwg.mxu0
      %3245 = vmatpush.bf16.msra.mxu0 0
      %3246 = vmatpush.bf16.msra.mxu0 0
      %3247 = vmatpush.bf16.msra.mxu0 0
      %3248 = vmatpush.bf16.msra.mxu0 0
      %3249 = vmatpush.bf16.msra.mxu0 0
      %3250 = vmatpush.bf16.msra.mxu0 %v2662
      %3251 = vmatpush.bf16.msra.mxu0 %v2465
      %3252 = vmatpush.bf16.msra.mxu0 %v2463
      %3253 = vmatmul.bf16.gmra.mxu0 %v3221
      %v3254 = vpop.f32.mrf.mxu0
      %v3255 = vadd.f32 0.0, %v3254
      %v3256 = vpop.f32.mrf.mxu0
      %v3257 = vadd.f32 0.0, %v3256
      %3258 = vmatmul.bf16.gmra.mxu0 %v3224
      %v3259 = vpop.f32.mrf.mxu0
      %v3260 = vadd.f32 0.0, %v3259
      %v3261 = vpop.f32.mrf.mxu0
      %v3262 = vadd.f32 0.0, %v3261
      %3263 = vdwg.mxu0
      %3264 = vrot.lane.b32.xlu0 %v3236, 113
      %v3265 = vpop.permute.xlu0 %3264
      %3266 = vrot.lane.b32.xlu0 %v3238, 113
      %v3267 = vpop.permute.xlu0 %3266
      %3268 = vrot.lane.b32.xlu0 %v3241, 113
      %v3269 = vpop.permute.xlu0 %3268
      %3270 = vrot.lane.b32.xlu0 %v3243, 113
      %v3271 = vpop.permute.xlu0 %3270
      %3272 = vrot.lane.b32.xlu0 %v3255, 113
      %v3273 = vpop.permute.xlu0 %3272
      %3274 = vrot.lane.b32.xlu0 %v3257, 113
      %v3275 = vpop.permute.xlu0 %3274
      %3276 = vrot.lane.b32.xlu0 %v3260, 113
      %v3277 = vpop.permute.xlu0 %3276
      %3278 = vrot.lane.b32.xlu0 %v3262, 113
      %v3279 = vpop.permute.xlu0 %3278
      %v3280 = vsel %vm1020, %v3265, %v3273
      %v3281 = vsel %vm1020, %v3267, %v3275
      %v3282 = vsel %vm1020, %v3269, %v3277
      %v3283 = vsel %vm1020, %v3271, %v3279
      %v3284 = vsel %vm1020, %v3273, %v3265
      %v3285 = vsel %vm1020, %v3275, %v3267
      %v3286 = vsel %vm1020, %v3277, %v3269
      %v3287 = vsel %vm1020, %v3279, %v3271
      %v3288 = vmul.f32 %v3280, %v1029
      %v3289 = vmul.f32 %v3284, %v1030
      %v3290 = vmul.f32 %v3281, %v1029
      %v3291 = vmul.f32 %v3285, %v1030
      %v3292 = vmul.f32 %v3282, %v1029
      %v3293 = vmul.f32 %v3286, %v1030
      %v3294 = vmul.f32 %v3283, %v1029
      %v3295 = vmul.f32 %v3287, %v1030
      %v3296 = vadd.f32 %v3197, %v3288
      %v3297 = vadd.f32 %v3198, %v3289
      %v3298 = vadd.f32 %v3199, %v3290
      %v3299 = vadd.f32 %v3200, %v3291
      %v3300 = vadd.f32 %v3201, %v3292
      %v3301 = vadd.f32 %v3202, %v3293
      %v3302 = vadd.f32 %v3203, %v3294
      %v3303 = vadd.f32 %v3204, %v3295
      %s3304 = scalar_lea.vmem %s3, 400
      %v3305 = vld [vmem:[%s3304] sm:$0xf]
      %v3306 = vld [vmem:[%s3304 + $0x4] sm:$0xf]
      %v3307 = vld [vmem:[%s3304 + $0x8] sm:$0xf]
      %v3308 = vld [vmem:[%s3304 + $0xc] sm:$0xf]
      %v3313 = vunpack.c.l.b16 %v3305
      %v3314 = vunpack.c.l.b16 %v3306
      %v3315 = vunpack.c.l.b16 %v3307
      %v3316 = vunpack.c.l.b16 %v3308
      %v3317 = vpack.c.b16 %v3314, %v3313
      %v3318 = vpack.c.b16 %v3316, %v3315
      %v3320 = vsel %vm373, %v3317, 0
      %v3323 = vsel %vm373, %v3318, 0
      %3325 = vmatpush.bf16.msra.mxu0 0
      %3326 = vmatpush.bf16.msra.mxu0 0
      %3327 = vmatpush.bf16.msra.mxu0 0
      %3328 = vmatpush.bf16.msra.mxu0 0
      %3329 = vmatpush.bf16.msra.mxu0 0
      %3330 = vmatpush.bf16.msra.mxu0 %v2659
      %3331 = vmatpush.bf16.msra.mxu0 %v2464
      %3332 = vmatpush.bf16.msra.mxu0 %v2462
      %3333 = vmatmul.bf16.gmra.mxu0 %v3320
      %v3334 = vpop.f32.mrf.mxu0
      %v3335 = vadd.f32 0.0, %v3334
      %v3336 = vpop.f32.mrf.mxu0
      %v3337 = vadd.f32 0.0, %v3336
      %3338 = vmatmul.bf16.gmra.mxu0 %v3323
      %v3339 = vpop.f32.mrf.mxu0
      %v3340 = vadd.f32 0.0, %v3339
      %v3341 = vpop.f32.mrf.mxu0
      %v3342 = vadd.f32 0.0, %v3341
      %3343 = vdwg.mxu0
      %3344 = vmatpush.bf16.msra.mxu0 0
      %3345 = vmatpush.bf16.msra.mxu0 0
      %3346 = vmatpush.bf16.msra.mxu0 0
      %3347 = vmatpush.bf16.msra.mxu0 0
      %3348 = vmatpush.bf16.msra.mxu0 0
      %3349 = vmatpush.bf16.msra.mxu0 %v2662
      %3350 = vmatpush.bf16.msra.mxu0 %v2465
      %3351 = vmatpush.bf16.msra.mxu0 %v2463
      %3352 = vmatmul.bf16.gmra.mxu0 %v3320
      %v3353 = vpop.f32.mrf.mxu0
      %v3354 = vadd.f32 0.0, %v3353
      %v3355 = vpop.f32.mrf.mxu0
      %v3356 = vadd.f32 0.0, %v3355
      %3357 = vmatmul.bf16.gmra.mxu0 %v3323
      %v3358 = vpop.f32.mrf.mxu0
      %v3359 = vadd.f32 0.0, %v3358
      %v3360 = vpop.f32.mrf.mxu0
      %v3361 = vadd.f32 0.0, %v3360
      %3362 = vdwg.mxu0
      %3363 = vrot.lane.b32.xlu0 %v3335, 112
      %v3364 = vpop.permute.xlu0 %3363
      %3365 = vrot.lane.b32.xlu0 %v3337, 112
      %v3366 = vpop.permute.xlu0 %3365
      %3367 = vrot.lane.b32.xlu0 %v3340, 112
      %v3368 = vpop.permute.xlu0 %3367
      %3369 = vrot.lane.b32.xlu0 %v3342, 112
      %v3370 = vpop.permute.xlu0 %3369
      %3371 = vrot.lane.b32.xlu0 %v3354, 112
      %v3372 = vpop.permute.xlu0 %3371
      %3373 = vrot.lane.b32.xlu0 %v3356, 112
      %v3374 = vpop.permute.xlu0 %3373
      %3375 = vrot.lane.b32.xlu0 %v3359, 112
      %v3376 = vpop.permute.xlu0 %3375
      %3377 = vrot.lane.b32.xlu0 %v3361, 112
      %v3378 = vpop.permute.xlu0 %3377
      %v3379 = vsel %vm1122, %v3364, %v3372
      %v3380 = vsel %vm1122, %v3366, %v3374
      %v3381 = vsel %vm1122, %v3368, %v3376
      %v3382 = vsel %vm1122, %v3370, %v3378
      %v3383 = vsel %vm1122, %v3372, %v3364
      %v3384 = vsel %vm1122, %v3374, %v3366
      %v3385 = vsel %vm1122, %v3376, %v3368
      %v3386 = vsel %vm1122, %v3378, %v3370
      %v3387 = vmul.f32 %v3379, %v1131
      %v3388 = vmul.f32 %v3383, %v1132
      %v3389 = vmul.f32 %v3380, %v1131
      %v3390 = vmul.f32 %v3384, %v1132
      %v3391 = vmul.f32 %v3381, %v1131
      %v3392 = vmul.f32 %v3385, %v1132
      %v3393 = vmul.f32 %v3382, %v1131
      %v3394 = vmul.f32 %v3386, %v1132
      %v3395 = vadd.f32 %v3296, %v3387
      %v3396 = vadd.f32 %v3297, %v3388
      %v3397 = vadd.f32 %v3298, %v3389
      %v3398 = vadd.f32 %v3299, %v3390
      %v3399 = vadd.f32 %v3300, %v3391
      %v3400 = vadd.f32 %v3301, %v3392
      %v3401 = vadd.f32 %v3302, %v3393
      %v3402 = vadd.f32 %v3303, %v3394
      %s3403 = scalar_lea.vmem %s3, 416
      %v3404 = vld [vmem:[%s3403] sm:$0xf]
      %v3405 = vld [vmem:[%s3403 + $0x4] sm:$0xf]
      %v3406 = vld [vmem:[%s3403 + $0x8] sm:$0xf]
      %v3407 = vld [vmem:[%s3403 + $0xc] sm:$0xf]
      %v3412 = vunpack.c.l.b16 %v3404
      %v3413 = vunpack.c.l.b16 %v3405
      %v3414 = vunpack.c.l.b16 %v3406
      %v3415 = vunpack.c.l.b16 %v3407
      %v3416 = vpack.c.b16 %v3413, %v3412
      %v3417 = vpack.c.b16 %v3415, %v3414
      %v3419 = vsel %vm373, %v3416, 0
      %v3422 = vsel %vm373, %v3417, 0
      %3424 = vmatpush.bf16.msra.mxu0 0
      %3425 = vmatpush.bf16.msra.mxu0 0
      %3426 = vmatpush.bf16.msra.mxu0 0
      %3427 = vmatpush.bf16.msra.mxu0 0
      %3428 = vmatpush.bf16.msra.mxu0 0
      %3429 = vmatpush.bf16.msra.mxu0 %v2659
      %3430 = vmatpush.bf16.msra.mxu0 %v2464
      %3431 = vmatpush.bf16.msra.mxu0 %v2462
      %3432 = vmatmul.bf16.gmra.mxu0 %v3419
      %v3433 = vpop.f32.mrf.mxu0
      %v3434 = vadd.f32 0.0, %v3433
      %v3435 = vpop.f32.mrf.mxu0
      %v3436 = vadd.f32 0.0, %v3435
      %3437 = vmatmul.bf16.gmra.mxu0 %v3422
      %v3438 = vpop.f32.mrf.mxu0
      %v3439 = vadd.f32 0.0, %v3438
      %v3440 = vpop.f32.mrf.mxu0
      %v3441 = vadd.f32 0.0, %v3440
      %3442 = vdwg.mxu0
      %3443 = vmatpush.bf16.msra.mxu0 0
      %3444 = vmatpush.bf16.msra.mxu0 0
      %3445 = vmatpush.bf16.msra.mxu0 0
      %3446 = vmatpush.bf16.msra.mxu0 0
      %3447 = vmatpush.bf16.msra.mxu0 0
      %3448 = vmatpush.bf16.msra.mxu0 %v2662
      %3449 = vmatpush.bf16.msra.mxu0 %v2465
      %3450 = vmatpush.bf16.msra.mxu0 %v2463
      %3451 = vmatmul.bf16.gmra.mxu0 %v3419
      %v3452 = vpop.f32.mrf.mxu0
      %v3453 = vadd.f32 0.0, %v3452
      %v3454 = vpop.f32.mrf.mxu0
      %v3455 = vadd.f32 0.0, %v3454
      %3456 = vmatmul.bf16.gmra.mxu0 %v3422
      %v3457 = vpop.f32.mrf.mxu0
      %v3458 = vadd.f32 0.0, %v3457
      %v3459 = vpop.f32.mrf.mxu0
      %v3460 = vadd.f32 0.0, %v3459
      %3461 = vdwg.mxu0
      %3462 = vrot.lane.b32.xlu0 %v3434, 111
      %v3463 = vpop.permute.xlu0 %3462
      %3464 = vrot.lane.b32.xlu0 %v3436, 111
      %v3465 = vpop.permute.xlu0 %3464
      %3466 = vrot.lane.b32.xlu0 %v3439, 111
      %v3467 = vpop.permute.xlu0 %3466
      %3468 = vrot.lane.b32.xlu0 %v3441, 111
      %v3469 = vpop.permute.xlu0 %3468
      %3470 = vrot.lane.b32.xlu0 %v3453, 111
      %v3471 = vpop.permute.xlu0 %3470
      %3472 = vrot.lane.b32.xlu0 %v3455, 111
      %v3473 = vpop.permute.xlu0 %3472
      %3474 = vrot.lane.b32.xlu0 %v3458, 111
      %v3475 = vpop.permute.xlu0 %3474
      %3476 = vrot.lane.b32.xlu0 %v3460, 111
      %v3477 = vpop.permute.xlu0 %3476
      %v3478 = vsel %vm1224, %v3463, %v3471
      %v3479 = vsel %vm1224, %v3465, %v3473
      %v3480 = vsel %vm1224, %v3467, %v3475
      %v3481 = vsel %vm1224, %v3469, %v3477
      %v3482 = vsel %vm1224, %v3471, %v3463
      %v3483 = vsel %vm1224, %v3473, %v3465
      %v3484 = vsel %vm1224, %v3475, %v3467
      %v3485 = vsel %vm1224, %v3477, %v3469
      %v3486 = vmul.f32 %v3478, %v1233
      %v3487 = vmul.f32 %v3482, %v1234
      %v3488 = vmul.f32 %v3479, %v1233
      %v3489 = vmul.f32 %v3483, %v1234
      %v3490 = vmul.f32 %v3480, %v1233
      %v3491 = vmul.f32 %v3484, %v1234
      %v3492 = vmul.f32 %v3481, %v1233
      %v3493 = vmul.f32 %v3485, %v1234
      %v3494 = vadd.f32 %v3395, %v3486
      %v3495 = vadd.f32 %v3396, %v3487
      %v3496 = vadd.f32 %v3397, %v3488
      %v3497 = vadd.f32 %v3398, %v3489
      %v3498 = vadd.f32 %v3399, %v3490
      %v3499 = vadd.f32 %v3400, %v3491
      %v3500 = vadd.f32 %v3401, %v3492
      %v3501 = vadd.f32 %v3402, %v3493
      %s3502 = scalar_lea.vmem %s4, 64
      %v3503 = vld [vmem:[%s3502] sm:$0xff]
      %v3504 = vld [vmem:[%s3502 + $0x8] sm:$0xff]
      %v3505 = vld [vmem:[%s3502 + $0x10] sm:$0xff]
      %v3506 = vld [vmem:[%s3502 + $0x18] sm:$0xff]
      %3508 = vset.pattern.permute.xlu0 0
      %3509 = vperm.xlu0 %3508, %v3503
      %v3510 = vpop.permute.xlu0 %3509
      %3513 = vset.pattern.permute.xlu0 0
      %3514 = vperm.xlu0 %3513, %v3504
      %v3515 = vpop.permute.xlu0 %3514
      %3518 = vset.pattern.permute.xlu0 0
      %3519 = vperm.xlu0 %3518, %v3505
      %v3520 = vpop.permute.xlu0 %3519
      %3523 = vset.pattern.permute.xlu0 0
      %3524 = vperm.xlu0 %3523, %v3506
      %v3525 = vpop.permute.xlu0 %3524
      %v3527 = vadd.f32 %v3494, %v3510
      %v3528 = vadd.f32 %v3495, %v3510
      %v3529 = vadd.f32 %v3496, %v3515
      %v3530 = vadd.f32 %v3497, %v3515
      %v3531 = vadd.f32 %v3498, %v3520
      %v3532 = vadd.f32 %v3499, %v3520
      %v3533 = vadd.f32 %v3500, %v3525
      %v3534 = vadd.f32 %v3501, %v3525
      %v3535 = vmax.f32 %v3527, 0.0
      %v3536 = vmax.f32 %v3528, 0.0
      %v3537 = vmax.f32 %v3529, 0.0
      %v3538 = vmax.f32 %v3530, 0.0
      %v3539 = vmax.f32 %v3531, 0.0
      %v3540 = vmax.f32 %v3532, 0.0
      %v3541 = vmax.f32 %v3533, 0.0
      %v3542 = vmax.f32 %v3534, 0.0
      %v3543 = vadd.f32 %v2430, %v3535
      %v3544 = vadd.f32 %v2431, %v3536
      %v3545 = vadd.f32 %v2432, %v3537
      %v3546 = vadd.f32 %v2433, %v3538
      %v3547 = vadd.f32 %v2434, %v3539
      %v3548 = vadd.f32 %v2435, %v3540
      %v3549 = vadd.f32 %v2436, %v3541
      %v3550 = vadd.f32 %v2437, %v3542
      %v3551 = vpack.c.bf16 %v3545, %v3543
      %v3552 = vpack.c.bf16 %v3546, %v3544
      %v3553 = vpack.c.bf16 %v3549, %v3547
      %v3554 = vpack.c.bf16 %v3550, %v3548
      %s3555 = scalar_lea.vmem %s5, 16
      %v3556 = vld [vmem:[%s3555] sm:$0xf]
      %v3557 = vld [vmem:[%s3555 + $0x4] sm:$0x1]
      %v3560 = vunpack.c.l.b16 %v3556
      %v3561 = vunpack.c.l.b16 %v3557
      %v3562 = vpack.c.b16 %v3561, %v3560
      %v3564 = vsel %vm1330, %v3562, 0
      %3566 = vmatpush.bf16.msra.mxu0 0
      %3567 = vmatpush.bf16.msra.mxu0 0
      %3568 = vmatpush.bf16.msra.mxu0 0
      %3569 = vmatpush.bf16.msra.mxu0 0
      %3570 = vmatpush.bf16.msra.mxu0 0
      %3571 = vmatpush.bf16.msra.mxu0 0
      %3572 = vmatpush.bf16.msra.mxu0 %v3553
      %3573 = vmatpush.bf16.msra.mxu0 %v3551
      %3574 = vmatmul.bf16.gmra.mxu0 %v3564
      %v3575 = vpop.f32.mrf.mxu0
      %v3576 = vadd.f32 0.0, %v3575
      %v3577 = vpop.f32.mrf.mxu0
      %v3578 = vadd.f32 0.0, %v3577
      %3579 = vdwg.mxu0
      %3580 = vmatpush.bf16.msra.mxu0 0
      %3581 = vmatpush.bf16.msra.mxu0 0
      %3582 = vmatpush.bf16.msra.mxu0 0
      %3583 = vmatpush.bf16.msra.mxu0 0
      %3584 = vmatpush.bf16.msra.mxu0 0
      %3585 = vmatpush.bf16.msra.mxu0 0
      %3586 = vmatpush.bf16.msra.mxu0 %v3554
      %3587 = vmatpush.bf16.msra.mxu0 %v3552
      %3588 = vmatmul.bf16.gmra.mxu0 %v3564
      %v3589 = vpop.f32.mrf.mxu0
      %v3590 = vadd.f32 0.0, %v3589
      %v3591 = vpop.f32.mrf.mxu0
      %v3592 = vadd.f32 0.0, %v3591
      %3593 = vdwg.mxu0
      %3594 = vrot.lane.b32.xlu0 %v3576, 17
      %v3595 = vpop.permute.xlu0 %3594
      %3596 = vrot.lane.b32.xlu0 %v3590, 17
      %v3597 = vpop.permute.xlu0 %3596
      %v3598 = vsel %vm443, %v3595, %v3597
      %v3599 = vsel %vm443, %v3597, %v3595
      %v3600 = vmul.f32 %v3599, %v326
      %v3601 = vmul.f32 %v3598, %v327
      %v3602 = vadd.f32 %v3600, 0.0
      %v3603 = vadd.f32 %v3601, 0.0
      %v3606 = vrot.slane %v3576, 1
      %v3607 = vrot.slane %v3590, 1
      %3610 = vrot.lane.b32.xlu0 %v3606, 16
      %v3611 = vpop.permute.xlu0 %3610
      %3612 = vrot.lane.b32.xlu0 %v3607, 16
      %v3613 = vpop.permute.xlu0 %3612
      %v3614 = vsel %vm545, %v3611, %v3613
      %v3615 = vsel %vm545, %v3613, %v3611
      %v3616 = vmul.f32 %v3615, %v1386
      %v3617 = vmul.f32 %v3614, %v1387
      %v3618 = vadd.f32 %v3602, %v3616
      %v3619 = vadd.f32 %v3603, %v3617
      %v3620 = vrot.slane %v3576, 2
      %v3621 = vrot.slane %v3590, 2
      %3624 = vrot.lane.b32.xlu0 %v3620, 15
      %v3625 = vpop.permute.xlu0 %3624
      %3626 = vrot.lane.b32.xlu0 %v3621, 15
      %v3627 = vpop.permute.xlu0 %3626
      %v3628 = vsel %vm647, %v3625, %v3627
      %v3629 = vsel %vm647, %v3627, %v3625
      %v3630 = vmul.f32 %v3629, %v1404
      %v3631 = vmul.f32 %v3628, %v1405
      %v3632 = vadd.f32 %v3618, %v3630
      %v3633 = vadd.f32 %v3619, %v3631
      %v3634 = vrot.slane %v3576, 3
      %v3635 = vrot.slane %v3590, 3
      %3638 = vrot.lane.b32.xlu0 %v3634, 1
      %v3639 = vpop.permute.xlu0 %3638
      %3640 = vrot.lane.b32.xlu0 %v3635, 1
      %v3641 = vpop.permute.xlu0 %3640
      %v3642 = vsel %vm749, %v3639, %v3641
      %v3643 = vsel %vm749, %v3641, %v3639
      %v3644 = vmul.f32 %v3643, %v1422
      %v3645 = vmul.f32 %v3642, %v1423
      %v3646 = vadd.f32 %v3632, %v3644
      %v3647 = vadd.f32 %v3633, %v3645
      %v3648 = vrot.slane %v3576, 4
      %v3649 = vrot.slane %v3590, 4
      %v3652 = vadd.f32 %v3646, %v3648
      %v3653 = vadd.f32 %v3647, %v3649
      %v3654 = vrot.slane %v3576, 5
      %v3655 = vrot.slane %v3590, 5
      %3658 = vrot.lane.b32.xlu0 %v3654, 127
      %v3659 = vpop.permute.xlu0 %3658
      %3660 = vrot.lane.b32.xlu0 %v3655, 127
      %v3661 = vpop.permute.xlu0 %3660
      %v3662 = vsel %vm918, %v3659, %v3661
      %v3663 = vsel %vm918, %v3661, %v3659
      %v3664 = vmul.f32 %v3662, %v1446
      %v3665 = vmul.f32 %v3663, %v1447
      %v3666 = vadd.f32 %v3652, %v3664
      %v3667 = vadd.f32 %v3653, %v3665
      %v3668 = vrot.slane %v3576, 6
      %v3669 = vrot.slane %v3590, 6
      %3672 = vrot.lane.b32.xlu0 %v3668, 113
      %v3673 = vpop.permute.xlu0 %3672
      %3674 = vrot.lane.b32.xlu0 %v3669, 113
      %v3675 = vpop.permute.xlu0 %3674
      %v3676 = vsel %vm1020, %v3673, %v3675
      %v3677 = vsel %vm1020, %v3675, %v3673
      %v3678 = vmul.f32 %v3676, %v1464
      %v3679 = vmul.f32 %v3677, %v1465
      %v3680 = vadd.f32 %v3666, %v3678
      %v3681 = vadd.f32 %v3667, %v3679
      %v3682 = vrot.slane %v3576, 7
      %v3683 = vrot.slane %v3590, 7
      %3686 = vrot.lane.b32.xlu0 %v3682, 112
      %v3687 = vpop.permute.xlu0 %3686
      %3688 = vrot.lane.b32.xlu0 %v3683, 112
      %v3689 = vpop.permute.xlu0 %3688
      %v3690 = vsel %vm1122, %v3687, %v3689
      %v3691 = vsel %vm1122, %v3689, %v3687
      %v3692 = vmul.f32 %v3690, %v1482
      %v3693 = vmul.f32 %v3691, %v1483
      %v3694 = vadd.f32 %v3680, %v3692
      %v3695 = vadd.f32 %v3681, %v3693
      %3696 = vrot.lane.b32.xlu0 %v3578, 111
      %v3697 = vpop.permute.xlu0 %3696
      %3698 = vrot.lane.b32.xlu0 %v3592, 111
      %v3699 = vpop.permute.xlu0 %3698
      %v3700 = vsel %vm1224, %v3697, %v3699
      %v3701 = vsel %vm1224, %v3699, %v3697
      %v3702 = vmul.f32 %v3700, %v328
      %v3703 = vmul.f32 %v3701, %v329
      %v3704 = vadd.f32 %v3694, %v3702
      %v3705 = vadd.f32 %v3695, %v3703
      %v3708 = vrot.slane %v3705, 7
      %v3709 = vsel %vm1503, %v3704, %v3708
      %v3711 = vadd.f32 %v2627, %v3709
      %s3712 = scalar_lea.vmem %s6, 2
      %v3713 = vld [vmem:[%s3712] sm:$0x1]
      %3715 = vset.pattern.permute.xlu0 0
      %3716 = vperm.xlu0 %3715, %v3713
      %v3717 = vpop.permute.xlu0 %3716
      %v3719 = vperm.slane %v3717, 0
      %v3720 = vadd.f32 %v3711, %v3719
      %v3721 = vlaneseq
      %vm3722 = vcmp.ge.s32.totalorder %v3721, 0
      %vm3723 = vcmp.lt.s32.totalorder %v3721, 256
      %vm3724 = vmand %vm3722, %vm3723
      %3725 = vst.msk [vmem:[%s293] sm:$0x3] %vm3724, %v3720
      %p3726 = scmp.lt.s32.totalorder %s18, 1
      %s3727 = scalar_select %p3726, %s18, 1
      %s3728 = smul.addr %s3727, 2
      %s3729 = scalar_lea.vmem %s7, %s3728
      // Predicated region
      $region49: #{reverse_stage_forward.1} parent=47 // pred_check
        %p3730 = pneg %p193
      $region50: #{reverse_stage_forward.1} parent=47 // pred_check_branch
        %3732 = sbr.rel (%p3730) target = $region52
      $region51: #{reverse_stage_forward.1} parent=47 // pred_region
        _
      $region52: #{reverse_stage_forward.1} parent=47 // pred_fallthru
        _
    $region48: #{reverse_stage_forward.1} parent=5 // pred_fallthru
      _
    %p3733 = scmp.le.s32.totalorder 2, %s13
    // Predicated region
    $region53: #{reverse_stage_forward.1} parent=5 // pred_check
      %p3734 = pneg %p3733
    $region54: #{reverse_stage_forward.1} parent=5 // pred_check_branch
      %3736 = sbr.rel (%p3734) target = $region56
    $region55: #{reverse_stage_forward.1} parent=5 // pred_region
      %s3737 = ssub.s32 %s13, 2
      // Predicated region
      $region57: #{reverse_stage_forward.1} parent=55 // pred_check
        %p3738 = pneg %p199
      $region58: #{reverse_stage_forward.1} parent=55 // pred_check_branch
        %3740 = sbr.rel (%p3738) target = $region60
      $region59: #{reverse_stage_forward.1} parent=55 // pred_region
        %p3741 = scmp.lt.s32.totalorder %s19, 1
        %s3742 = scalar_select %p3741, %s19, 1
        %s3743 = smul.addr %s3742, 2
        %s3744 = scalar_lea.vmem %s7, %s3743
      $region60: #{reverse_stage_forward.1} parent=55 // pred_fallthru
        _
    $region56: #{reverse_stage_forward.1} parent=5 // pred_fallthru
      _
  $region6: #{reverse_stage_forward.1} parent=0 // loop_footer
    %s17 = sadd.s32 1, %s13
  $region7: #{reverse_stage_forward.1} parent=0 // loop_footer_branch
    %12 = sbr.rel target = $region3
  $region8: #{reverse_stage_forward.1} parent=0 // loop_exit
    _

</llo_original>
